<compile_context>
chip_gen: v7x
topology: tpu7x:2x2x1
jax: 0.10.0
libtpu: 0.0.40
codegen_flags: <defaults>
</compile_context>

<pallas_src>
import numpy as np
import jax
import jax.numpy as jnp
from jax import lax
from jax.experimental import pallas as pl
from jax.experimental.pallas import tpu as pltpu

# ----------------------------------------------------------------------------- config
MODALITIES = ("image", "text")
FEAT_DIMS = {"image": 48, "text": 40}
MODEL_DIM = 32                      # hidden_dim
ENC_HIDDEN = MODEL_DIM // 2         # 16 = GRU hidden per direction
N_CLS = 2
BATCH = 2
SEQ = 8
LN_EPS = 1e-5                       # torch.nn.LayerNorm default

NIN0 = sum(FEAT_DIMS.values())      # 88  = concatenated feature width
GATES = 12 * ENC_HIDDEN             # 192 = [r(4H) | z(4H) | n(4H)] over 4 streams
SLAB_COLS = GATES                   # packed-weight slab width (lane-friendly)
# 4 recurrent streams = (modality, direction); forward streams first, backward second.
DIRS = (("image", "f"), ("text", "f"), ("image", "b"), ("text", "b"))

_VMEM = pl.BlockSpec(memory_space=pltpu.MemorySpace.VMEM)


def _gelu_exact(x):
    # torch.nn.GELU() default = exact erf-based GELU
    return 0.5 * x * (1.0 + lax.erf(x * 0.7071067811865476))


# ============================================================================= kernel
def _make_kernel(layout):
    """layout: dict name -> (row_offset, rows, cols) into the packed weight slab."""
    H = ENC_HIDDEN

    def kernel(x_ref, slab_ref, out_ref, scr0_ref, scr1_ref):
        def W(name):
            off, r, c = layout[name]
            return slab_ref[off:off + r, 0:c]          # static window -> one load

        def bigru_layer(x3, wih, bih, whh, bhn, scr_ref):
            # x3: (T, B, n_in_aug) with rows [u(t) | u(T-1-t)]  (already time-aligned
            # for the backward streams).  One hoisted matmul for all timesteps/streams.
            gi = lax.dot_general(x3, wih, (((2,), (0,)), ((), ())),
                                 preferred_element_type=jnp.float32) + bih   # (T,B,12H)
            h = jnp.zeros((BATCH, 4 * H), jnp.float32)  # [img_f | txt_f | img_b | txt_b]
            for s in range(SEQ):                        # static & tiny -> fully unrolled
                git = gi[s]                                                 # (B, 12H)
                g = jnp.dot(h, whh, preferred_element_type=jnp.float32)     # (B, 12H)
                # ONE sigmoid over all r/z gates, ONE tanh over all n gates
                rz = jax.nn.sigmoid(git[:, 0:8 * H] + g[:, 0:8 * H])        # (B, 8H)
                n = jnp.tanh(git[:, 8 * H:] +
                             rz[:, 0:4 * H] * (g[:, 8 * H:] + bhn))         # (B, 4H)
                h = n + rz[:, 4 * H:8 * H] * (h - n)    # = (1-z)*n + z*h
                hf = h[:, 0:2 * H]                      # fwd streams -> output time s
                hb = h[:, 2 * H:4 * H]                  # bwd streams -> output time T-1-s
                sr = SEQ - 1 - s
                # Write the output sequence in augmented form [y(t) | y(T-1-t)] so the
                # next layer's hoisted projection needs no time flip.
                scr_ref[s, :, 0:2 * H] = hf
                scr_ref[sr, :, 2 * H:4 * H] = hb
                scr_ref[sr, :, 4 * H:6 * H] = hf
                scr_ref[s, :, 6 * H:8 * H] = hb

        # ---- 2-layer bidirectional GRU, both modalities batched block-diagonally
        bigru_layer(x_ref[...], W("wih0"), W("bih0"), W("whh0"), W("bhn0"), scr0_ref)
        bigru_layer(scr0_ref[...], W("wih1"), W("bih1"), W("whh1"), W("bhn1"), scr1_ref)

        # ---- per-modality LayerNorm + attention pooling + refiner (block-diag weights)
        y = scr1_ref[:, :, 0:4 * H]                     # (T,B,4H) [img_f txt_f img_b txt_b]
        # one-time reorder to modality-contiguous [img(fwd,bwd) | txt(fwd,bwd)]
        y = jnp.concatenate([y[:, :, 0:H], y[:, :, 2 * H:3 * H],
                             y[:, :, H:2 * H], y[:, :, 3 * H:4 * H]], axis=-1)
        yi = y[:, :, 0:2 * H]
        yt = y[:, :, 2 * H:4 * H]
        mi = jnp.mean(yi, axis=-1, keepdims=True)
        mt = jnp.mean(yt, axis=-1, keepdims=True)
        vi = jnp.mean((yi - mi) ** 2, axis=-1, keepdims=True)
        vt = jnp.mean((yt - mt) ** 2, axis=-1, keepdims=True)
        yn = jnp.concatenate([(yi - mi) * lax.rsqrt(vi + LN_EPS),
                              (yt - mt) * lax.rsqrt(vt + LN_EPS)], axis=-1)
        yn = yn * W("ln_g") + W("ln_b")                                      # (T,B,4H)

        h1 = jnp.tanh(lax.dot_general(yn, W("attn_w1"), (((2,), (0,)), ((), ())),
                                      preferred_element_type=jnp.float32) + W("attn_b1"))
        prod = h1 * W("attn_w2")                                             # (T,B,2H)
        sc = jnp.concatenate(
            [jnp.sum(prod[:, :, 0:H], axis=-1, keepdims=True),
             jnp.sum(prod[:, :, H:2 * H], axis=-1, keepdims=True)], axis=-1)  # (T,B,2)
        sc = sc - jnp.max(sc, axis=0, keepdims=True)    # softmax over the time axis
        e = jnp.exp(sc)
        w = e / jnp.sum(e, axis=0, keepdims=True)                             # (T,B,2)
        pooled = jnp.concatenate(
            [jnp.sum(yn[:, :, 0:2 * H] * w[:, :, 0:1], axis=0),
             jnp.sum(yn[:, :, 2 * H:4 * H] * w[:, :, 1:2], axis=0)], axis=-1)  # (B,4H)
        refined = _gelu_exact(jnp.dot(pooled, W("ref_w"),
                                      preferred_element_type=jnp.float32) + W("ref_b"))

        # ---- fusion (pre-folded aux attention) + gated residual LayerNorm + classifier
        img = refined[:, 0:2 * H]
        txt = refined[:, 2 * H:4 * H]
        aux = jnp.dot(txt, W("aux_w"), preferred_element_type=jnp.float32) + W("aux_b")
        allf = jnp.concatenate([img, aux], axis=-1)                           # (B, 2D)
        gate = jax.nn.sigmoid(jnp.dot(allf, W("fusion_w"),
                                      preferred_element_type=jnp.float32) + W("fusion_b"))
        fx = img + gate * aux
        fm = jnp.mean(fx, axis=-1, keepdims=True)
        fv = jnp.mean((fx - fm) ** 2, axis=-1, keepdims=True)
        xn = (fx - fm) * lax.rsqrt(fv + LN_EPS) * W("fuse_ln_g") + W("fuse_ln_b")
        hc = _gelu_exact(jnp.dot(xn, W("cls_w1"),
                                 preferred_element_type=jnp.float32) + W("cls_b1"))
        out_ref[...] = (jnp.dot(hc, W("cls_w2"), preferred_element_type=jnp.float32)
                        + W("cls_b2")).astype(out_ref.dtype)

    return kernel


def make_forward_fn(layout):
    kernel = _make_kernel(layout)
    fused = pl.pallas_call(
        kernel,
        out_shape=jax.ShapeDtypeStruct((BATCH, N_CLS), jnp.float32),
        in_specs=[_VMEM, _VMEM],                       # x_aug, weight slab (2 DMAs)
        out_specs=_VMEM,
        scratch_shapes=[pltpu.VMEM((SEQ, BATCH, 8 * ENC_HIDDEN), jnp.float32),
                        pltpu.VMEM((SEQ, BATCH, 8 * ENC_HIDDEN), jnp.float32)],
    )

    def forward(slab, inputs):
        # (B,T,F) per modality -> concat features -> (T,B,88) -> augment with the
        # time-reversed copy so the kernel never needs an in-kernel flip.
        x = jnp.concatenate([inputs["image"].astype(jnp.float32),
                             inputs["text"].astype(jnp.float32)], axis=-1)    # (B,T,88)
        x = jnp.transpose(x, (1, 0, 2))                                        # (T,B,88)
        x_aug = jnp.concatenate([x, x[::-1]], axis=-1)                         # (T,B,176)
        return fused(x_aug, slab)

    return forward


# ----------------------------------------------------------------------------- params
def init_params(key):
    """PyTorch-layout-equivalent parameters (linear weights stored as (in, out))."""
    counter = [0]

    def nrm(shape, scale=0.1):
        counter[0] += 1
        return scale * jax.random.normal(jax.random.fold_in(key, counter[0]), shape, jnp.float32)

    p = {}
    for m in MODALITIES:
        for layer in range(2):
            layer_in = FEAT_DIMS[m] if layer == 0 else MODEL_DIM
            for d in ("f", "b"):                                  # fwd / bwd directions
                p[f"{m}_gru{layer}{d}_wih"] = nrm((layer_in, 3 * ENC_HIDDEN))
                p[f"{m}_gru{layer}{d}_whh"] = nrm((ENC_HIDDEN, 3 * ENC_HIDDEN))
                p[f"{m}_gru{layer}{d}_bih"] = nrm((1, 3 * ENC_HIDDEN), 0.01)
                p[f"{m}_gru{layer}{d}_bhh"] = nrm((1, 3 * ENC_HIDDEN), 0.01)
        p[f"{m}_ln_g"] = jnp.ones((1, MODEL_DIM), jnp.float32)
        p[f"{m}_ln_b"] = jnp.zeros((1, MODEL_DIM), jnp.float32)
        p[f"{m}_attn_w1"] = nrm((MODEL_DIM, ENC_HIDDEN))
        p[f"{m}_attn_b1"] = nrm((1, ENC_HIDDEN), 0.01)
        p[f"{m}_attn_w2"] = nrm((ENC_HIDDEN, 1))
        p[f"{m}_attn_b2"] = nrm((1, 1), 0.01)    # constant over time -> cancels in softmax
        p[f"{m}_ref_w"] = nrm((MODEL_DIM, MODEL_DIM))
        p[f"{m}_ref_b"] = nrm((1, MODEL_DIM), 0.01)
    # auxiliary_attention['text'] (q/k kept for module fidelity; with kv length 1 the
    # softmax is identically 1 so they cannot influence the output)
    for name in ("wq", "wk", "wv", "wo"):
        p[f"aux_text_{name}"] = nrm((MODEL_DIM, MODEL_DIM))
    for name in ("bq", "bk", "bv", "bo"):
        p[f"aux_text_{name}"] = nrm((1, MODEL_DIM), 0.01)
    p["fusion_w"] = nrm((2 * MODEL_DIM, MODEL_DIM))
    p["fusion_b"] = nrm((1, MODEL_DIM), 0.01)
    p["fuse_ln_g"] = jnp.ones((1, MODEL_DIM), jnp.float32)
    p["fuse_ln_b"] = jnp.zeros((1, MODEL_DIM), jnp.float32)
    p["cls_w1"] = nrm((MODEL_DIM, MODEL_DIM // 2))
    p["cls_b1"] = nrm((1, MODEL_DIM // 2), 0.01)
    p["cls_w2"] = nrm((MODEL_DIM // 2, N_CLS))
    p["cls_b2"] = nrm((1, N_CLS), 0.01)
    return p


def pack_params(p):
    """One-time host-side packing into the fused-kernel slab layout."""
    H = ENC_HIDDEN

    def A(name):
        return np.asarray(p[name], np.float32)

    def gru_layer_pack(layer):
        n_in_aug = 2 * (NIN0 if layer == 0 else 4 * H)
        wih = np.zeros((n_in_aug, GATES), np.float32)
        whh = np.zeros((4 * H, GATES), np.float32)
        bih = np.zeros((1, GATES), np.float32)
        bhn = np.zeros((1, 4 * H), np.float32)
        if layer == 0:
            fi, ft = FEAT_DIMS["image"], FEAT_DIMS["text"]
            in_rows = {("image", "f"): [(0, fi)], ("text", "f"): [(fi, ft)],
                       ("image", "b"): [(NIN0, fi)], ("text", "b"): [(NIN0 + fi, ft)]}
        else:
            # layer-1 input rows = previous layer's augmented output [y(t) | y(T-1-t)],
            # y(t) = [img_f txt_f img_b txt_b]; per-modality GRU input = [fwd_out, bwd_out]
            in_rows = {("image", "f"): [(0, H), (2 * H, H)],
                       ("text", "f"): [(H, H), (3 * H, H)],
                       ("image", "b"): [(4 * H, H), (6 * H, H)],
                       ("text", "b"): [(5 * H, H), (7 * H, H)]}
        for d, (m, dr) in enumerate(DIRS):
            w_ih = A(f"{m}_gru{layer}{dr}_wih")     # (in, 3H) cols [r|z|n]
            w_hh = A(f"{m}_gru{layer}{dr}_whh")     # (H, 3H)
            b_ih = A(f"{m}_gru{layer}{dr}_bih")     # (1, 3H)
            b_hh = A(f"{m}_gru{layer}{dr}_bhh")     # (1, 3H)
            rcols = slice(d * H, (d + 1) * H)
            zcols = slice(4 * H + d * H, 4 * H + (d + 1) * H)
            ncols = slice(8 * H + d * H, 8 * H + (d + 1) * H)
            row0 = 0
            for start, length in in_rows[(m, dr)]:
                wih[start:start + length, rcols] = w_ih[row0:row0 + length, 0:H]
                wih[start:start + length, zcols] = w_ih[row0:row0 + length, H:2 * H]
                wih[start:start + length, ncols] = w_ih[row0:row0 + length, 2 * H:3 * H]
                row0 += length
            hrows = slice(d * H, (d + 1) * H)
            whh[hrows, rcols] = w_hh[:, 0:H]
            whh[hrows, zcols] = w_hh[:, H:2 * H]
            whh[hrows, ncols] = w_hh[:, 2 * H:3 * H]
            bih[0, rcols] = b_ih[0, 0:H] + b_hh[0, 0:H]            # fold b_hr
            bih[0, zcols] = b_ih[0, H:2 * H] + b_hh[0, H:2 * H]    # fold b_hz
            bih[0, ncols] = b_ih[0, 2 * H:3 * H]
            bhn[0, d * H:(d + 1) * H] = b_hh[0, 2 * H:3 * H]       # b_hn stays (scaled by r)
        return wih, whh, bih, bhn

    entries = []
    wih0, whh0, bih0, bhn0 = gru_layer_pack(0)
    wih1, whh1, bih1, bhn1 = gru_layer_pack(1)
    entries += [("wih0", wih0), ("bih0", bih0), ("whh0", whh0), ("bhn0", bhn0),
                ("wih1", wih1), ("bih1", bih1), ("whh1", whh1), ("bhn1", bhn1)]

    entries.append(("ln_g", np.concatenate([A("image_ln_g"), A("text_ln_g")], axis=1)))
    entries.append(("ln_b", np.concatenate([A("image_ln_b"), A("text_ln_b")], axis=1)))
    attn_w1 = np.zeros((4 * H, 2 * H), np.float32)                 # block-diag per modality
    attn_w1[0:2 * H, 0:H] = A("image_attn_w1")
    attn_w1[2 * H:4 * H, H:2 * H] = A("text_attn_w1")
    entries.append(("attn_w1", attn_w1))
    entries.append(("attn_b1", np.concatenate([A("image_attn_b1"), A("text_attn_b1")], axis=1)))
    entries.append(("attn_w2", np.concatenate([A("image_attn_w2").T, A("text_attn_w2").T], axis=1)))
    # attn_b2 dropped: identical for every timestep -> cancels exactly in the softmax.
    ref_w = np.zeros((4 * H, 4 * H), np.float32)
    ref_w[0:2 * H, 0:2 * H] = A("image_ref_w")
    ref_w[2 * H:4 * H, 2 * H:4 * H] = A("text_ref_w")
    entries.append(("ref_w", ref_w))
    entries.append(("ref_b", np.concatenate([A("image_ref_b"), A("text_ref_b")], axis=1)))
    # Folded auxiliary MHA: kv sequence length is 1 -> per-head softmax == 1 exactly,
    # so MHA(q, kv, kv) == out_proj(v_proj(kv)); q/k projections cannot affect it.
    entries.append(("aux_w", A("aux_text_wv") @ A("aux_text_wo")))
    entries.append(("aux_b", A("aux_text_bv") @ A("aux_text_wo") + A("aux_text_bo")))
    for name in ("fusion_w", "fusion_b", "fuse_ln_g", "fuse_ln_b",
                 "cls_w1", "cls_b1", "cls_w2", "cls_b2"):
        entries.append((name, A(name)))

    layout = {}
    blocks = []
    off = 0
    for name, arr in entries:
        r, c = arr.shape
        assert c <= SLAB_COLS, (name, arr.shape)
        layout[name] = (off, r, c)
        rpad = -(-r // 8) * 8                        # 8-row aligned offsets
        block = np.zeros((rpad, SLAB_COLS), np.float32)
        block[:r, :c] = arr
        blocks.append(block)
        off += rpad
    slab = jnp.asarray(np.concatenate(blocks, axis=0))
    return slab, layout


# ----------------------------------------------------------------------------- main
if __name__ == "__main__":
    root = jax.random.PRNGKey(0)
    pkey, ikey, tkey = jax.random.split(root, 3)
    params = init_params(pkey)
    slab, layout = pack_params(params)
    inputs = {
        "image": jax.random.normal(ikey, (BATCH, SEQ, FEAT_DIMS["image"]), jnp.float32),
        "text": jax.random.normal(tkey, (BATCH, SEQ, FEAT_DIMS["text"]), jnp.float32),
    }

    forward = jax.jit(make_forward_fn(layout))
    logits = forward(slab, inputs)
    jax.block_until_ready(logits)
    assert logits.shape == (BATCH, N_CLS), logits.shape
    assert bool(jnp.all(jnp.isfinite(logits)))
    print("KERNEL_OK")
</pallas_src>

<mosaic_0001>
module attributes {stable_mosaic.version = 11 : i64} {
  func.func @kernel(%arg0: memref<8x2x176xf32, #tpu.memory_space<vmem>>, %arg1: memref<824x192xf32, #tpu.memory_space<vmem>>, %arg2: memref<2x2xf32, #tpu.memory_space<vmem>>, %arg3: memref<8x2x128xf32, #tpu.memory_space<vmem>>, %arg4: memref<8x2x128xf32, #tpu.memory_space<vmem>>) attributes {dimension_semantics = [], scalar_prefetch = 0 : i64, scratch_operands = 2 : i64, tpu.core_type = #tpu.core_type<tc>} {
    %c0 = arith.constant 0 : index
    %c0_0 = arith.constant 0 : index
    %c0_1 = arith.constant 0 : index
    %0 = vector.load %arg0[%c0, %c0_0, %c0_1] : memref<8x2x176xf32, #tpu.memory_space<vmem>>, vector<8x2x176xf32>
    %c0_2 = arith.constant 0 : index
    %c0_3 = arith.constant 0 : index
    %1 = vector.load %arg1[%c0_2, %c0_3] : memref<824x192xf32, #tpu.memory_space<vmem>>, vector<176x192xf32>
    %c176 = arith.constant 176 : index
    %c0_4 = arith.constant 0 : index
    %2 = vector.load %arg1[%c176, %c0_4] : memref<824x192xf32, #tpu.memory_space<vmem>>, vector<1x192xf32>
    %c184 = arith.constant 184 : index
    %c0_5 = arith.constant 0 : index
    %3 = vector.load %arg1[%c184, %c0_5] : memref<824x192xf32, #tpu.memory_space<vmem>>, vector<64x192xf32>
    %c248 = arith.constant 248 : index
    %c0_6 = arith.constant 0 : index
    %4 = vector.load %arg1[%c248, %c0_6] : memref<824x192xf32, #tpu.memory_space<vmem>>, vector<1x64xf32>
    %cst = arith.constant dense<0.000000e+00> : vector<8x2x192xf32>
    %5 = tpu.matmul %0, %1, %cst {dimension_numbers = #tpu.dot_dimension_numbers<[2], [0], [0, 1], [1], [0, 0, 0, 1, 1, 1], [], []>} : vector<8x2x176xf32>, vector<176x192xf32>, vector<8x2x192xf32> -> vector<8x2x192xf32>
    %6 = vector.shape_cast %2 : vector<1x192xf32> to vector<1x1x192xf32>
    %7 = vector.broadcast %6 : vector<1x1x192xf32> to vector<8x2x192xf32>
    %8 = arith.addf %5, %7 : vector<8x2x192xf32>
    %cst_7 = arith.constant 0.000000e+00 : f32
    %9 = vector.broadcast %cst_7 : f32 to vector<2x64xf32>
    %10 = vector.extract_strided_slice %8 {offsets = [0, 0, 0], sizes = [1, 2, 192], strides = [1, 1, 1]} : vector<8x2x192xf32> to vector<1x2x192xf32>
    %11 = vector.shape_cast %10 : vector<1x2x192xf32> to vector<2x192xf32>
    %cst_8 = arith.constant dense<0.000000e+00> : vector<2x192xf32>
    %12 = tpu.matmul %9, %3, %cst_8 {dimension_numbers = #tpu.dot_dimension_numbers<[1], [0], [0], [1], [0, 0, 1, 1], [], []>} : vector<2x64xf32>, vector<64x192xf32>, vector<2x192xf32> -> vector<2x192xf32>
    %13 = vector.extract_strided_slice %11 {offsets = [0, 0], sizes = [2, 128], strides = [1, 1]} : vector<2x192xf32> to vector<2x128xf32>
    %14 = vector.extract_strided_slice %12 {offsets = [0, 0], sizes = [2, 128], strides = [1, 1]} : vector<2x192xf32> to vector<2x128xf32>
    %15 = arith.addf %13, %14 : vector<2x128xf32>
    %16 = arith.negf %15 : vector<2x128xf32>
    %17 = math.exp %16 : vector<2x128xf32>
    %cst_9 = arith.constant 1.000000e+00 : f32
    %18 = vector.broadcast %cst_9 : f32 to vector<2x128xf32>
    %19 = arith.addf %18, %17 : vector<2x128xf32>
    %20 = arith.divf %18, %19 : vector<2x128xf32>
    %21 = vector.extract_strided_slice %11 {offsets = [0, 128], sizes = [2, 64], strides = [1, 1]} : vector<2x192xf32> to vector<2x64xf32>
    %22 = vector.extract_strided_slice %20 {offsets = [0, 0], sizes = [2, 64], strides = [1, 1]} : vector<2x128xf32> to vector<2x64xf32>
    %23 = vector.extract_strided_slice %12 {offsets = [0, 128], sizes = [2, 64], strides = [1, 1]} : vector<2x192xf32> to vector<2x64xf32>
    %24 = vector.broadcast %4 : vector<1x64xf32> to vector<2x64xf32>
    %25 = arith.addf %23, %24 : vector<2x64xf32>
    %26 = arith.mulf %22, %25 : vector<2x64xf32>
    %27 = arith.addf %21, %26 : vector<2x64xf32>
    %28 = math.tanh %27 : vector<2x64xf32>
    %29 = vector.extract_strided_slice %20 {offsets = [0, 64], sizes = [2, 64], strides = [1, 1]} : vector<2x128xf32> to vector<2x64xf32>
    %30 = arith.subf %9, %28 : vector<2x64xf32>
    %31 = arith.mulf %29, %30 : vector<2x64xf32>
    %32 = arith.addf %28, %31 : vector<2x64xf32>
    %33 = vector.extract_strided_slice %32 {offsets = [0, 0], sizes = [2, 32], strides = [1, 1]} : vector<2x64xf32> to vector<2x32xf32>
    %34 = vector.extract_strided_slice %32 {offsets = [0, 32], sizes = [2, 32], strides = [1, 1]} : vector<2x64xf32> to vector<2x32xf32>
    %c0_10 = arith.constant 0 : index
    %c0_11 = arith.constant 0 : index
    %c0_12 = arith.constant 0 : index
    %35 = vector.load %arg3[%c0_10, %c0_11, %c0_12] : memref<8x2x128xf32, #tpu.memory_space<vmem>>, vector<1x2x32xf32>
    %36 = vector.shape_cast %35 : vector<1x2x32xf32> to vector<2x32xf32>
    %37 = vector.shape_cast %33 : vector<2x32xf32> to vector<1x2x32xf32>
    tpu.vector_store %arg3[%c0_10, %c0_11, %c0_12], %37 {strides = array<i32>} : memref<8x2x128xf32, #tpu.memory_space<vmem>>, vector<1x2x32xf32>,
    %c7 = arith.constant 7 : index
    %c0_13 = arith.constant 0 : index
    %c32 = arith.constant 32 : index
    %38 = vector.load %arg3[%c7, %c0_13, %c32] : memref<8x2x128xf32, #tpu.memory_space<vmem>>, vector<1x2x32xf32>
    %39 = vector.shape_cast %38 : vector<1x2x32xf32> to vector<2x32xf32>
    %40 = vector.shape_cast %34 : vector<2x32xf32> to vector<1x2x32xf32>
    tpu.vector_store %arg3[%c7, %c0_13, %c32], %40 {strides = array<i32>} : memref<8x2x128xf32, #tpu.memory_space<vmem>>, vector<1x2x32xf32>,
    %c7_14 = arith.constant 7 : index
    %c0_15 = arith.constant 0 : index
    %c64 = arith.constant 64 : index
    %41 = vector.load %arg3[%c7_14, %c0_15, %c64] : memref<8x2x128xf32, #tpu.memory_space<vmem>>, vector<1x2x32xf32>
    %42 = vector.shape_cast %41 : vector<1x2x32xf32> to vector<2x32xf32>
    %43 = vector.shape_cast %33 : vector<2x32xf32> to vector<1x2x32xf32>
    tpu.vector_store %arg3[%c7_14, %c0_15, %c64], %43 {strides = array<i32>} : memref<8x2x128xf32, #tpu.memory_space<vmem>>, vector<1x2x32xf32>,
    %c0_16 = arith.constant 0 : index
    %c0_17 = arith.constant 0 : index
    %c96 = arith.constant 96 : index
    %44 = vector.load %arg3[%c0_16, %c0_17, %c96] : memref<8x2x128xf32, #tpu.memory_space<vmem>>, vector<1x2x32xf32>
    %45 = vector.shape_cast %44 : vector<1x2x32xf32> to vector<2x32xf32>
    %46 = vector.shape_cast %34 : vector<2x32xf32> to vector<1x2x32xf32>
    tpu.vector_store %arg3[%c0_16, %c0_17, %c96], %46 {strides = array<i32>} : memref<8x2x128xf32, #tpu.memory_space<vmem>>, vector<1x2x32xf32>,
    %47 = vector.extract_strided_slice %8 {offsets = [1, 0, 0], sizes = [1, 2, 192], strides = [1, 1, 1]} : vector<8x2x192xf32> to vector<1x2x192xf32>
    %48 = vector.shape_cast %47 : vector<1x2x192xf32> to vector<2x192xf32>
    %cst_18 = arith.constant dense<0.000000e+00> : vector<2x192xf32>
    %49 = tpu.matmul %32, %3, %cst_18 {dimension_numbers = #tpu.dot_dimension_numbers<[1], [0], [0], [1], [0, 0, 1, 1], [], []>} : vector<2x64xf32>, vector<64x192xf32>, vector<2x192xf32> -> vector<2x192xf32>
    %50 = vector.extract_strided_slice %48 {offsets = [0, 0], sizes = [2, 128], strides = [1, 1]} : vector<2x192xf32> to vector<2x128xf32>
    %51 = vector.extract_strided_slice %49 {offsets = [0, 0], sizes = [2, 128], strides = [1, 1]} : vector<2x192xf32> to vector<2x128xf32>
    %52 = arith.addf %50, %51 : vector<2x128xf32>
    %53 = arith.negf %52 : vector<2x128xf32>
    %54 = math.exp %53 : vector<2x128xf32>
    %cst_19 = arith.constant 1.000000e+00 : f32
    %55 = vector.broadcast %cst_19 : f32 to vector<2x128xf32>
    %56 = arith.addf %55, %54 : vector<2x128xf32>
    %57 = arith.divf %55, %56 : vector<2x128xf32>
    %58 = vector.extract_strided_slice %48 {offsets = [0, 128], sizes = [2, 64], strides = [1, 1]} : vector<2x192xf32> to vector<2x64xf32>
    %59 = vector.extract_strided_slice %57 {offsets = [0, 0], sizes = [2, 64], strides = [1, 1]} : vector<2x128xf32> to vector<2x64xf32>
    %60 = vector.extract_strided_slice %49 {offsets = [0, 128], sizes = [2, 64], strides = [1, 1]} : vector<2x192xf32> to vector<2x64xf32>
    %61 = vector.broadcast %4 : vector<1x64xf32> to vector<2x64xf32>
    %62 = arith.addf %60, %61 : vector<2x64xf32>
    %63 = arith.mulf %59, %62 : vector<2x64xf32>
    %64 = arith.addf %58, %63 : vector<2x64xf32>
    %65 = math.tanh %64 : vector<2x64xf32>
    %66 = vector.extract_strided_slice %57 {offsets = [0, 64], sizes = [2, 64], strides = [1, 1]} : vector<2x128xf32> to vector<2x64xf32>
    %67 = arith.subf %32, %65 : vector<2x64xf32>
    %68 = arith.mulf %66, %67 : vector<2x64xf32>
    %69 = arith.addf %65, %68 : vector<2x64xf32>
    %70 = vector.extract_strided_slice %69 {offsets = [0, 0], sizes = [2, 32], strides = [1, 1]} : vector<2x64xf32> to vector<2x32xf32>
    %71 = vector.extract_strided_slice %69 {offsets = [0, 32], sizes = [2, 32], strides = [1, 1]} : vector<2x64xf32> to vector<2x32xf32>
    %c1 = arith.constant 1 : index
    %c0_20 = arith.constant 0 : index
    %c0_21 = arith.constant 0 : index
    %72 = vector.load %arg3[%c1, %c0_20, %c0_21] : memref<8x2x128xf32, #tpu.memory_space<vmem>>, vector<1x2x32xf32>
    %73 = vector.shape_cast %72 : vector<1x2x32xf32> to vector<2x32xf32>
    %74 = vector.shape_cast %70 : vector<2x32xf32> to vector<1x2x32xf32>
    tpu.vector_store %arg3[%c1, %c0_20, %c0_21], %74 {strides = array<i32>} : memref<8x2x128xf32, #tpu.memory_space<vmem>>, vector<1x2x32xf32>,
    %c6 = arith.constant 6 : index
    %c0_22 = arith.constant 0 : index
    %c32_23 = arith.constant 32 : index
    %75 = vector.load %arg3[%c6, %c0_22, %c32_23] : memref<8x2x128xf32, #tpu.memory_space<vmem>>, vector<1x2x32xf32>
    %76 = vector.shape_cast %75 : vector<1x2x32xf32> to vector<2x32xf32>
    %77 = vector.shape_cast %71 : vector<2x32xf32> to vector<1x2x32xf32>
    tpu.vector_store %arg3[%c6, %c0_22, %c32_23], %77 {strides = array<i32>} : memref<8x2x128xf32, #tpu.memory_space<vmem>>, vector<1x2x32xf32>,
    %c6_24 = arith.constant 6 : index
    %c0_25 = arith.constant 0 : index
    %c64_26 = arith.constant 64 : index
    %78 = vector.load %arg3[%c6_24, %c0_25, %c64_26] : memref<8x2x128xf32, #tpu.memory_space<vmem>>, vector<1x2x32xf32>
    %79 = vector.shape_cast %78 : vector<1x2x32xf32> to vector<2x32xf32>
    %80 = vector.shape_cast %70 : vector<2x32xf32> to vector<1x2x32xf32>
    tpu.vector_store %arg3[%c6_24, %c0_25, %c64_26], %80 {strides = array<i32>} : memref<8x2x128xf32, #tpu.memory_space<vmem>>, vector<1x2x32xf32>,
    %c1_27 = arith.constant 1 : index
    %c0_28 = arith.constant 0 : index
    %c96_29 = arith.constant 96 : index
    %81 = vector.load %arg3[%c1_27, %c0_28, %c96_29] : memref<8x2x128xf32, #tpu.memory_space<vmem>>, vector<1x2x32xf32>
    %82 = vector.shape_cast %81 : vector<1x2x32xf32> to vector<2x32xf32>
    %83 = vector.shape_cast %71 : vector<2x32xf32> to vector<1x2x32xf32>
    tpu.vector_store %arg3[%c1_27, %c0_28, %c96_29], %83 {strides = array<i32>} : memref<8x2x128xf32, #tpu.memory_space<vmem>>, vector<1x2x32xf32>,
    %84 = vector.extract_strided_slice %8 {offsets = [2, 0, 0], sizes = [1, 2, 192], strides = [1, 1, 1]} : vector<8x2x192xf32> to vector<1x2x192xf32>
    %85 = vector.shape_cast %84 : vector<1x2x192xf32> to vector<2x192xf32>
    %cst_30 = arith.constant dense<0.000000e+00> : vector<2x192xf32>
    %86 = tpu.matmul %69, %3, %cst_30 {dimension_numbers = #tpu.dot_dimension_numbers<[1], [0], [0], [1], [0, 0, 1, 1], [], []>} : vector<2x64xf32>, vector<64x192xf32>, vector<2x192xf32> -> vector<2x192xf32>
    %87 = vector.extract_strided_slice %85 {offsets = [0, 0], sizes = [2, 128], strides = [1, 1]} : vector<2x192xf32> to vector<2x128xf32>
    %88 = vector.extract_strided_slice %86 {offsets = [0, 0], sizes = [2, 128], strides = [1, 1]} : vector<2x192xf32> to vector<2x128xf32>
    %89 = arith.addf %87, %88 : vector<2x128xf32>
    %90 = arith.negf %89 : vector<2x128xf32>
    %91 = math.exp %90 : vector<2x128xf32>
    %cst_31 = arith.constant 1.000000e+00 : f32
    %92 = vector.broadcast %cst_31 : f32 to vector<2x128xf32>
    %93 = arith.addf %92, %91 : vector<2x128xf32>
    %94 = arith.divf %92, %93 : vector<2x128xf32>
    %95 = vector.extract_strided_slice %85 {offsets = [0, 128], sizes = [2, 64], strides = [1, 1]} : vector<2x192xf32> to vector<2x64xf32>
    %96 = vector.extract_strided_slice %94 {offsets = [0, 0], sizes = [2, 64], strides = [1, 1]} : vector<2x128xf32> to vector<2x64xf32>
    %97 = vector.extract_strided_slice %86 {offsets = [0, 128], sizes = [2, 64], strides = [1, 1]} : vector<2x192xf32> to vector<2x64xf32>
    %98 = vector.broadcast %4 : vector<1x64xf32> to vector<2x64xf32>
    %99 = arith.addf %97, %98 : vector<2x64xf32>
    %100 = arith.mulf %96, %99 : vector<2x64xf32>
    %101 = arith.addf %95, %100 : vector<2x64xf32>
    %102 = math.tanh %101 : vector<2x64xf32>
    %103 = vector.extract_strided_slice %94 {offsets = [0, 64], sizes = [2, 64], strides = [1, 1]} : vector<2x128xf32> to vector<2x64xf32>
    %104 = arith.subf %69, %102 : vector<2x64xf32>
    %105 = arith.mulf %103, %104 : vector<2x64xf32>
    %106 = arith.addf %102, %105 : vector<2x64xf32>
    %107 = vector.extract_strided_slice %106 {offsets = [0, 0], sizes = [2, 32], strides = [1, 1]} : vector<2x64xf32> to vector<2x32xf32>
    %108 = vector.extract_strided_slice %106 {offsets = [0, 32], sizes = [2, 32], strides = [1, 1]} : vector<2x64xf32> to vector<2x32xf32>
    %c2 = arith.constant 2 : index
    %c0_32 = arith.constant 0 : index
    %c0_33 = arith.constant 0 : index
    %109 = vector.load %arg3[%c2, %c0_32, %c0_33] : memref<8x2x128xf32, #tpu.memory_space<vmem>>, vector<1x2x32xf32>
    %110 = vector.shape_cast %109 : vector<1x2x32xf32> to vector<2x32xf32>
    %111 = vector.shape_cast %107 : vector<2x32xf32> to vector<1x2x32xf32>
    tpu.vector_store %arg3[%c2, %c0_32, %c0_33], %111 {strides = array<i32>} : memref<8x2x128xf32, #tpu.memory_space<vmem>>, vector<1x2x32xf32>,
    %c5 = arith.constant 5 : index
    %c0_34 = arith.constant 0 : index
    %c32_35 = arith.constant 32 : index
    %112 = vector.load %arg3[%c5, %c0_34, %c32_35] : memref<8x2x128xf32, #tpu.memory_space<vmem>>, vector<1x2x32xf32>
    %113 = vector.shape_cast %112 : vector<1x2x32xf32> to vector<2x32xf32>
    %114 = vector.shape_cast %108 : vector<2x32xf32> to vector<1x2x32xf32>
    tpu.vector_store %arg3[%c5, %c0_34, %c32_35], %114 {strides = array<i32>} : memref<8x2x128xf32, #tpu.memory_space<vmem>>, vector<1x2x32xf32>,
    %c5_36 = arith.constant 5 : index
    %c0_37 = arith.constant 0 : index
    %c64_38 = arith.constant 64 : index
    %115 = vector.load %arg3[%c5_36, %c0_37, %c64_38] : memref<8x2x128xf32, #tpu.memory_space<vmem>>, vector<1x2x32xf32>
    %116 = vector.shape_cast %115 : vector<1x2x32xf32> to vector<2x32xf32>
    %117 = vector.shape_cast %107 : vector<2x32xf32> to vector<1x2x32xf32>
    tpu.vector_store %arg3[%c5_36, %c0_37, %c64_38], %117 {strides = array<i32>} : memref<8x2x128xf32, #tpu.memory_space<vmem>>, vector<1x2x32xf32>,
    %c2_39 = arith.constant 2 : index
    %c0_40 = arith.constant 0 : index
    %c96_41 = arith.constant 96 : index
    %118 = vector.load %arg3[%c2_39, %c0_40, %c96_41] : memref<8x2x128xf32, #tpu.memory_space<vmem>>, vector<1x2x32xf32>
    %119 = vector.shape_cast %118 : vector<1x2x32xf32> to vector<2x32xf32>
    %120 = vector.shape_cast %108 : vector<2x32xf32> to vector<1x2x32xf32>
    tpu.vector_store %arg3[%c2_39, %c0_40, %c96_41], %120 {strides = array<i32>} : memref<8x2x128xf32, #tpu.memory_space<vmem>>, vector<1x2x32xf32>,
    %121 = vector.extract_strided_slice %8 {offsets = [3, 0, 0], sizes = [1, 2, 192], strides = [1, 1, 1]} : vector<8x2x192xf32> to vector<1x2x192xf32>
    %122 = vector.shape_cast %121 : vector<1x2x192xf32> to vector<2x192xf32>
    %cst_42 = arith.constant dense<0.000000e+00> : vector<2x192xf32>
    %123 = tpu.matmul %106, %3, %cst_42 {dimension_numbers = #tpu.dot_dimension_numbers<[1], [0], [0], [1], [0, 0, 1, 1], [], []>} : vector<2x64xf32>, vector<64x192xf32>, vector<2x192xf32> -> vector<2x192xf32>
    %124 = vector.extract_strided_slice %122 {offsets = [0, 0], sizes = [2, 128], strides = [1, 1]} : vector<2x192xf32> to vector<2x128xf32>
    %125 = vector.extract_strided_slice %123 {offsets = [0, 0], sizes = [2, 128], strides = [1, 1]} : vector<2x192xf32> to vector<2x128xf32>
    %126 = arith.addf %124, %125 : vector<2x128xf32>
    %127 = arith.negf %126 : vector<2x128xf32>
    %128 = math.exp %127 : vector<2x128xf32>
    %cst_43 = arith.constant 1.000000e+00 : f32
    %129 = vector.broadcast %cst_43 : f32 to vector<2x128xf32>
    %130 = arith.addf %129, %128 : vector<2x128xf32>
    %131 = arith.divf %129, %130 : vector<2x128xf32>
    %132 = vector.extract_strided_slice %122 {offsets = [0, 128], sizes = [2, 64], strides = [1, 1]} : vector<2x192xf32> to vector<2x64xf32>
    %133 = vector.extract_strided_slice %131 {offsets = [0, 0], sizes = [2, 64], strides = [1, 1]} : vector<2x128xf32> to vector<2x64xf32>
    %134 = vector.extract_strided_slice %123 {offsets = [0, 128], sizes = [2, 64], strides = [1, 1]} : vector<2x192xf32> to vector<2x64xf32>
    %135 = vector.broadcast %4 : vector<1x64xf32> to vector<2x64xf32>
    %136 = arith.addf %134, %135 : vector<2x64xf32>
    %137 = arith.mulf %133, %136 : vector<2x64xf32>
    %138 = arith.addf %132, %137 : vector<2x64xf32>
    %139 = math.tanh %138 : vector<2x64xf32>
    %140 = vector.extract_strided_slice %131 {offsets = [0, 64], sizes = [2, 64], strides = [1, 1]} : vector<2x128xf32> to vector<2x64xf32>
    %141 = arith.subf %106, %139 : vector<2x64xf32>
    %142 = arith.mulf %140, %141 : vector<2x64xf32>
    %143 = arith.addf %139, %142 : vector<2x64xf32>
    %144 = vector.extract_strided_slice %143 {offsets = [0, 0], sizes = [2, 32], strides = [1, 1]} : vector<2x64xf32> to vector<2x32xf32>
    %145 = vector.extract_strided_slice %143 {offsets = [0, 32], sizes = [2, 32], strides = [1, 1]} : vector<2x64xf32> to vector<2x32xf32>
    %c3 = arith.constant 3 : index
    %c0_44 = arith.constant 0 : index
    %c0_45 = arith.constant 0 : index
    %146 = vector.load %arg3[%c3, %c0_44, %c0_45] : memref<8x2x128xf32, #tpu.memory_space<vmem>>, vector<1x2x32xf32>
    %147 = vector.shape_cast %146 : vector<1x2x32xf32> to vector<2x32xf32>
    %148 = vector.shape_cast %144 : vector<2x32xf32> to vector<1x2x32xf32>
    tpu.vector_store %arg3[%c3, %c0_44, %c0_45], %148 {strides = array<i32>} : memref<8x2x128xf32, #tpu.memory_space<vmem>>, vector<1x2x32xf32>,
    %c4 = arith.constant 4 : index
    %c0_46 = arith.constant 0 : index
    %c32_47 = arith.constant 32 : index
    %149 = vector.load %arg3[%c4, %c0_46, %c32_47] : memref<8x2x128xf32, #tpu.memory_space<vmem>>, vector<1x2x32xf32>
    %150 = vector.shape_cast %149 : vector<1x2x32xf32> to vector<2x32xf32>
    %151 = vector.shape_cast %145 : vector<2x32xf32> to vector<1x2x32xf32>
    tpu.vector_store %arg3[%c4, %c0_46, %c32_47], %151 {strides = array<i32>} : memref<8x2x128xf32, #tpu.memory_space<vmem>>, vector<1x2x32xf32>,
    %c4_48 = arith.constant 4 : index
    %c0_49 = arith.constant 0 : index
    %c64_50 = arith.constant 64 : index
    %152 = vector.load %arg3[%c4_48, %c0_49, %c64_50] : memref<8x2x128xf32, #tpu.memory_space<vmem>>, vector<1x2x32xf32>
    %153 = vector.shape_cast %152 : vector<1x2x32xf32> to vector<2x32xf32>
    %154 = vector.shape_cast %144 : vector<2x32xf32> to vector<1x2x32xf32>
    tpu.vector_store %arg3[%c4_48, %c0_49, %c64_50], %154 {strides = array<i32>} : memref<8x2x128xf32, #tpu.memory_space<vmem>>, vector<1x2x32xf32>,
    %c3_51 = arith.constant 3 : index
    %c0_52 = arith.constant 0 : index
    %c96_53 = arith.constant 96 : index
    %155 = vector.load %arg3[%c3_51, %c0_52, %c96_53] : memref<8x2x128xf32, #tpu.memory_space<vmem>>, vector<1x2x32xf32>
    %156 = vector.shape_cast %155 : vector<1x2x32xf32> to vector<2x32xf32>
    %157 = vector.shape_cast %145 : vector<2x32xf32> to vector<1x2x32xf32>
    tpu.vector_store %arg3[%c3_51, %c0_52, %c96_53], %157 {strides = array<i32>} : memref<8x2x128xf32, #tpu.memory_space<vmem>>, vector<1x2x32xf32>,
    %158 = vector.extract_strided_slice %8 {offsets = [4, 0, 0], sizes = [1, 2, 192], strides = [1, 1, 1]} : vector<8x2x192xf32> to vector<1x2x192xf32>
    %159 = vector.shape_cast %158 : vector<1x2x192xf32> to vector<2x192xf32>
    %cst_54 = arith.constant dense<0.000000e+00> : vector<2x192xf32>
    %160 = tpu.matmul %143, %3, %cst_54 {dimension_numbers = #tpu.dot_dimension_numbers<[1], [0], [0], [1], [0, 0, 1, 1], [], []>} : vector<2x64xf32>, vector<64x192xf32>, vector<2x192xf32> -> vector<2x192xf32>
    %161 = vector.extract_strided_slice %159 {offsets = [0, 0], sizes = [2, 128], strides = [1, 1]} : vector<2x192xf32> to vector<2x128xf32>
    %162 = vector.extract_strided_slice %160 {offsets = [0, 0], sizes = [2, 128], strides = [1, 1]} : vector<2x192xf32> to vector<2x128xf32>
    %163 = arith.addf %161, %162 : vector<2x128xf32>
    %164 = arith.negf %163 : vector<2x128xf32>
    %165 = math.exp %164 : vector<2x128xf32>
    %cst_55 = arith.constant 1.000000e+00 : f32
    %166 = vector.broadcast %cst_55 : f32 to vector<2x128xf32>
    %167 = arith.addf %166, %165 : vector<2x128xf32>
    %168 = arith.divf %166, %167 : vector<2x128xf32>
    %169 = vector.extract_strided_slice %159 {offsets = [0, 128], sizes = [2, 64], strides = [1, 1]} : vector<2x192xf32> to vector<2x64xf32>
    %170 = vector.extract_strided_slice %168 {offsets = [0, 0], sizes = [2, 64], strides = [1, 1]} : vector<2x128xf32> to vector<2x64xf32>
    %171 = vector.extract_strided_slice %160 {offsets = [0, 128], sizes = [2, 64], strides = [1, 1]} : vector<2x192xf32> to vector<2x64xf32>
    %172 = vector.broadcast %4 : vector<1x64xf32> to vector<2x64xf32>
    %173 = arith.addf %171, %172 : vector<2x64xf32>
    %174 = arith.mulf %170, %173 : vector<2x64xf32>
    %175 = arith.addf %169, %174 : vector<2x64xf32>
    %176 = math.tanh %175 : vector<2x64xf32>
    %177 = vector.extract_strided_slice %168 {offsets = [0, 64], sizes = [2, 64], strides = [1, 1]} : vector<2x128xf32> to vector<2x64xf32>
    %178 = arith.subf %143, %176 : vector<2x64xf32>
    %179 = arith.mulf %177, %178 : vector<2x64xf32>
    %180 = arith.addf %176, %179 : vector<2x64xf32>
    %181 = vector.extract_strided_slice %180 {offsets = [0, 0], sizes = [2, 32], strides = [1, 1]} : vector<2x64xf32> to vector<2x32xf32>
    %182 = vector.extract_strided_slice %180 {offsets = [0, 32], sizes = [2, 32], strides = [1, 1]} : vector<2x64xf32> to vector<2x32xf32>
    %c4_56 = arith.constant 4 : index
    %c0_57 = arith.constant 0 : index
    %c0_58 = arith.constant 0 : index
    %183 = vector.load %arg3[%c4_56, %c0_57, %c0_58] : memref<8x2x128xf32, #tpu.memory_space<vmem>>, vector<1x2x32xf32>
    %184 = vector.shape_cast %183 : vector<1x2x32xf32> to vector<2x32xf32>
    %185 = vector.shape_cast %181 : vector<2x32xf32> to vector<1x2x32xf32>
    tpu.vector_store %arg3[%c4_56, %c0_57, %c0_58], %185 {strides = array<i32>} : memref<8x2x128xf32, #tpu.memory_space<vmem>>, vector<1x2x32xf32>,
    %c3_59 = arith.constant 3 : index
    %c0_60 = arith.constant 0 : index
    %c32_61 = arith.constant 32 : index
    %186 = vector.load %arg3[%c3_59, %c0_60, %c32_61] : memref<8x2x128xf32, #tpu.memory_space<vmem>>, vector<1x2x32xf32>
    %187 = vector.shape_cast %186 : vector<1x2x32xf32> to vector<2x32xf32>
    %188 = vector.shape_cast %182 : vector<2x32xf32> to vector<1x2x32xf32>
    tpu.vector_store %arg3[%c3_59, %c0_60, %c32_61], %188 {strides = array<i32>} : memref<8x2x128xf32, #tpu.memory_space<vmem>>, vector<1x2x32xf32>,
    %c3_62 = arith.constant 3 : index
    %c0_63 = arith.constant 0 : index
    %c64_64 = arith.constant 64 : index
    %189 = vector.load %arg3[%c3_62, %c0_63, %c64_64] : memref<8x2x128xf32, #tpu.memory_space<vmem>>, vector<1x2x32xf32>
    %190 = vector.shape_cast %189 : vector<1x2x32xf32> to vector<2x32xf32>
    %191 = vector.shape_cast %181 : vector<2x32xf32> to vector<1x2x32xf32>
    tpu.vector_store %arg3[%c3_62, %c0_63, %c64_64], %191 {strides = array<i32>} : memref<8x2x128xf32, #tpu.memory_space<vmem>>, vector<1x2x32xf32>,
    %c4_65 = arith.constant 4 : index
    %c0_66 = arith.constant 0 : index
    %c96_67 = arith.constant 96 : index
    %192 = vector.load %arg3[%c4_65, %c0_66, %c96_67] : memref<8x2x128xf32, #tpu.memory_space<vmem>>, vector<1x2x32xf32>
    %193 = vector.shape_cast %192 : vector<1x2x32xf32> to vector<2x32xf32>
    %194 = vector.shape_cast %182 : vector<2x32xf32> to vector<1x2x32xf32>
    tpu.vector_store %arg3[%c4_65, %c0_66, %c96_67], %194 {strides = array<i32>} : memref<8x2x128xf32, #tpu.memory_space<vmem>>, vector<1x2x32xf32>,
    %195 = vector.extract_strided_slice %8 {offsets = [5, 0, 0], sizes = [1, 2, 192], strides = [1, 1, 1]} : vector<8x2x192xf32> to vector<1x2x192xf32>
    %196 = vector.shape_cast %195 : vector<1x2x192xf32> to vector<2x192xf32>
    %cst_68 = arith.constant dense<0.000000e+00> : vector<2x192xf32>
    %197 = tpu.matmul %180, %3, %cst_68 {dimension_numbers = #tpu.dot_dimension_numbers<[1], [0], [0], [1], [0, 0, 1, 1], [], []>} : vector<2x64xf32>, vector<64x192xf32>, vector<2x192xf32> -> vector<2x192xf32>
    %198 = vector.extract_strided_slice %196 {offsets = [0, 0], sizes = [2, 128], strides = [1, 1]} : vector<2x192xf32> to vector<2x128xf32>
    %199 = vector.extract_strided_slice %197 {offsets = [0, 0], sizes = [2, 128], strides = [1, 1]} : vector<2x192xf32> to vector<2x128xf32>
    %200 = arith.addf %198, %199 : vector<2x128xf32>
    %201 = arith.negf %200 : vector<2x128xf32>
    %202 = math.exp %201 : vector<2x128xf32>
    %cst_69 = arith.constant 1.000000e+00 : f32
    %203 = vector.broadcast %cst_69 : f32 to vector<2x128xf32>
    %204 = arith.addf %203, %202 : vector<2x128xf32>
    %205 = arith.divf %203, %204 : vector<2x128xf32>
    %206 = vector.extract_strided_slice %196 {offsets = [0, 128], sizes = [2, 64], strides = [1, 1]} : vector<2x192xf32> to vector<2x64xf32>
    %207 = vector.extract_strided_slice %205 {offsets = [0, 0], sizes = [2, 64], strides = [1, 1]} : vector<2x128xf32> to vector<2x64xf32>
    %208 = vector.extract_strided_slice %197 {offsets = [0, 128], sizes = [2, 64], strides = [1, 1]} : vector<2x192xf32> to vector<2x64xf32>
    %209 = vector.broadcast %4 : vector<1x64xf32> to vector<2x64xf32>
    %210 = arith.addf %208, %209 : vector<2x64xf32>
    %211 = arith.mulf %207, %210 : vector<2x64xf32>
    %212 = arith.addf %206, %211 : vector<2x64xf32>
    %213 = math.tanh %212 : vector<2x64xf32>
    %214 = vector.extract_strided_slice %205 {offsets = [0, 64], sizes = [2, 64], strides = [1, 1]} : vector<2x128xf32> to vector<2x64xf32>
    %215 = arith.subf %180, %213 : vector<2x64xf32>
    %216 = arith.mulf %214, %215 : vector<2x64xf32>
    %217 = arith.addf %213, %216 : vector<2x64xf32>
    %218 = vector.extract_strided_slice %217 {offsets = [0, 0], sizes = [2, 32], strides = [1, 1]} : vector<2x64xf32> to vector<2x32xf32>
    %219 = vector.extract_strided_slice %217 {offsets = [0, 32], sizes = [2, 32], strides = [1, 1]} : vector<2x64xf32> to vector<2x32xf32>
    %c5_70 = arith.constant 5 : index
    %c0_71 = arith.constant 0 : index
    %c0_72 = arith.constant 0 : index
    %220 = vector.load %arg3[%c5_70, %c0_71, %c0_72] : memref<8x2x128xf32, #tpu.memory_space<vmem>>, vector<1x2x32xf32>
    %221 = vector.shape_cast %220 : vector<1x2x32xf32> to vector<2x32xf32>
    %222 = vector.shape_cast %218 : vector<2x32xf32> to vector<1x2x32xf32>
    tpu.vector_store %arg3[%c5_70, %c0_71, %c0_72], %222 {strides = array<i32>} : memref<8x2x128xf32, #tpu.memory_space<vmem>>, vector<1x2x32xf32>,
    %c2_73 = arith.constant 2 : index
    %c0_74 = arith.constant 0 : index
    %c32_75 = arith.constant 32 : index
    %223 = vector.load %arg3[%c2_73, %c0_74, %c32_75] : memref<8x2x128xf32, #tpu.memory_space<vmem>>, vector<1x2x32xf32>
    %224 = vector.shape_cast %223 : vector<1x2x32xf32> to vector<2x32xf32>
    %225 = vector.shape_cast %219 : vector<2x32xf32> to vector<1x2x32xf32>
    tpu.vector_store %arg3[%c2_73, %c0_74, %c32_75], %225 {strides = array<i32>} : memref<8x2x128xf32, #tpu.memory_space<vmem>>, vector<1x2x32xf32>,
    %c2_76 = arith.constant 2 : index
    %c0_77 = arith.constant 0 : index
    %c64_78 = arith.constant 64 : index
    %226 = vector.load %arg3[%c2_76, %c0_77, %c64_78] : memref<8x2x128xf32, #tpu.memory_space<vmem>>, vector<1x2x32xf32>
    %227 = vector.shape_cast %226 : vector<1x2x32xf32> to vector<2x32xf32>
    %228 = vector.shape_cast %218 : vector<2x32xf32> to vector<1x2x32xf32>
    tpu.vector_store %arg3[%c2_76, %c0_77, %c64_78], %228 {strides = array<i32>} : memref<8x2x128xf32, #tpu.memory_space<vmem>>, vector<1x2x32xf32>,
    %c5_79 = arith.constant 5 : index
    %c0_80 = arith.constant 0 : index
    %c96_81 = arith.constant 96 : index
    %229 = vector.load %arg3[%c5_79, %c0_80, %c96_81] : memref<8x2x128xf32, #tpu.memory_space<vmem>>, vector<1x2x32xf32>
    %230 = vector.shape_cast %229 : vector<1x2x32xf32> to vector<2x32xf32>
    %231 = vector.shape_cast %219 : vector<2x32xf32> to vector<1x2x32xf32>
    tpu.vector_store %arg3[%c5_79, %c0_80, %c96_81], %231 {strides = array<i32>} : memref<8x2x128xf32, #tpu.memory_space<vmem>>, vector<1x2x32xf32>,
    %232 = vector.extract_strided_slice %8 {offsets = [6, 0, 0], sizes = [1, 2, 192], strides = [1, 1, 1]} : vector<8x2x192xf32> to vector<1x2x192xf32>
    %233 = vector.shape_cast %232 : vector<1x2x192xf32> to vector<2x192xf32>
    %cst_82 = arith.constant dense<0.000000e+00> : vector<2x192xf32>
    %234 = tpu.matmul %217, %3, %cst_82 {dimension_numbers = #tpu.dot_dimension_numbers<[1], [0], [0], [1], [0, 0, 1, 1], [], []>} : vector<2x64xf32>, vector<64x192xf32>, vector<2x192xf32> -> vector<2x192xf32>
    %235 = vector.extract_strided_slice %233 {offsets = [0, 0], sizes = [2, 128], strides = [1, 1]} : vector<2x192xf32> to vector<2x128xf32>
    %236 = vector.extract_strided_slice %234 {offsets = [0, 0], sizes = [2, 128], strides = [1, 1]} : vector<2x192xf32> to vector<2x128xf32>
    %237 = arith.addf %235, %236 : vector<2x128xf32>
    %238 = arith.negf %237 : vector<2x128xf32>
    %239 = math.exp %238 : vector<2x128xf32>
    %cst_83 = arith.constant 1.000000e+00 : f32
    %240 = vector.broadcast %cst_83 : f32 to vector<2x128xf32>
    %241 = arith.addf %240, %239 : vector<2x128xf32>
    %242 = arith.divf %240, %241 : vector<2x128xf32>
    %243 = vector.extract_strided_slice %233 {offsets = [0, 128], sizes = [2, 64], strides = [1, 1]} : vector<2x192xf32> to vector<2x64xf32>
    %244 = vector.extract_strided_slice %242 {offsets = [0, 0], sizes = [2, 64], strides = [1, 1]} : vector<2x128xf32> to vector<2x64xf32>
    %245 = vector.extract_strided_slice %234 {offsets = [0, 128], sizes = [2, 64], strides = [1, 1]} : vector<2x192xf32> to vector<2x64xf32>
    %246 = vector.broadcast %4 : vector<1x64xf32> to vector<2x64xf32>
    %247 = arith.addf %245, %246 : vector<2x64xf32>
    %248 = arith.mulf %244, %247 : vector<2x64xf32>
    %249 = arith.addf %243, %248 : vector<2x64xf32>
    %250 = math.tanh %249 : vector<2x64xf32>
    %251 = vector.extract_strided_slice %242 {offsets = [0, 64], sizes = [2, 64], strides = [1, 1]} : vector<2x128xf32> to vector<2x64xf32>
    %252 = arith.subf %217, %250 : vector<2x64xf32>
    %253 = arith.mulf %251, %252 : vector<2x64xf32>
    %254 = arith.addf %250, %253 : vector<2x64xf32>
    %255 = vector.extract_strided_slice %254 {offsets = [0, 0], sizes = [2, 32], strides = [1, 1]} : vector<2x64xf32> to vector<2x32xf32>
    %256 = vector.extract_strided_slice %254 {offsets = [0, 32], sizes = [2, 32], strides = [1, 1]} : vector<2x64xf32> to vector<2x32xf32>
    %c6_84 = arith.constant 6 : index
    %c0_85 = arith.constant 0 : index
    %c0_86 = arith.constant 0 : index
    %257 = vector.load %arg3[%c6_84, %c0_85, %c0_86] : memref<8x2x128xf32, #tpu.memory_space<vmem>>, vector<1x2x32xf32>
    %258 = vector.shape_cast %257 : vector<1x2x32xf32> to vector<2x32xf32>
    %259 = vector.shape_cast %255 : vector<2x32xf32> to vector<1x2x32xf32>
    tpu.vector_store %arg3[%c6_84, %c0_85, %c0_86], %259 {strides = array<i32>} : memref<8x2x128xf32, #tpu.memory_space<vmem>>, vector<1x2x32xf32>,
    %c1_87 = arith.constant 1 : index
    %c0_88 = arith.constant 0 : index
    %c32_89 = arith.constant 32 : index
    %260 = vector.load %arg3[%c1_87, %c0_88, %c32_89] : memref<8x2x128xf32, #tpu.memory_space<vmem>>, vector<1x2x32xf32>
    %261 = vector.shape_cast %260 : vector<1x2x32xf32> to vector<2x32xf32>
    %262 = vector.shape_cast %256 : vector<2x32xf32> to vector<1x2x32xf32>
    tpu.vector_store %arg3[%c1_87, %c0_88, %c32_89], %262 {strides = array<i32>} : memref<8x2x128xf32, #tpu.memory_space<vmem>>, vector<1x2x32xf32>,
    %c1_90 = arith.constant 1 : index
    %c0_91 = arith.constant 0 : index
    %c64_92 = arith.constant 64 : index
    %263 = vector.load %arg3[%c1_90, %c0_91, %c64_92] : memref<8x2x128xf32, #tpu.memory_space<vmem>>, vector<1x2x32xf32>
    %264 = vector.shape_cast %263 : vector<1x2x32xf32> to vector<2x32xf32>
    %265 = vector.shape_cast %255 : vector<2x32xf32> to vector<1x2x32xf32>
    tpu.vector_store %arg3[%c1_90, %c0_91, %c64_92], %265 {strides = array<i32>} : memref<8x2x128xf32, #tpu.memory_space<vmem>>, vector<1x2x32xf32>,
    %c6_93 = arith.constant 6 : index
    %c0_94 = arith.constant 0 : index
    %c96_95 = arith.constant 96 : index
    %266 = vector.load %arg3[%c6_93, %c0_94, %c96_95] : memref<8x2x128xf32, #tpu.memory_space<vmem>>, vector<1x2x32xf32>
    %267 = vector.shape_cast %266 : vector<1x2x32xf32> to vector<2x32xf32>
    %268 = vector.shape_cast %256 : vector<2x32xf32> to vector<1x2x32xf32>
    tpu.vector_store %arg3[%c6_93, %c0_94, %c96_95], %268 {strides = array<i32>} : memref<8x2x128xf32, #tpu.memory_space<vmem>>, vector<1x2x32xf32>,
    %269 = vector.extract_strided_slice %8 {offsets = [7, 0, 0], sizes = [1, 2, 192], strides = [1, 1, 1]} : vector<8x2x192xf32> to vector<1x2x192xf32>
    %270 = vector.shape_cast %269 : vector<1x2x192xf32> to vector<2x192xf32>
    %cst_96 = arith.constant dense<0.000000e+00> : vector<2x192xf32>
    %271 = tpu.matmul %254, %3, %cst_96 {dimension_numbers = #tpu.dot_dimension_numbers<[1], [0], [0], [1], [0, 0, 1, 1], [], []>} : vector<2x64xf32>, vector<64x192xf32>, vector<2x192xf32> -> vector<2x192xf32>
    %272 = vector.extract_strided_slice %270 {offsets = [0, 0], sizes = [2, 128], strides = [1, 1]} : vector<2x192xf32> to vector<2x128xf32>
    %273 = vector.extract_strided_slice %271 {offsets = [0, 0], sizes = [2, 128], strides = [1, 1]} : vector<2x192xf32> to vector<2x128xf32>
    %274 = arith.addf %272, %273 : vector<2x128xf32>
    %275 = arith.negf %274 : vector<2x128xf32>
    %276 = math.exp %275 : vector<2x128xf32>
    %cst_97 = arith.constant 1.000000e+00 : f32
    %277 = vector.broadcast %cst_97 : f32 to vector<2x128xf32>
    %278 = arith.addf %277, %276 : vector<2x128xf32>
    %279 = arith.divf %277, %278 : vector<2x128xf32>
    %280 = vector.extract_strided_slice %270 {offsets = [0, 128], sizes = [2, 64], strides = [1, 1]} : vector<2x192xf32> to vector<2x64xf32>
    %281 = vector.extract_strided_slice %279 {offsets = [0, 0], sizes = [2, 64], strides = [1, 1]} : vector<2x128xf32> to vector<2x64xf32>
    %282 = vector.extract_strided_slice %271 {offsets = [0, 128], sizes = [2, 64], strides = [1, 1]} : vector<2x192xf32> to vector<2x64xf32>
    %283 = vector.broadcast %4 : vector<1x64xf32> to vector<2x64xf32>
    %284 = arith.addf %282, %283 : vector<2x64xf32>
    %285 = arith.mulf %281, %284 : vector<2x64xf32>
    %286 = arith.addf %280, %285 : vector<2x64xf32>
    %287 = math.tanh %286 : vector<2x64xf32>
    %288 = vector.extract_strided_slice %279 {offsets = [0, 64], sizes = [2, 64], strides = [1, 1]} : vector<2x128xf32> to vector<2x64xf32>
    %289 = arith.subf %254, %287 : vector<2x64xf32>
    %290 = arith.mulf %288, %289 : vector<2x64xf32>
    %291 = arith.addf %287, %290 : vector<2x64xf32>
    %292 = vector.extract_strided_slice %291 {offsets = [0, 0], sizes = [2, 32], strides = [1, 1]} : vector<2x64xf32> to vector<2x32xf32>
    %293 = vector.extract_strided_slice %291 {offsets = [0, 32], sizes = [2, 32], strides = [1, 1]} : vector<2x64xf32> to vector<2x32xf32>
    %c7_98 = arith.constant 7 : index
    %c0_99 = arith.constant 0 : index
    %c0_100 = arith.constant 0 : index
    %294 = vector.load %arg3[%c7_98, %c0_99, %c0_100] : memref<8x2x128xf32, #tpu.memory_space<vmem>>, vector<1x2x32xf32>
    %295 = vector.shape_cast %294 : vector<1x2x32xf32> to vector<2x32xf32>
    %296 = vector.shape_cast %292 : vector<2x32xf32> to vector<1x2x32xf32>
    tpu.vector_store %arg3[%c7_98, %c0_99, %c0_100], %296 {strides = array<i32>} : memref<8x2x128xf32, #tpu.memory_space<vmem>>, vector<1x2x32xf32>,
    %c0_101 = arith.constant 0 : index
    %c0_102 = arith.constant 0 : index
    %c32_103 = arith.constant 32 : index
    %297 = vector.load %arg3[%c0_101, %c0_102, %c32_103] : memref<8x2x128xf32, #tpu.memory_space<vmem>>, vector<1x2x32xf32>
    %298 = vector.shape_cast %297 : vector<1x2x32xf32> to vector<2x32xf32>
    %299 = vector.shape_cast %293 : vector<2x32xf32> to vector<1x2x32xf32>
    tpu.vector_store %arg3[%c0_101, %c0_102, %c32_103], %299 {strides = array<i32>} : memref<8x2x128xf32, #tpu.memory_space<vmem>>, vector<1x2x32xf32>,
    %c0_104 = arith.constant 0 : index
    %c0_105 = arith.constant 0 : index
    %c64_106 = arith.constant 64 : index
    %300 = vector.load %arg3[%c0_104, %c0_105, %c64_106] : memref<8x2x128xf32, #tpu.memory_space<vmem>>, vector<1x2x32xf32>
    %301 = vector.shape_cast %300 : vector<1x2x32xf32> to vector<2x32xf32>
    %302 = vector.shape_cast %292 : vector<2x32xf32> to vector<1x2x32xf32>
    tpu.vector_store %arg3[%c0_104, %c0_105, %c64_106], %302 {strides = array<i32>} : memref<8x2x128xf32, #tpu.memory_space<vmem>>, vector<1x2x32xf32>,
    %c7_107 = arith.constant 7 : index
    %c0_108 = arith.constant 0 : index
    %c96_109 = arith.constant 96 : index
    %303 = vector.load %arg3[%c7_107, %c0_108, %c96_109] : memref<8x2x128xf32, #tpu.memory_space<vmem>>, vector<1x2x32xf32>
    %304 = vector.shape_cast %303 : vector<1x2x32xf32> to vector<2x32xf32>
    %305 = vector.shape_cast %293 : vector<2x32xf32> to vector<1x2x32xf32>
    tpu.vector_store %arg3[%c7_107, %c0_108, %c96_109], %305 {strides = array<i32>} : memref<8x2x128xf32, #tpu.memory_space<vmem>>, vector<1x2x32xf32>,
    %c0_110 = arith.constant 0 : index
    %c0_111 = arith.constant 0 : index
    %c0_112 = arith.constant 0 : index
    %306 = vector.load %arg3[%c0_110, %c0_111, %c0_112] : memref<8x2x128xf32, #tpu.memory_space<vmem>>, vector<8x2x128xf32>
    %c256 = arith.constant 256 : index
    %c0_113 = arith.constant 0 : index
    %307 = vector.load %arg1[%c256, %c0_113] : memref<824x192xf32, #tpu.memory_space<vmem>>, vector<128x192xf32>
    %c384 = arith.constant 384 : index
    %c0_114 = arith.constant 0 : index
    %308 = vector.load %arg1[%c384, %c0_114] : memref<824x192xf32, #tpu.memory_space<vmem>>, vector<1x192xf32>
    %c392 = arith.constant 392 : index
    %c0_115 = arith.constant 0 : index
    %309 = vector.load %arg1[%c392, %c0_115] : memref<824x192xf32, #tpu.memory_space<vmem>>, vector<64x192xf32>
    %c456 = arith.constant 456 : index
    %c0_116 = arith.constant 0 : index
    %310 = vector.load %arg1[%c456, %c0_116] : memref<824x192xf32, #tpu.memory_space<vmem>>, vector<1x64xf32>
    %cst_117 = arith.constant dense<0.000000e+00> : vector<8x2x192xf32>
    %311 = tpu.matmul %306, %307, %cst_117 {dimension_numbers = #tpu.dot_dimension_numbers<[2], [0], [0, 1], [1], [0, 0, 0, 1, 1, 1], [], []>} : vector<8x2x128xf32>, vector<128x192xf32>, vector<8x2x192xf32> -> vector<8x2x192xf32>
    %312 = vector.shape_cast %308 : vector<1x192xf32> to vector<1x1x192xf32>
    %313 = vector.broadcast %312 : vector<1x1x192xf32> to vector<8x2x192xf32>
    %314 = arith.addf %311, %313 : vector<8x2x192xf32>
    %cst_118 = arith.constant 0.000000e+00 : f32
    %315 = vector.broadcast %cst_118 : f32 to vector<2x64xf32>
    %316 = vector.extract_strided_slice %314 {offsets = [0, 0, 0], sizes = [1, 2, 192], strides = [1, 1, 1]} : vector<8x2x192xf32> to vector<1x2x192xf32>
    %317 = vector.shape_cast %316 : vector<1x2x192xf32> to vector<2x192xf32>
    %cst_119 = arith.constant dense<0.000000e+00> : vector<2x192xf32>
    %318 = tpu.matmul %315, %309, %cst_119 {dimension_numbers = #tpu.dot_dimension_numbers<[1], [0], [0], [1], [0, 0, 1, 1], [], []>} : vector<2x64xf32>, vector<64x192xf32>, vector<2x192xf32> -> vector<2x192xf32>
    %319 = vector.extract_strided_slice %317 {offsets = [0, 0], sizes = [2, 128], strides = [1, 1]} : vector<2x192xf32> to vector<2x128xf32>
    %320 = vector.extract_strided_slice %318 {offsets = [0, 0], sizes = [2, 128], strides = [1, 1]} : vector<2x192xf32> to vector<2x128xf32>
    %321 = arith.addf %319, %320 : vector<2x128xf32>
    %322 = arith.negf %321 : vector<2x128xf32>
    %323 = math.exp %322 : vector<2x128xf32>
    %cst_120 = arith.constant 1.000000e+00 : f32
    %324 = vector.broadcast %cst_120 : f32 to vector<2x128xf32>
    %325 = arith.addf %324, %323 : vector<2x128xf32>
    %326 = arith.divf %324, %325 : vector<2x128xf32>
    %327 = vector.extract_strided_slice %317 {offsets = [0, 128], sizes = [2, 64], strides = [1, 1]} : vector<2x192xf32> to vector<2x64xf32>
    %328 = vector.extract_strided_slice %326 {offsets = [0, 0], sizes = [2, 64], strides = [1, 1]} : vector<2x128xf32> to vector<2x64xf32>
    %329 = vector.extract_strided_slice %318 {offsets = [0, 128], sizes = [2, 64], strides = [1, 1]} : vector<2x192xf32> to vector<2x64xf32>
    %330 = vector.broadcast %310 : vector<1x64xf32> to vector<2x64xf32>
    %331 = arith.addf %329, %330 : vector<2x64xf32>
    %332 = arith.mulf %328, %331 : vector<2x64xf32>
    %333 = arith.addf %327, %332 : vector<2x64xf32>
    %334 = math.tanh %333 : vector<2x64xf32>
    %335 = vector.extract_strided_slice %326 {offsets = [0, 64], sizes = [2, 64], strides = [1, 1]} : vector<2x128xf32> to vector<2x64xf32>
    %336 = arith.subf %315, %334 : vector<2x64xf32>
    %337 = arith.mulf %335, %336 : vector<2x64xf32>
    %338 = arith.addf %334, %337 : vector<2x64xf32>
    %339 = vector.extract_strided_slice %338 {offsets = [0, 0], sizes = [2, 32], strides = [1, 1]} : vector<2x64xf32> to vector<2x32xf32>
    %340 = vector.extract_strided_slice %338 {offsets = [0, 32], sizes = [2, 32], strides = [1, 1]} : vector<2x64xf32> to vector<2x32xf32>
    %c0_121 = arith.constant 0 : index
    %c0_122 = arith.constant 0 : index
    %c0_123 = arith.constant 0 : index
    %341 = vector.load %arg4[%c0_121, %c0_122, %c0_123] : memref<8x2x128xf32, #tpu.memory_space<vmem>>, vector<1x2x32xf32>
    %342 = vector.shape_cast %341 : vector<1x2x32xf32> to vector<2x32xf32>
    %343 = vector.shape_cast %339 : vector<2x32xf32> to vector<1x2x32xf32>
    tpu.vector_store %arg4[%c0_121, %c0_122, %c0_123], %343 {strides = array<i32>} : memref<8x2x128xf32, #tpu.memory_space<vmem>>, vector<1x2x32xf32>,
    %c7_124 = arith.constant 7 : index
    %c0_125 = arith.constant 0 : index
    %c32_126 = arith.constant 32 : index
    %344 = vector.load %arg4[%c7_124, %c0_125, %c32_126] : memref<8x2x128xf32, #tpu.memory_space<vmem>>, vector<1x2x32xf32>
    %345 = vector.shape_cast %344 : vector<1x2x32xf32> to vector<2x32xf32>
    %346 = vector.shape_cast %340 : vector<2x32xf32> to vector<1x2x32xf32>
    tpu.vector_store %arg4[%c7_124, %c0_125, %c32_126], %346 {strides = array<i32>} : memref<8x2x128xf32, #tpu.memory_space<vmem>>, vector<1x2x32xf32>,
    %c7_127 = arith.constant 7 : index
    %c0_128 = arith.constant 0 : index
    %c64_129 = arith.constant 64 : index
    %347 = vector.load %arg4[%c7_127, %c0_128, %c64_129] : memref<8x2x128xf32, #tpu.memory_space<vmem>>, vector<1x2x32xf32>
    %348 = vector.shape_cast %347 : vector<1x2x32xf32> to vector<2x32xf32>
    %349 = vector.shape_cast %339 : vector<2x32xf32> to vector<1x2x32xf32>
    tpu.vector_store %arg4[%c7_127, %c0_128, %c64_129], %349 {strides = array<i32>} : memref<8x2x128xf32, #tpu.memory_space<vmem>>, vector<1x2x32xf32>,
    %c0_130 = arith.constant 0 : index
    %c0_131 = arith.constant 0 : index
    %c96_132 = arith.constant 96 : index
    %350 = vector.load %arg4[%c0_130, %c0_131, %c96_132] : memref<8x2x128xf32, #tpu.memory_space<vmem>>, vector<1x2x32xf32>
    %351 = vector.shape_cast %350 : vector<1x2x32xf32> to vector<2x32xf32>
    %352 = vector.shape_cast %340 : vector<2x32xf32> to vector<1x2x32xf32>
    tpu.vector_store %arg4[%c0_130, %c0_131, %c96_132], %352 {strides = array<i32>} : memref<8x2x128xf32, #tpu.memory_space<vmem>>, vector<1x2x32xf32>,
    %353 = vector.extract_strided_slice %314 {offsets = [1, 0, 0], sizes = [1, 2, 192], strides = [1, 1, 1]} : vector<8x2x192xf32> to vector<1x2x192xf32>
    %354 = vector.shape_cast %353 : vector<1x2x192xf32> to vector<2x192xf32>
    %cst_133 = arith.constant dense<0.000000e+00> : vector<2x192xf32>
    %355 = tpu.matmul %338, %309, %cst_133 {dimension_numbers = #tpu.dot_dimension_numbers<[1], [0], [0], [1], [0, 0, 1, 1], [], []>} : vector<2x64xf32>, vector<64x192xf32>, vector<2x192xf32> -> vector<2x192xf32>
    %356 = vector.extract_strided_slice %354 {offsets = [0, 0], sizes = [2, 128], strides = [1, 1]} : vector<2x192xf32> to vector<2x128xf32>
    %357 = vector.extract_strided_slice %355 {offsets = [0, 0], sizes = [2, 128], strides = [1, 1]} : vector<2x192xf32> to vector<2x128xf32>
    %358 = arith.addf %356, %357 : vector<2x128xf32>
    %359 = arith.negf %358 : vector<2x128xf32>
    %360 = math.exp %359 : vector<2x128xf32>
    %cst_134 = arith.constant 1.000000e+00 : f32
    %361 = vector.broadcast %cst_134 : f32 to vector<2x128xf32>
    %362 = arith.addf %361, %360 : vector<2x128xf32>
    %363 = arith.divf %361, %362 : vector<2x128xf32>
    %364 = vector.extract_strided_slice %354 {offsets = [0, 128], sizes = [2, 64], strides = [1, 1]} : vector<2x192xf32> to vector<2x64xf32>
    %365 = vector.extract_strided_slice %363 {offsets = [0, 0], sizes = [2, 64], strides = [1, 1]} : vector<2x128xf32> to vector<2x64xf32>
    %366 = vector.extract_strided_slice %355 {offsets = [0, 128], sizes = [2, 64], strides = [1, 1]} : vector<2x192xf32> to vector<2x64xf32>
    %367 = vector.broadcast %310 : vector<1x64xf32> to vector<2x64xf32>
    %368 = arith.addf %366, %367 : vector<2x64xf32>
    %369 = arith.mulf %365, %368 : vector<2x64xf32>
    %370 = arith.addf %364, %369 : vector<2x64xf32>
    %371 = math.tanh %370 : vector<2x64xf32>
    %372 = vector.extract_strided_slice %363 {offsets = [0, 64], sizes = [2, 64], strides = [1, 1]} : vector<2x128xf32> to vector<2x64xf32>
    %373 = arith.subf %338, %371 : vector<2x64xf32>
    %374 = arith.mulf %372, %373 : vector<2x64xf32>
    %375 = arith.addf %371, %374 : vector<2x64xf32>
    %376 = vector.extract_strided_slice %375 {offsets = [0, 0], sizes = [2, 32], strides = [1, 1]} : vector<2x64xf32> to vector<2x32xf32>
    %377 = vector.extract_strided_slice %375 {offsets = [0, 32], sizes = [2, 32], strides = [1, 1]} : vector<2x64xf32> to vector<2x32xf32>
    %c1_135 = arith.constant 1 : index
    %c0_136 = arith.constant 0 : index
    %c0_137 = arith.constant 0 : index
    %378 = vector.load %arg4[%c1_135, %c0_136, %c0_137] : memref<8x2x128xf32, #tpu.memory_space<vmem>>, vector<1x2x32xf32>
    %379 = vector.shape_cast %378 : vector<1x2x32xf32> to vector<2x32xf32>
    %380 = vector.shape_cast %376 : vector<2x32xf32> to vector<1x2x32xf32>
    tpu.vector_store %arg4[%c1_135, %c0_136, %c0_137], %380 {strides = array<i32>} : memref<8x2x128xf32, #tpu.memory_space<vmem>>, vector<1x2x32xf32>,
    %c6_138 = arith.constant 6 : index
    %c0_139 = arith.constant 0 : index
    %c32_140 = arith.constant 32 : index
    %381 = vector.load %arg4[%c6_138, %c0_139, %c32_140] : memref<8x2x128xf32, #tpu.memory_space<vmem>>, vector<1x2x32xf32>
    %382 = vector.shape_cast %381 : vector<1x2x32xf32> to vector<2x32xf32>
    %383 = vector.shape_cast %377 : vector<2x32xf32> to vector<1x2x32xf32>
    tpu.vector_store %arg4[%c6_138, %c0_139, %c32_140], %383 {strides = array<i32>} : memref<8x2x128xf32, #tpu.memory_space<vmem>>, vector<1x2x32xf32>,
    %c6_141 = arith.constant 6 : index
    %c0_142 = arith.constant 0 : index
    %c64_143 = arith.constant 64 : index
    %384 = vector.load %arg4[%c6_141, %c0_142, %c64_143] : memref<8x2x128xf32, #tpu.memory_space<vmem>>, vector<1x2x32xf32>
    %385 = vector.shape_cast %384 : vector<1x2x32xf32> to vector<2x32xf32>
    %386 = vector.shape_cast %376 : vector<2x32xf32> to vector<1x2x32xf32>
    tpu.vector_store %arg4[%c6_141, %c0_142, %c64_143], %386 {strides = array<i32>} : memref<8x2x128xf32, #tpu.memory_space<vmem>>, vector<1x2x32xf32>,
    %c1_144 = arith.constant 1 : index
    %c0_145 = arith.constant 0 : index
    %c96_146 = arith.constant 96 : index
    %387 = vector.load %arg4[%c1_144, %c0_145, %c96_146] : memref<8x2x128xf32, #tpu.memory_space<vmem>>, vector<1x2x32xf32>
    %388 = vector.shape_cast %387 : vector<1x2x32xf32> to vector<2x32xf32>
    %389 = vector.shape_cast %377 : vector<2x32xf32> to vector<1x2x32xf32>
    tpu.vector_store %arg4[%c1_144, %c0_145, %c96_146], %389 {strides = array<i32>} : memref<8x2x128xf32, #tpu.memory_space<vmem>>, vector<1x2x32xf32>,
    %390 = vector.extract_strided_slice %314 {offsets = [2, 0, 0], sizes = [1, 2, 192], strides = [1, 1, 1]} : vector<8x2x192xf32> to vector<1x2x192xf32>
    %391 = vector.shape_cast %390 : vector<1x2x192xf32> to vector<2x192xf32>
    %cst_147 = arith.constant dense<0.000000e+00> : vector<2x192xf32>
    %392 = tpu.matmul %375, %309, %cst_147 {dimension_numbers = #tpu.dot_dimension_numbers<[1], [0], [0], [1], [0, 0, 1, 1], [], []>} : vector<2x64xf32>, vector<64x192xf32>, vector<2x192xf32> -> vector<2x192xf32>
    %393 = vector.extract_strided_slice %391 {offsets = [0, 0], sizes = [2, 128], strides = [1, 1]} : vector<2x192xf32> to vector<2x128xf32>
    %394 = vector.extract_strided_slice %392 {offsets = [0, 0], sizes = [2, 128], strides = [1, 1]} : vector<2x192xf32> to vector<2x128xf32>
    %395 = arith.addf %393, %394 : vector<2x128xf32>
    %396 = arith.negf %395 : vector<2x128xf32>
    %397 = math.exp %396 : vector<2x128xf32>
    %cst_148 = arith.constant 1.000000e+00 : f32
    %398 = vector.broadcast %cst_148 : f32 to vector<2x128xf32>
    %399 = arith.addf %398, %397 : vector<2x128xf32>
    %400 = arith.divf %398, %399 : vector<2x128xf32>
    %401 = vector.extract_strided_slice %391 {offsets = [0, 128], sizes = [2, 64], strides = [1, 1]} : vector<2x192xf32> to vector<2x64xf32>
    %402 = vector.extract_strided_slice %400 {offsets = [0, 0], sizes = [2, 64], strides = [1, 1]} : vector<2x128xf32> to vector<2x64xf32>
    %403 = vector.extract_strided_slice %392 {offsets = [0, 128], sizes = [2, 64], strides = [1, 1]} : vector<2x192xf32> to vector<2x64xf32>
    %404 = vector.broadcast %310 : vector<1x64xf32> to vector<2x64xf32>
    %405 = arith.addf %403, %404 : vector<2x64xf32>
    %406 = arith.mulf %402, %405 : vector<2x64xf32>
    %407 = arith.addf %401, %406 : vector<2x64xf32>
    %408 = math.tanh %407 : vector<2x64xf32>
    %409 = vector.extract_strided_slice %400 {offsets = [0, 64], sizes = [2, 64], strides = [1, 1]} : vector<2x128xf32> to vector<2x64xf32>
    %410 = arith.subf %375, %408 : vector<2x64xf32>
    %411 = arith.mulf %409, %410 : vector<2x64xf32>
    %412 = arith.addf %408, %411 : vector<2x64xf32>
    %413 = vector.extract_strided_slice %412 {offsets = [0, 0], sizes = [2, 32], strides = [1, 1]} : vector<2x64xf32> to vector<2x32xf32>
    %414 = vector.extract_strided_slice %412 {offsets = [0, 32], sizes = [2, 32], strides = [1, 1]} : vector<2x64xf32> to vector<2x32xf32>
    %c2_149 = arith.constant 2 : index
    %c0_150 = arith.constant 0 : index
    %c0_151 = arith.constant 0 : index
    %415 = vector.load %arg4[%c2_149, %c0_150, %c0_151] : memref<8x2x128xf32, #tpu.memory_space<vmem>>, vector<1x2x32xf32>
    %416 = vector.shape_cast %415 : vector<1x2x32xf32> to vector<2x32xf32>
    %417 = vector.shape_cast %413 : vector<2x32xf32> to vector<1x2x32xf32>
    tpu.vector_store %arg4[%c2_149, %c0_150, %c0_151], %417 {strides = array<i32>} : memref<8x2x128xf32, #tpu.memory_space<vmem>>, vector<1x2x32xf32>,
    %c5_152 = arith.constant 5 : index
    %c0_153 = arith.constant 0 : index
    %c32_154 = arith.constant 32 : index
    %418 = vector.load %arg4[%c5_152, %c0_153, %c32_154] : memref<8x2x128xf32, #tpu.memory_space<vmem>>, vector<1x2x32xf32>
    %419 = vector.shape_cast %418 : vector<1x2x32xf32> to vector<2x32xf32>
    %420 = vector.shape_cast %414 : vector<2x32xf32> to vector<1x2x32xf32>
    tpu.vector_store %arg4[%c5_152, %c0_153, %c32_154], %420 {strides = array<i32>} : memref<8x2x128xf32, #tpu.memory_space<vmem>>, vector<1x2x32xf32>,
    %c5_155 = arith.constant 5 : index
    %c0_156 = arith.constant 0 : index
    %c64_157 = arith.constant 64 : index
    %421 = vector.load %arg4[%c5_155, %c0_156, %c64_157] : memref<8x2x128xf32, #tpu.memory_space<vmem>>, vector<1x2x32xf32>
    %422 = vector.shape_cast %421 : vector<1x2x32xf32> to vector<2x32xf32>
    %423 = vector.shape_cast %413 : vector<2x32xf32> to vector<1x2x32xf32>
    tpu.vector_store %arg4[%c5_155, %c0_156, %c64_157], %423 {strides = array<i32>} : memref<8x2x128xf32, #tpu.memory_space<vmem>>, vector<1x2x32xf32>,
    %c2_158 = arith.constant 2 : index
    %c0_159 = arith.constant 0 : index
    %c96_160 = arith.constant 96 : index
    %424 = vector.load %arg4[%c2_158, %c0_159, %c96_160] : memref<8x2x128xf32, #tpu.memory_space<vmem>>, vector<1x2x32xf32>
    %425 = vector.shape_cast %424 : vector<1x2x32xf32> to vector<2x32xf32>
    %426 = vector.shape_cast %414 : vector<2x32xf32> to vector<1x2x32xf32>
    tpu.vector_store %arg4[%c2_158, %c0_159, %c96_160], %426 {strides = array<i32>} : memref<8x2x128xf32, #tpu.memory_space<vmem>>, vector<1x2x32xf32>,
    %427 = vector.extract_strided_slice %314 {offsets = [3, 0, 0], sizes = [1, 2, 192], strides = [1, 1, 1]} : vector<8x2x192xf32> to vector<1x2x192xf32>
    %428 = vector.shape_cast %427 : vector<1x2x192xf32> to vector<2x192xf32>
    %cst_161 = arith.constant dense<0.000000e+00> : vector<2x192xf32>
    %429 = tpu.matmul %412, %309, %cst_161 {dimension_numbers = #tpu.dot_dimension_numbers<[1], [0], [0], [1], [0, 0, 1, 1], [], []>} : vector<2x64xf32>, vector<64x192xf32>, vector<2x192xf32> -> vector<2x192xf32>
    %430 = vector.extract_strided_slice %428 {offsets = [0, 0], sizes = [2, 128], strides = [1, 1]} : vector<2x192xf32> to vector<2x128xf32>
    %431 = vector.extract_strided_slice %429 {offsets = [0, 0], sizes = [2, 128], strides = [1, 1]} : vector<2x192xf32> to vector<2x128xf32>
    %432 = arith.addf %430, %431 : vector<2x128xf32>
    %433 = arith.negf %432 : vector<2x128xf32>
    %434 = math.exp %433 : vector<2x128xf32>
    %cst_162 = arith.constant 1.000000e+00 : f32
    %435 = vector.broadcast %cst_162 : f32 to vector<2x128xf32>
    %436 = arith.addf %435, %434 : vector<2x128xf32>
    %437 = arith.divf %435, %436 : vector<2x128xf32>
    %438 = vector.extract_strided_slice %428 {offsets = [0, 128], sizes = [2, 64], strides = [1, 1]} : vector<2x192xf32> to vector<2x64xf32>
    %439 = vector.extract_strided_slice %437 {offsets = [0, 0], sizes = [2, 64], strides = [1, 1]} : vector<2x128xf32> to vector<2x64xf32>
    %440 = vector.extract_strided_slice %429 {offsets = [0, 128], sizes = [2, 64], strides = [1, 1]} : vector<2x192xf32> to vector<2x64xf32>
    %441 = vector.broadcast %310 : vector<1x64xf32> to vector<2x64xf32>
    %442 = arith.addf %440, %441 : vector<2x64xf32>
    %443 = arith.mulf %439, %442 : vector<2x64xf32>
    %444 = arith.addf %438, %443 : vector<2x64xf32>
    %445 = math.tanh %444 : vector<2x64xf32>
    %446 = vector.extract_strided_slice %437 {offsets = [0, 64], sizes = [2, 64], strides = [1, 1]} : vector<2x128xf32> to vector<2x64xf32>
    %447 = arith.subf %412, %445 : vector<2x64xf32>
    %448 = arith.mulf %446, %447 : vector<2x64xf32>
    %449 = arith.addf %445, %448 : vector<2x64xf32>
    %450 = vector.extract_strided_slice %449 {offsets = [0, 0], sizes = [2, 32], strides = [1, 1]} : vector<2x64xf32> to vector<2x32xf32>
    %451 = vector.extract_strided_slice %449 {offsets = [0, 32], sizes = [2, 32], strides = [1, 1]} : vector<2x64xf32> to vector<2x32xf32>
    %c3_163 = arith.constant 3 : index
    %c0_164 = arith.constant 0 : index
    %c0_165 = arith.constant 0 : index
    %452 = vector.load %arg4[%c3_163, %c0_164, %c0_165] : memref<8x2x128xf32, #tpu.memory_space<vmem>>, vector<1x2x32xf32>
    %453 = vector.shape_cast %452 : vector<1x2x32xf32> to vector<2x32xf32>
    %454 = vector.shape_cast %450 : vector<2x32xf32> to vector<1x2x32xf32>
    tpu.vector_store %arg4[%c3_163, %c0_164, %c0_165], %454 {strides = array<i32>} : memref<8x2x128xf32, #tpu.memory_space<vmem>>, vector<1x2x32xf32>,
    %c4_166 = arith.constant 4 : index
    %c0_167 = arith.constant 0 : index
    %c32_168 = arith.constant 32 : index
    %455 = vector.load %arg4[%c4_166, %c0_167, %c32_168] : memref<8x2x128xf32, #tpu.memory_space<vmem>>, vector<1x2x32xf32>
    %456 = vector.shape_cast %455 : vector<1x2x32xf32> to vector<2x32xf32>
    %457 = vector.shape_cast %451 : vector<2x32xf32> to vector<1x2x32xf32>
    tpu.vector_store %arg4[%c4_166, %c0_167, %c32_168], %457 {strides = array<i32>} : memref<8x2x128xf32, #tpu.memory_space<vmem>>, vector<1x2x32xf32>,
    %c4_169 = arith.constant 4 : index
    %c0_170 = arith.constant 0 : index
    %c64_171 = arith.constant 64 : index
    %458 = vector.load %arg4[%c4_169, %c0_170, %c64_171] : memref<8x2x128xf32, #tpu.memory_space<vmem>>, vector<1x2x32xf32>
    %459 = vector.shape_cast %458 : vector<1x2x32xf32> to vector<2x32xf32>
    %460 = vector.shape_cast %450 : vector<2x32xf32> to vector<1x2x32xf32>
    tpu.vector_store %arg4[%c4_169, %c0_170, %c64_171], %460 {strides = array<i32>} : memref<8x2x128xf32, #tpu.memory_space<vmem>>, vector<1x2x32xf32>,
    %c3_172 = arith.constant 3 : index
    %c0_173 = arith.constant 0 : index
    %c96_174 = arith.constant 96 : index
    %461 = vector.load %arg4[%c3_172, %c0_173, %c96_174] : memref<8x2x128xf32, #tpu.memory_space<vmem>>, vector<1x2x32xf32>
    %462 = vector.shape_cast %461 : vector<1x2x32xf32> to vector<2x32xf32>
    %463 = vector.shape_cast %451 : vector<2x32xf32> to vector<1x2x32xf32>
    tpu.vector_store %arg4[%c3_172, %c0_173, %c96_174], %463 {strides = array<i32>} : memref<8x2x128xf32, #tpu.memory_space<vmem>>, vector<1x2x32xf32>,
    %464 = vector.extract_strided_slice %314 {offsets = [4, 0, 0], sizes = [1, 2, 192], strides = [1, 1, 1]} : vector<8x2x192xf32> to vector<1x2x192xf32>
    %465 = vector.shape_cast %464 : vector<1x2x192xf32> to vector<2x192xf32>
    %cst_175 = arith.constant dense<0.000000e+00> : vector<2x192xf32>
    %466 = tpu.matmul %449, %309, %cst_175 {dimension_numbers = #tpu.dot_dimension_numbers<[1], [0], [0], [1], [0, 0, 1, 1], [], []>} : vector<2x64xf32>, vector<64x192xf32>, vector<2x192xf32> -> vector<2x192xf32>
    %467 = vector.extract_strided_slice %465 {offsets = [0, 0], sizes = [2, 128], strides = [1, 1]} : vector<2x192xf32> to vector<2x128xf32>
    %468 = vector.extract_strided_slice %466 {offsets = [0, 0], sizes = [2, 128], strides = [1, 1]} : vector<2x192xf32> to vector<2x128xf32>
    %469 = arith.addf %467, %468 : vector<2x128xf32>
    %470 = arith.negf %469 : vector<2x128xf32>
    %471 = math.exp %470 : vector<2x128xf32>
    %cst_176 = arith.constant 1.000000e+00 : f32
    %472 = vector.broadcast %cst_176 : f32 to vector<2x128xf32>
    %473 = arith.addf %472, %471 : vector<2x128xf32>
    %474 = arith.divf %472, %473 : vector<2x128xf32>
    %475 = vector.extract_strided_slice %465 {offsets = [0, 128], sizes = [2, 64], strides = [1, 1]} : vector<2x192xf32> to vector<2x64xf32>
    %476 = vector.extract_strided_slice %474 {offsets = [0, 0], sizes = [2, 64], strides = [1, 1]} : vector<2x128xf32> to vector<2x64xf32>
    %477 = vector.extract_strided_slice %466 {offsets = [0, 128], sizes = [2, 64], strides = [1, 1]} : vector<2x192xf32> to vector<2x64xf32>
    %478 = vector.broadcast %310 : vector<1x64xf32> to vector<2x64xf32>
    %479 = arith.addf %477, %478 : vector<2x64xf32>
    %480 = arith.mulf %476, %479 : vector<2x64xf32>
    %481 = arith.addf %475, %480 : vector<2x64xf32>
    %482 = math.tanh %481 : vector<2x64xf32>
    %483 = vector.extract_strided_slice %474 {offsets = [0, 64], sizes = [2, 64], strides = [1, 1]} : vector<2x128xf32> to vector<2x64xf32>
    %484 = arith.subf %449, %482 : vector<2x64xf32>
    %485 = arith.mulf %483, %484 : vector<2x64xf32>
    %486 = arith.addf %482, %485 : vector<2x64xf32>
    %487 = vector.extract_strided_slice %486 {offsets = [0, 0], sizes = [2, 32], strides = [1, 1]} : vector<2x64xf32> to vector<2x32xf32>
    %488 = vector.extract_strided_slice %486 {offsets = [0, 32], sizes = [2, 32], strides = [1, 1]} : vector<2x64xf32> to vector<2x32xf32>
    %c4_177 = arith.constant 4 : index
    %c0_178 = arith.constant 0 : index
    %c0_179 = arith.constant 0 : index
    %489 = vector.load %arg4[%c4_177, %c0_178, %c0_179] : memref<8x2x128xf32, #tpu.memory_space<vmem>>, vector<1x2x32xf32>
    %490 = vector.shape_cast %489 : vector<1x2x32xf32> to vector<2x32xf32>
    %491 = vector.shape_cast %487 : vector<2x32xf32> to vector<1x2x32xf32>
    tpu.vector_store %arg4[%c4_177, %c0_178, %c0_179], %491 {strides = array<i32>} : memref<8x2x128xf32, #tpu.memory_space<vmem>>, vector<1x2x32xf32>,
    %c3_180 = arith.constant 3 : index
    %c0_181 = arith.constant 0 : index
    %c32_182 = arith.constant 32 : index
    %492 = vector.load %arg4[%c3_180, %c0_181, %c32_182] : memref<8x2x128xf32, #tpu.memory_space<vmem>>, vector<1x2x32xf32>
    %493 = vector.shape_cast %492 : vector<1x2x32xf32> to vector<2x32xf32>
    %494 = vector.shape_cast %488 : vector<2x32xf32> to vector<1x2x32xf32>
    tpu.vector_store %arg4[%c3_180, %c0_181, %c32_182], %494 {strides = array<i32>} : memref<8x2x128xf32, #tpu.memory_space<vmem>>, vector<1x2x32xf32>,
    %c3_183 = arith.constant 3 : index
    %c0_184 = arith.constant 0 : index
    %c64_185 = arith.constant 64 : index
    %495 = vector.load %arg4[%c3_183, %c0_184, %c64_185] : memref<8x2x128xf32, #tpu.memory_space<vmem>>, vector<1x2x32xf32>
    %496 = vector.shape_cast %495 : vector<1x2x32xf32> to vector<2x32xf32>
    %497 = vector.shape_cast %487 : vector<2x32xf32> to vector<1x2x32xf32>
    tpu.vector_store %arg4[%c3_183, %c0_184, %c64_185], %497 {strides = array<i32>} : memref<8x2x128xf32, #tpu.memory_space<vmem>>, vector<1x2x32xf32>,
    %c4_186 = arith.constant 4 : index
    %c0_187 = arith.constant 0 : index
    %c96_188 = arith.constant 96 : index
    %498 = vector.load %arg4[%c4_186, %c0_187, %c96_188] : memref<8x2x128xf32, #tpu.memory_space<vmem>>, vector<1x2x32xf32>
    %499 = vector.shape_cast %498 : vector<1x2x32xf32> to vector<2x32xf32>
    %500 = vector.shape_cast %488 : vector<2x32xf32> to vector<1x2x32xf32>
    tpu.vector_store %arg4[%c4_186, %c0_187, %c96_188], %500 {strides = array<i32>} : memref<8x2x128xf32, #tpu.memory_space<vmem>>, vector<1x2x32xf32>,
    %501 = vector.extract_strided_slice %314 {offsets = [5, 0, 0], sizes = [1, 2, 192], strides = [1, 1, 1]} : vector<8x2x192xf32> to vector<1x2x192xf32>
    %502 = vector.shape_cast %501 : vector<1x2x192xf32> to vector<2x192xf32>
    %cst_189 = arith.constant dense<0.000000e+00> : vector<2x192xf32>
    %503 = tpu.matmul %486, %309, %cst_189 {dimension_numbers = #tpu.dot_dimension_numbers<[1], [0], [0], [1], [0, 0, 1, 1], [], []>} : vector<2x64xf32>, vector<64x192xf32>, vector<2x192xf32> -> vector<2x192xf32>
    %504 = vector.extract_strided_slice %502 {offsets = [0, 0], sizes = [2, 128], strides = [1, 1]} : vector<2x192xf32> to vector<2x128xf32>
    %505 = vector.extract_strided_slice %503 {offsets = [0, 0], sizes = [2, 128], strides = [1, 1]} : vector<2x192xf32> to vector<2x128xf32>
    %506 = arith.addf %504, %505 : vector<2x128xf32>
    %507 = arith.negf %506 : vector<2x128xf32>
    %508 = math.exp %507 : vector<2x128xf32>
    %cst_190 = arith.constant 1.000000e+00 : f32
    %509 = vector.broadcast %cst_190 : f32 to vector<2x128xf32>
    %510 = arith.addf %509, %508 : vector<2x128xf32>
    %511 = arith.divf %509, %510 : vector<2x128xf32>
    %512 = vector.extract_strided_slice %502 {offsets = [0, 128], sizes = [2, 64], strides = [1, 1]} : vector<2x192xf32> to vector<2x64xf32>
    %513 = vector.extract_strided_slice %511 {offsets = [0, 0], sizes = [2, 64], strides = [1, 1]} : vector<2x128xf32> to vector<2x64xf32>
    %514 = vector.extract_strided_slice %503 {offsets = [0, 128], sizes = [2, 64], strides = [1, 1]} : vector<2x192xf32> to vector<2x64xf32>
    %515 = vector.broadcast %310 : vector<1x64xf32> to vector<2x64xf32>
    %516 = arith.addf %514, %515 : vector<2x64xf32>
    %517 = arith.mulf %513, %516 : vector<2x64xf32>
    %518 = arith.addf %512, %517 : vector<2x64xf32>
    %519 = math.tanh %518 : vector<2x64xf32>
    %520 = vector.extract_strided_slice %511 {offsets = [0, 64], sizes = [2, 64], strides = [1, 1]} : vector<2x128xf32> to vector<2x64xf32>
    %521 = arith.subf %486, %519 : vector<2x64xf32>
    %522 = arith.mulf %520, %521 : vector<2x64xf32>
    %523 = arith.addf %519, %522 : vector<2x64xf32>
    %524 = vector.extract_strided_slice %523 {offsets = [0, 0], sizes = [2, 32], strides = [1, 1]} : vector<2x64xf32> to vector<2x32xf32>
    %525 = vector.extract_strided_slice %523 {offsets = [0, 32], sizes = [2, 32], strides = [1, 1]} : vector<2x64xf32> to vector<2x32xf32>
    %c5_191 = arith.constant 5 : index
    %c0_192 = arith.constant 0 : index
    %c0_193 = arith.constant 0 : index
    %526 = vector.load %arg4[%c5_191, %c0_192, %c0_193] : memref<8x2x128xf32, #tpu.memory_space<vmem>>, vector<1x2x32xf32>
    %527 = vector.shape_cast %526 : vector<1x2x32xf32> to vector<2x32xf32>
    %528 = vector.shape_cast %524 : vector<2x32xf32> to vector<1x2x32xf32>
    tpu.vector_store %arg4[%c5_191, %c0_192, %c0_193], %528 {strides = array<i32>} : memref<8x2x128xf32, #tpu.memory_space<vmem>>, vector<1x2x32xf32>,
    %c2_194 = arith.constant 2 : index
    %c0_195 = arith.constant 0 : index
    %c32_196 = arith.constant 32 : index
    %529 = vector.load %arg4[%c2_194, %c0_195, %c32_196] : memref<8x2x128xf32, #tpu.memory_space<vmem>>, vector<1x2x32xf32>
    %530 = vector.shape_cast %529 : vector<1x2x32xf32> to vector<2x32xf32>
    %531 = vector.shape_cast %525 : vector<2x32xf32> to vector<1x2x32xf32>
    tpu.vector_store %arg4[%c2_194, %c0_195, %c32_196], %531 {strides = array<i32>} : memref<8x2x128xf32, #tpu.memory_space<vmem>>, vector<1x2x32xf32>,
    %c2_197 = arith.constant 2 : index
    %c0_198 = arith.constant 0 : index
    %c64_199 = arith.constant 64 : index
    %532 = vector.load %arg4[%c2_197, %c0_198, %c64_199] : memref<8x2x128xf32, #tpu.memory_space<vmem>>, vector<1x2x32xf32>
    %533 = vector.shape_cast %532 : vector<1x2x32xf32> to vector<2x32xf32>
    %534 = vector.shape_cast %524 : vector<2x32xf32> to vector<1x2x32xf32>
    tpu.vector_store %arg4[%c2_197, %c0_198, %c64_199], %534 {strides = array<i32>} : memref<8x2x128xf32, #tpu.memory_space<vmem>>, vector<1x2x32xf32>,
    %c5_200 = arith.constant 5 : index
    %c0_201 = arith.constant 0 : index
    %c96_202 = arith.constant 96 : index
    %535 = vector.load %arg4[%c5_200, %c0_201, %c96_202] : memref<8x2x128xf32, #tpu.memory_space<vmem>>, vector<1x2x32xf32>
    %536 = vector.shape_cast %535 : vector<1x2x32xf32> to vector<2x32xf32>
    %537 = vector.shape_cast %525 : vector<2x32xf32> to vector<1x2x32xf32>
    tpu.vector_store %arg4[%c5_200, %c0_201, %c96_202], %537 {strides = array<i32>} : memref<8x2x128xf32, #tpu.memory_space<vmem>>, vector<1x2x32xf32>,
    %538 = vector.extract_strided_slice %314 {offsets = [6, 0, 0], sizes = [1, 2, 192], strides = [1, 1, 1]} : vector<8x2x192xf32> to vector<1x2x192xf32>
    %539 = vector.shape_cast %538 : vector<1x2x192xf32> to vector<2x192xf32>
    %cst_203 = arith.constant dense<0.000000e+00> : vector<2x192xf32>
    %540 = tpu.matmul %523, %309, %cst_203 {dimension_numbers = #tpu.dot_dimension_numbers<[1], [0], [0], [1], [0, 0, 1, 1], [], []>} : vector<2x64xf32>, vector<64x192xf32>, vector<2x192xf32> -> vector<2x192xf32>
    %541 = vector.extract_strided_slice %539 {offsets = [0, 0], sizes = [2, 128], strides = [1, 1]} : vector<2x192xf32> to vector<2x128xf32>
    %542 = vector.extract_strided_slice %540 {offsets = [0, 0], sizes = [2, 128], strides = [1, 1]} : vector<2x192xf32> to vector<2x128xf32>
    %543 = arith.addf %541, %542 : vector<2x128xf32>
    %544 = arith.negf %543 : vector<2x128xf32>
    %545 = math.exp %544 : vector<2x128xf32>
    %cst_204 = arith.constant 1.000000e+00 : f32
    %546 = vector.broadcast %cst_204 : f32 to vector<2x128xf32>
    %547 = arith.addf %546, %545 : vector<2x128xf32>
    %548 = arith.divf %546, %547 : vector<2x128xf32>
    %549 = vector.extract_strided_slice %539 {offsets = [0, 128], sizes = [2, 64], strides = [1, 1]} : vector<2x192xf32> to vector<2x64xf32>
    %550 = vector.extract_strided_slice %548 {offsets = [0, 0], sizes = [2, 64], strides = [1, 1]} : vector<2x128xf32> to vector<2x64xf32>
    %551 = vector.extract_strided_slice %540 {offsets = [0, 128], sizes = [2, 64], strides = [1, 1]} : vector<2x192xf32> to vector<2x64xf32>
    %552 = vector.broadcast %310 : vector<1x64xf32> to vector<2x64xf32>
    %553 = arith.addf %551, %552 : vector<2x64xf32>
    %554 = arith.mulf %550, %553 : vector<2x64xf32>
    %555 = arith.addf %549, %554 : vector<2x64xf32>
    %556 = math.tanh %555 : vector<2x64xf32>
    %557 = vector.extract_strided_slice %548 {offsets = [0, 64], sizes = [2, 64], strides = [1, 1]} : vector<2x128xf32> to vector<2x64xf32>
    %558 = arith.subf %523, %556 : vector<2x64xf32>
    %559 = arith.mulf %557, %558 : vector<2x64xf32>
    %560 = arith.addf %556, %559 : vector<2x64xf32>
    %561 = vector.extract_strided_slice %560 {offsets = [0, 0], sizes = [2, 32], strides = [1, 1]} : vector<2x64xf32> to vector<2x32xf32>
    %562 = vector.extract_strided_slice %560 {offsets = [0, 32], sizes = [2, 32], strides = [1, 1]} : vector<2x64xf32> to vector<2x32xf32>
    %c6_205 = arith.constant 6 : index
    %c0_206 = arith.constant 0 : index
    %c0_207 = arith.constant 0 : index
    %563 = vector.load %arg4[%c6_205, %c0_206, %c0_207] : memref<8x2x128xf32, #tpu.memory_space<vmem>>, vector<1x2x32xf32>
    %564 = vector.shape_cast %563 : vector<1x2x32xf32> to vector<2x32xf32>
    %565 = vector.shape_cast %561 : vector<2x32xf32> to vector<1x2x32xf32>
    tpu.vector_store %arg4[%c6_205, %c0_206, %c0_207], %565 {strides = array<i32>} : memref<8x2x128xf32, #tpu.memory_space<vmem>>, vector<1x2x32xf32>,
    %c1_208 = arith.constant 1 : index
    %c0_209 = arith.constant 0 : index
    %c32_210 = arith.constant 32 : index
    %566 = vector.load %arg4[%c1_208, %c0_209, %c32_210] : memref<8x2x128xf32, #tpu.memory_space<vmem>>, vector<1x2x32xf32>
    %567 = vector.shape_cast %566 : vector<1x2x32xf32> to vector<2x32xf32>
    %568 = vector.shape_cast %562 : vector<2x32xf32> to vector<1x2x32xf32>
    tpu.vector_store %arg4[%c1_208, %c0_209, %c32_210], %568 {strides = array<i32>} : memref<8x2x128xf32, #tpu.memory_space<vmem>>, vector<1x2x32xf32>,
    %c1_211 = arith.constant 1 : index
    %c0_212 = arith.constant 0 : index
    %c64_213 = arith.constant 64 : index
    %569 = vector.load %arg4[%c1_211, %c0_212, %c64_213] : memref<8x2x128xf32, #tpu.memory_space<vmem>>, vector<1x2x32xf32>
    %570 = vector.shape_cast %569 : vector<1x2x32xf32> to vector<2x32xf32>
    %571 = vector.shape_cast %561 : vector<2x32xf32> to vector<1x2x32xf32>
    tpu.vector_store %arg4[%c1_211, %c0_212, %c64_213], %571 {strides = array<i32>} : memref<8x2x128xf32, #tpu.memory_space<vmem>>, vector<1x2x32xf32>,
    %c6_214 = arith.constant 6 : index
    %c0_215 = arith.constant 0 : index
    %c96_216 = arith.constant 96 : index
    %572 = vector.load %arg4[%c6_214, %c0_215, %c96_216] : memref<8x2x128xf32, #tpu.memory_space<vmem>>, vector<1x2x32xf32>
    %573 = vector.shape_cast %572 : vector<1x2x32xf32> to vector<2x32xf32>
    %574 = vector.shape_cast %562 : vector<2x32xf32> to vector<1x2x32xf32>
    tpu.vector_store %arg4[%c6_214, %c0_215, %c96_216], %574 {strides = array<i32>} : memref<8x2x128xf32, #tpu.memory_space<vmem>>, vector<1x2x32xf32>,
    %575 = vector.extract_strided_slice %314 {offsets = [7, 0, 0], sizes = [1, 2, 192], strides = [1, 1, 1]} : vector<8x2x192xf32> to vector<1x2x192xf32>
    %576 = vector.shape_cast %575 : vector<1x2x192xf32> to vector<2x192xf32>
    %cst_217 = arith.constant dense<0.000000e+00> : vector<2x192xf32>
    %577 = tpu.matmul %560, %309, %cst_217 {dimension_numbers = #tpu.dot_dimension_numbers<[1], [0], [0], [1], [0, 0, 1, 1], [], []>} : vector<2x64xf32>, vector<64x192xf32>, vector<2x192xf32> -> vector<2x192xf32>
    %578 = vector.extract_strided_slice %576 {offsets = [0, 0], sizes = [2, 128], strides = [1, 1]} : vector<2x192xf32> to vector<2x128xf32>
    %579 = vector.extract_strided_slice %577 {offsets = [0, 0], sizes = [2, 128], strides = [1, 1]} : vector<2x192xf32> to vector<2x128xf32>
    %580 = arith.addf %578, %579 : vector<2x128xf32>
    %581 = arith.negf %580 : vector<2x128xf32>
    %582 = math.exp %581 : vector<2x128xf32>
    %cst_218 = arith.constant 1.000000e+00 : f32
    %583 = vector.broadcast %cst_218 : f32 to vector<2x128xf32>
    %584 = arith.addf %583, %582 : vector<2x128xf32>
    %585 = arith.divf %583, %584 : vector<2x128xf32>
    %586 = vector.extract_strided_slice %576 {offsets = [0, 128], sizes = [2, 64], strides = [1, 1]} : vector<2x192xf32> to vector<2x64xf32>
    %587 = vector.extract_strided_slice %585 {offsets = [0, 0], sizes = [2, 64], strides = [1, 1]} : vector<2x128xf32> to vector<2x64xf32>
    %588 = vector.extract_strided_slice %577 {offsets = [0, 128], sizes = [2, 64], strides = [1, 1]} : vector<2x192xf32> to vector<2x64xf32>
    %589 = vector.broadcast %310 : vector<1x64xf32> to vector<2x64xf32>
    %590 = arith.addf %588, %589 : vector<2x64xf32>
    %591 = arith.mulf %587, %590 : vector<2x64xf32>
    %592 = arith.addf %586, %591 : vector<2x64xf32>
    %593 = math.tanh %592 : vector<2x64xf32>
    %594 = vector.extract_strided_slice %585 {offsets = [0, 64], sizes = [2, 64], strides = [1, 1]} : vector<2x128xf32> to vector<2x64xf32>
    %595 = arith.subf %560, %593 : vector<2x64xf32>
    %596 = arith.mulf %594, %595 : vector<2x64xf32>
    %597 = arith.addf %593, %596 : vector<2x64xf32>
    %598 = vector.extract_strided_slice %597 {offsets = [0, 0], sizes = [2, 32], strides = [1, 1]} : vector<2x64xf32> to vector<2x32xf32>
    %599 = vector.extract_strided_slice %597 {offsets = [0, 32], sizes = [2, 32], strides = [1, 1]} : vector<2x64xf32> to vector<2x32xf32>
    %c7_219 = arith.constant 7 : index
    %c0_220 = arith.constant 0 : index
    %c0_221 = arith.constant 0 : index
    %600 = vector.load %arg4[%c7_219, %c0_220, %c0_221] : memref<8x2x128xf32, #tpu.memory_space<vmem>>, vector<1x2x32xf32>
    %601 = vector.shape_cast %600 : vector<1x2x32xf32> to vector<2x32xf32>
    %602 = vector.shape_cast %598 : vector<2x32xf32> to vector<1x2x32xf32>
    tpu.vector_store %arg4[%c7_219, %c0_220, %c0_221], %602 {strides = array<i32>} : memref<8x2x128xf32, #tpu.memory_space<vmem>>, vector<1x2x32xf32>,
    %c0_222 = arith.constant 0 : index
    %c0_223 = arith.constant 0 : index
    %c32_224 = arith.constant 32 : index
    %603 = vector.load %arg4[%c0_222, %c0_223, %c32_224] : memref<8x2x128xf32, #tpu.memory_space<vmem>>, vector<1x2x32xf32>
    %604 = vector.shape_cast %603 : vector<1x2x32xf32> to vector<2x32xf32>
    %605 = vector.shape_cast %599 : vector<2x32xf32> to vector<1x2x32xf32>
    tpu.vector_store %arg4[%c0_222, %c0_223, %c32_224], %605 {strides = array<i32>} : memref<8x2x128xf32, #tpu.memory_space<vmem>>, vector<1x2x32xf32>,
    %c0_225 = arith.constant 0 : index
    %c0_226 = arith.constant 0 : index
    %c64_227 = arith.constant 64 : index
    %606 = vector.load %arg4[%c0_225, %c0_226, %c64_227] : memref<8x2x128xf32, #tpu.memory_space<vmem>>, vector<1x2x32xf32>
    %607 = vector.shape_cast %606 : vector<1x2x32xf32> to vector<2x32xf32>
    %608 = vector.shape_cast %598 : vector<2x32xf32> to vector<1x2x32xf32>
    tpu.vector_store %arg4[%c0_225, %c0_226, %c64_227], %608 {strides = array<i32>} : memref<8x2x128xf32, #tpu.memory_space<vmem>>, vector<1x2x32xf32>,
    %c7_228 = arith.constant 7 : index
    %c0_229 = arith.constant 0 : index
    %c96_230 = arith.constant 96 : index
    %609 = vector.load %arg4[%c7_228, %c0_229, %c96_230] : memref<8x2x128xf32, #tpu.memory_space<vmem>>, vector<1x2x32xf32>
    %610 = vector.shape_cast %609 : vector<1x2x32xf32> to vector<2x32xf32>
    %611 = vector.shape_cast %599 : vector<2x32xf32> to vector<1x2x32xf32>
    tpu.vector_store %arg4[%c7_228, %c0_229, %c96_230], %611 {strides = array<i32>} : memref<8x2x128xf32, #tpu.memory_space<vmem>>, vector<1x2x32xf32>,
    %c0_231 = arith.constant 0 : index
    %c0_232 = arith.constant 0 : index
    %c0_233 = arith.constant 0 : index
    %612 = vector.load %arg4[%c0_231, %c0_232, %c0_233] : memref<8x2x128xf32, #tpu.memory_space<vmem>>, vector<8x2x64xf32>
    %613 = vector.extract_strided_slice %612 {offsets = [0, 0, 0], sizes = [8, 2, 16], strides = [1, 1, 1]} : vector<8x2x64xf32> to vector<8x2x16xf32>
    %614 = vector.extract_strided_slice %612 {offsets = [0, 0, 32], sizes = [8, 2, 16], strides = [1, 1, 1]} : vector<8x2x64xf32> to vector<8x2x16xf32>
    %615 = vector.extract_strided_slice %612 {offsets = [0, 0, 16], sizes = [8, 2, 16], strides = [1, 1, 1]} : vector<8x2x64xf32> to vector<8x2x16xf32>
    %616 = vector.extract_strided_slice %612 {offsets = [0, 0, 48], sizes = [8, 2, 16], strides = [1, 1, 1]} : vector<8x2x64xf32> to vector<8x2x16xf32>
    %617 = tpu.concatenate %613, %614, %615, %616 in 2 : vector<8x2x16xf32>, vector<8x2x16xf32>, vector<8x2x16xf32>, vector<8x2x16xf32> -> vector<8x2x64xf32>
    %618 = vector.extract_strided_slice %617 {offsets = [0, 0, 0], sizes = [8, 2, 32], strides = [1, 1, 1]} : vector<8x2x64xf32> to vector<8x2x32xf32>
    %619 = vector.extract_strided_slice %617 {offsets = [0, 0, 32], sizes = [8, 2, 32], strides = [1, 1, 1]} : vector<8x2x64xf32> to vector<8x2x32xf32>
    %cst_234 = arith.constant dense<0.000000e+00> : vector<8x2xf32>
    %620 = vector.multi_reduction <add>, %618, %cst_234 [2] : vector<8x2x32xf32> to vector<8x2xf32>
    %621 = vector.shape_cast %620 : vector<8x2xf32> to vector<8x2x1xf32>
    %cst_235 = arith.constant 3.200000e+01 : f32
    %622 = vector.broadcast %cst_235 : f32 to vector<8x2x1xf32>
    %623 = arith.divf %621, %622 : vector<8x2x1xf32>
    %cst_236 = arith.constant dense<0.000000e+00> : vector<8x2xf32>
    %624 = vector.multi_reduction <add>, %619, %cst_236 [2] : vector<8x2x32xf32> to vector<8x2xf32>
    %625 = vector.shape_cast %624 : vector<8x2xf32> to vector<8x2x1xf32>
    %cst_237 = arith.constant 3.200000e+01 : f32
    %626 = vector.broadcast %cst_237 : f32 to vector<8x2x1xf32>
    %627 = arith.divf %625, %626 : vector<8x2x1xf32>
    %628 = vector.broadcast %623 : vector<8x2x1xf32> to vector<8x2x32xf32>
    %629 = arith.subf %618, %628 : vector<8x2x32xf32>
    %630 = arith.mulf %629, %629 : vector<8x2x32xf32>
    %cst_238 = arith.constant dense<0.000000e+00> : vector<8x2xf32>
    %631 = vector.multi_reduction <add>, %630, %cst_238 [2] : vector<8x2x32xf32> to vector<8x2xf32>
    %632 = vector.shape_cast %631 : vector<8x2xf32> to vector<8x2x1xf32>
    %cst_239 = arith.constant 3.200000e+01 : f32
    %633 = vector.broadcast %cst_239 : f32 to vector<8x2x1xf32>
    %634 = arith.divf %632, %633 : vector<8x2x1xf32>
    %635 = vector.broadcast %627 : vector<8x2x1xf32> to vector<8x2x32xf32>
    %636 = arith.subf %619, %635 : vector<8x2x32xf32>
    %637 = arith.mulf %636, %636 : vector<8x2x32xf32>
    %cst_240 = arith.constant dense<0.000000e+00> : vector<8x2xf32>
    %638 = vector.multi_reduction <add>, %637, %cst_240 [2] : vector<8x2x32xf32> to vector<8x2xf32>
    %639 = vector.shape_cast %638 : vector<8x2xf32> to vector<8x2x1xf32>
    %cst_241 = arith.constant 3.200000e+01 : f32
    %640 = vector.broadcast %cst_241 : f32 to vector<8x2x1xf32>
    %641 = arith.divf %639, %640 : vector<8x2x1xf32>
    %642 = vector.broadcast %623 : vector<8x2x1xf32> to vector<8x2x32xf32>
    %643 = arith.subf %618, %642 : vector<8x2x32xf32>
    %cst_242 = arith.constant 9.99999974E-6 : f32
    %644 = vector.broadcast %cst_242 : f32 to vector<8x2x1xf32>
    %645 = arith.addf %634, %644 : vector<8x2x1xf32>
    %646 = math.rsqrt %645 : vector<8x2x1xf32>
    %647 = vector.broadcast %646 : vector<8x2x1xf32> to vector<8x2x32xf32>
    %648 = arith.mulf %643, %647 : vector<8x2x32xf32>
    %649 = vector.broadcast %627 : vector<8x2x1xf32> to vector<8x2x32xf32>
    %650 = arith.subf %619, %649 : vector<8x2x32xf32>
    %cst_243 = arith.constant 9.99999974E-6 : f32
    %651 = vector.broadcast %cst_243 : f32 to vector<8x2x1xf32>
    %652 = arith.addf %641, %651 : vector<8x2x1xf32>
    %653 = math.rsqrt %652 : vector<8x2x1xf32>
    %654 = vector.broadcast %653 : vector<8x2x1xf32> to vector<8x2x32xf32>
    %655 = arith.mulf %650, %654 : vector<8x2x32xf32>
    %656 = tpu.concatenate %648, %655 in 2 : vector<8x2x32xf32>, vector<8x2x32xf32> -> vector<8x2x64xf32>
    %c464 = arith.constant 464 : index
    %c0_244 = arith.constant 0 : index
    %657 = vector.load %arg1[%c464, %c0_244] : memref<824x192xf32, #tpu.memory_space<vmem>>, vector<1x64xf32>
    %658 = vector.shape_cast %657 : vector<1x64xf32> to vector<1x1x64xf32>
    %659 = vector.broadcast %658 : vector<1x1x64xf32> to vector<8x2x64xf32>
    %660 = arith.mulf %656, %659 : vector<8x2x64xf32>
    %c472 = arith.constant 472 : index
    %c0_245 = arith.constant 0 : index
    %661 = vector.load %arg1[%c472, %c0_245] : memref<824x192xf32, #tpu.memory_space<vmem>>, vector<1x64xf32>
    %662 = vector.shape_cast %661 : vector<1x64xf32> to vector<1x1x64xf32>
    %663 = vector.broadcast %662 : vector<1x1x64xf32> to vector<8x2x64xf32>
    %664 = arith.addf %660, %663 : vector<8x2x64xf32>
    %c480 = arith.constant 480 : index
    %c0_246 = arith.constant 0 : index
    %665 = vector.load %arg1[%c480, %c0_246] : memref<824x192xf32, #tpu.memory_space<vmem>>, vector<64x32xf32>
    %cst_247 = arith.constant dense<0.000000e+00> : vector<8x2x32xf32>
    %666 = tpu.matmul %664, %665, %cst_247 {dimension_numbers = #tpu.dot_dimension_numbers<[2], [0], [0, 1], [1], [0, 0, 0, 1, 1, 1], [], []>} : vector<8x2x64xf32>, vector<64x32xf32>, vector<8x2x32xf32> -> vector<8x2x32xf32>
    %c544 = arith.constant 544 : index
    %c0_248 = arith.constant 0 : index
    %667 = vector.load %arg1[%c544, %c0_248] : memref<824x192xf32, #tpu.memory_space<vmem>>, vector<1x32xf32>
    %668 = vector.shape_cast %667 : vector<1x32xf32> to vector<1x1x32xf32>
    %669 = vector.broadcast %668 : vector<1x1x32xf32> to vector<8x2x32xf32>
    %670 = arith.addf %666, %669 : vector<8x2x32xf32>
    %671 = math.tanh %670 : vector<8x2x32xf32>
    %c552 = arith.constant 552 : index
    %c0_249 = arith.constant 0 : index
    %672 = vector.load %arg1[%c552, %c0_249] : memref<824x192xf32, #tpu.memory_space<vmem>>, vector<1x32xf32>
    %673 = vector.shape_cast %672 : vector<1x32xf32> to vector<1x1x32xf32>
    %674 = vector.broadcast %673 : vector<1x1x32xf32> to vector<8x2x32xf32>
    %675 = arith.mulf %671, %674 : vector<8x2x32xf32>
    %676 = vector.extract_strided_slice %675 {offsets = [0, 0, 0], sizes = [8, 2, 16], strides = [1, 1, 1]} : vector<8x2x32xf32> to vector<8x2x16xf32>
    %cst_250 = arith.constant dense<0.000000e+00> : vector<8x2xf32>
    %677 = vector.multi_reduction <add>, %676, %cst_250 [2] : vector<8x2x16xf32> to vector<8x2xf32>
    %678 = vector.shape_cast %677 : vector<8x2xf32> to vector<8x2x1xf32>
    %679 = vector.extract_strided_slice %675 {offsets = [0, 0, 16], sizes = [8, 2, 16], strides = [1, 1, 1]} : vector<8x2x32xf32> to vector<8x2x16xf32>
    %cst_251 = arith.constant dense<0.000000e+00> : vector<8x2xf32>
    %680 = vector.multi_reduction <add>, %679, %cst_251 [2] : vector<8x2x16xf32> to vector<8x2xf32>
    %681 = vector.shape_cast %680 : vector<8x2xf32> to vector<8x2x1xf32>
    %682 = tpu.concatenate %678, %681 in 2 : vector<8x2x1xf32>, vector<8x2x1xf32> -> vector<8x2x2xf32>
    %cst_252 = arith.constant dense<0xFF800000> : vector<2x2xf32>
    %683 = vector.multi_reduction <maximumf>, %682, %cst_252 [0] : vector<8x2x2xf32> to vector<2x2xf32>
    %684 = vector.shape_cast %683 : vector<2x2xf32> to vector<1x2x2xf32>
    %685 = vector.broadcast %684 : vector<1x2x2xf32> to vector<8x2x2xf32>
    %686 = arith.subf %682, %685 : vector<8x2x2xf32>
    %687 = math.exp %686 : vector<8x2x2xf32>
    %cst_253 = arith.constant dense<0.000000e+00> : vector<2x2xf32>
    %688 = vector.multi_reduction <add>, %687, %cst_253 [0] : vector<8x2x2xf32> to vector<2x2xf32>
    %689 = vector.shape_cast %688 : vector<2x2xf32> to vector<1x2x2xf32>
    %690 = vector.broadcast %689 : vector<1x2x2xf32> to vector<8x2x2xf32>
    %691 = arith.divf %687, %690 : vector<8x2x2xf32>
    %692 = vector.extract_strided_slice %664 {offsets = [0, 0, 0], sizes = [8, 2, 32], strides = [1, 1, 1]} : vector<8x2x64xf32> to vector<8x2x32xf32>
    %693 = vector.extract_strided_slice %691 {offsets = [0, 0, 0], sizes = [8, 2, 1], strides = [1, 1, 1]} : vector<8x2x2xf32> to vector<8x2x1xf32>
    %694 = vector.broadcast %693 : vector<8x2x1xf32> to vector<8x2x32xf32>
    %695 = arith.mulf %692, %694 : vector<8x2x32xf32>
    %cst_254 = arith.constant dense<0.000000e+00> : vector<2x32xf32>
    %696 = vector.multi_reduction <add>, %695, %cst_254 [0] : vector<8x2x32xf32> to vector<2x32xf32>
    %697 = vector.extract_strided_slice %664 {offsets = [0, 0, 32], sizes = [8, 2, 32], strides = [1, 1, 1]} : vector<8x2x64xf32> to vector<8x2x32xf32>
    %698 = vector.extract_strided_slice %691 {offsets = [0, 0, 1], sizes = [8, 2, 1], strides = [1, 1, 1]} : vector<8x2x2xf32> to vector<8x2x1xf32>
    %699 = vector.broadcast %698 : vector<8x2x1xf32> to vector<8x2x32xf32>
    %700 = arith.mulf %697, %699 : vector<8x2x32xf32>
    %cst_255 = arith.constant dense<0.000000e+00> : vector<2x32xf32>
    %701 = vector.multi_reduction <add>, %700, %cst_255 [0] : vector<8x2x32xf32> to vector<2x32xf32>
    %702 = tpu.concatenate %696, %701 in 1 : vector<2x32xf32>, vector<2x32xf32> -> vector<2x64xf32>
    %c560 = arith.constant 560 : index
    %c0_256 = arith.constant 0 : index
    %703 = vector.load %arg1[%c560, %c0_256] : memref<824x192xf32, #tpu.memory_space<vmem>>, vector<64x64xf32>
    %cst_257 = arith.constant dense<0.000000e+00> : vector<2x64xf32>
    %704 = tpu.matmul %702, %703, %cst_257 {dimension_numbers = #tpu.dot_dimension_numbers<[1], [0], [0], [1], [0, 0, 1, 1], [], []>} : vector<2x64xf32>, vector<64x64xf32>, vector<2x64xf32> -> vector<2x64xf32>
    %c624 = arith.constant 624 : index
    %c0_258 = arith.constant 0 : index
    %705 = vector.load %arg1[%c624, %c0_258] : memref<824x192xf32, #tpu.memory_space<vmem>>, vector<1x64xf32>
    %706 = vector.broadcast %705 : vector<1x64xf32> to vector<2x64xf32>
    %707 = arith.addf %704, %706 : vector<2x64xf32>
    %cst_259 = arith.constant 5.000000e-01 : f32
    %708 = vector.broadcast %cst_259 : f32 to vector<2x64xf32>
    %709 = arith.mulf %708, %707 : vector<2x64xf32>
    %cst_260 = arith.constant 0.707106769 : f32
    %710 = vector.broadcast %cst_260 : f32 to vector<2x64xf32>
    %711 = arith.mulf %707, %710 : vector<2x64xf32>
    %712 = math.erf %711 : vector<2x64xf32>
    %cst_261 = arith.constant 1.000000e+00 : f32
    %713 = vector.broadcast %cst_261 : f32 to vector<2x64xf32>
    %714 = arith.addf %713, %712 : vector<2x64xf32>
    %715 = arith.mulf %709, %714 : vector<2x64xf32>
    %716 = vector.extract_strided_slice %715 {offsets = [0, 0], sizes = [2, 32], strides = [1, 1]} : vector<2x64xf32> to vector<2x32xf32>
    %717 = vector.extract_strided_slice %715 {offsets = [0, 32], sizes = [2, 32], strides = [1, 1]} : vector<2x64xf32> to vector<2x32xf32>
    %c632 = arith.constant 632 : index
    %c0_262 = arith.constant 0 : index
    %718 = vector.load %arg1[%c632, %c0_262] : memref<824x192xf32, #tpu.memory_space<vmem>>, vector<32x32xf32>
    %cst_263 = arith.constant dense<0.000000e+00> : vector<2x32xf32>
    %719 = tpu.matmul %717, %718, %cst_263 {dimension_numbers = #tpu.dot_dimension_numbers<[1], [0], [0], [1], [0, 0, 1, 1], [], []>} : vector<2x32xf32>, vector<32x32xf32>, vector<2x32xf32> -> vector<2x32xf32>
    %c664 = arith.constant 664 : index
    %c0_264 = arith.constant 0 : index
    %720 = vector.load %arg1[%c664, %c0_264] : memref<824x192xf32, #tpu.memory_space<vmem>>, vector<1x32xf32>
    %721 = vector.broadcast %720 : vector<1x32xf32> to vector<2x32xf32>
    %722 = arith.addf %719, %721 : vector<2x32xf32>
    %723 = tpu.concatenate %716, %722 in 1 : vector<2x32xf32>, vector<2x32xf32> -> vector<2x64xf32>
    %c672 = arith.constant 672 : index
    %c0_265 = arith.constant 0 : index
    %724 = vector.load %arg1[%c672, %c0_265] : memref<824x192xf32, #tpu.memory_space<vmem>>, vector<64x32xf32>
    %cst_266 = arith.constant dense<0.000000e+00> : vector<2x32xf32>
    %725 = tpu.matmul %723, %724, %cst_266 {dimension_numbers = #tpu.dot_dimension_numbers<[1], [0], [0], [1], [0, 0, 1, 1], [], []>} : vector<2x64xf32>, vector<64x32xf32>, vector<2x32xf32> -> vector<2x32xf32>
    %c736 = arith.constant 736 : index
    %c0_267 = arith.constant 0 : index
    %726 = vector.load %arg1[%c736, %c0_267] : memref<824x192xf32, #tpu.memory_space<vmem>>, vector<1x32xf32>
    %727 = vector.broadcast %726 : vector<1x32xf32> to vector<2x32xf32>
    %728 = arith.addf %725, %727 : vector<2x32xf32>
    %729 = arith.negf %728 : vector<2x32xf32>
    %730 = math.exp %729 : vector<2x32xf32>
    %cst_268 = arith.constant 1.000000e+00 : f32
    %731 = vector.broadcast %cst_268 : f32 to vector<2x32xf32>
    %732 = arith.addf %731, %730 : vector<2x32xf32>
    %733 = arith.divf %731, %732 : vector<2x32xf32>
    %734 = arith.mulf %733, %722 : vector<2x32xf32>
    %735 = arith.addf %716, %734 : vector<2x32xf32>
    %cst_269 = arith.constant dense<0.000000e+00> : vector<2xf32>
    %736 = vector.multi_reduction <add>, %735, %cst_269 [1] : vector<2x32xf32> to vector<2xf32>
    %737 = vector.shape_cast %736 : vector<2xf32> to vector<2x1xf32>
    %cst_270 = arith.constant 3.200000e+01 : f32
    %738 = vector.broadcast %cst_270 : f32 to vector<2x1xf32>
    %739 = arith.divf %737, %738 : vector<2x1xf32>
    %740 = vector.broadcast %739 : vector<2x1xf32> to vector<2x32xf32>
    %741 = arith.subf %735, %740 : vector<2x32xf32>
    %742 = arith.mulf %741, %741 : vector<2x32xf32>
    %cst_271 = arith.constant dense<0.000000e+00> : vector<2xf32>
    %743 = vector.multi_reduction <add>, %742, %cst_271 [1] : vector<2x32xf32> to vector<2xf32>
    %744 = vector.shape_cast %743 : vector<2xf32> to vector<2x1xf32>
    %cst_272 = arith.constant 3.200000e+01 : f32
    %745 = vector.broadcast %cst_272 : f32 to vector<2x1xf32>
    %746 = arith.divf %744, %745 : vector<2x1xf32>
    %747 = vector.broadcast %739 : vector<2x1xf32> to vector<2x32xf32>
    %748 = arith.subf %735, %747 : vector<2x32xf32>
    %cst_273 = arith.constant 9.99999974E-6 : f32
    %749 = vector.broadcast %cst_273 : f32 to vector<2x1xf32>
    %750 = arith.addf %746, %749 : vector<2x1xf32>
    %751 = math.rsqrt %750 : vector<2x1xf32>
    %752 = vector.broadcast %751 : vector<2x1xf32> to vector<2x32xf32>
    %753 = arith.mulf %748, %752 : vector<2x32xf32>
    %c744 = arith.constant 744 : index
    %c0_274 = arith.constant 0 : index
    %754 = vector.load %arg1[%c744, %c0_274] : memref<824x192xf32, #tpu.memory_space<vmem>>, vector<1x32xf32>
    %755 = vector.broadcast %754 : vector<1x32xf32> to vector<2x32xf32>
    %756 = arith.mulf %753, %755 : vector<2x32xf32>
    %c752 = arith.constant 752 : index
    %c0_275 = arith.constant 0 : index
    %757 = vector.load %arg1[%c752, %c0_275] : memref<824x192xf32, #tpu.memory_space<vmem>>, vector<1x32xf32>
    %758 = vector.broadcast %757 : vector<1x32xf32> to vector<2x32xf32>
    %759 = arith.addf %756, %758 : vector<2x32xf32>
    %c760 = arith.constant 760 : index
    %c0_276 = arith.constant 0 : index
    %760 = vector.load %arg1[%c760, %c0_276] : memref<824x192xf32, #tpu.memory_space<vmem>>, vector<32x16xf32>
    %cst_277 = arith.constant dense<0.000000e+00> : vector<2x16xf32>
    %761 = tpu.matmul %759, %760, %cst_277 {dimension_numbers = #tpu.dot_dimension_numbers<[1], [0], [0], [1], [0, 0, 1, 1], [], []>} : vector<2x32xf32>, vector<32x16xf32>, vector<2x16xf32> -> vector<2x16xf32>
    %c792 = arith.constant 792 : index
    %c0_278 = arith.constant 0 : index
    %762 = vector.load %arg1[%c792, %c0_278] : memref<824x192xf32, #tpu.memory_space<vmem>>, vector<1x16xf32>
    %763 = vector.broadcast %762 : vector<1x16xf32> to vector<2x16xf32>
    %764 = arith.addf %761, %763 : vector<2x16xf32>
    %cst_279 = arith.constant 5.000000e-01 : f32
    %765 = vector.broadcast %cst_279 : f32 to vector<2x16xf32>
    %766 = arith.mulf %765, %764 : vector<2x16xf32>
    %cst_280 = arith.constant 0.707106769 : f32
    %767 = vector.broadcast %cst_280 : f32 to vector<2x16xf32>
    %768 = arith.mulf %764, %767 : vector<2x16xf32>
    %769 = math.erf %768 : vector<2x16xf32>
    %cst_281 = arith.constant 1.000000e+00 : f32
    %770 = vector.broadcast %cst_281 : f32 to vector<2x16xf32>
    %771 = arith.addf %770, %769 : vector<2x16xf32>
    %772 = arith.mulf %766, %771 : vector<2x16xf32>
    %c800 = arith.constant 800 : index
    %c0_282 = arith.constant 0 : index
    %773 = vector.load %arg1[%c800, %c0_282] : memref<824x192xf32, #tpu.memory_space<vmem>>, vector<16x2xf32>
    %cst_283 = arith.constant dense<0.000000e+00> : vector<2x2xf32>
    %774 = tpu.matmul %772, %773, %cst_283 {dimension_numbers = #tpu.dot_dimension_numbers<[1], [0], [0], [1], [0, 0, 1, 1], [], []>} : vector<2x16xf32>, vector<16x2xf32>, vector<2x2xf32> -> vector<2x2xf32>
    %c816 = arith.constant 816 : index
    %c0_284 = arith.constant 0 : index
    %775 = vector.load %arg1[%c816, %c0_284] : memref<824x192xf32, #tpu.memory_space<vmem>>, vector<1x2xf32>
    %776 = vector.broadcast %775 : vector<1x2xf32> to vector<2x2xf32>
    %777 = arith.addf %774, %776 : vector<2x2xf32>
    %c0_285 = arith.constant 0 : index
    %c0_286 = arith.constant 0 : index
    %778 = vector.load %arg2[%c0_285, %c0_286] : memref<2x2xf32, #tpu.memory_space<vmem>>, vector<2x2xf32>
    tpu.vector_store %arg2[%c0_285, %c0_286], %777 {strides = array<i32>} : memref<2x2xf32, #tpu.memory_space<vmem>>, vector<2x2xf32>,
    return
  }
}

</mosaic_0001>

<llo_original>
// kernel: forward.1
$region0: #{forward.1}
  #allocation0 [shape = 'u32[]', space=smem, size = 0x4, offset = 0x4, fixed_abs, tag = 'smem constant byte address 0x4 - core index']
  #allocation1 [shape = 'u32[144,128]{1,0:T(1,128)}', space=vmem, size = 0x12000, scoped, tag = 'internal scratch']
  #allocation2 [shape = 'f32[8,2,128]{2,1,0:T(2,128)}', space=vmem, size = 0x2000, scoped, tag = 'scratch operand']
  #allocation3 [shape = 'f32[8,2,128]{2,1,0:T(2,128)}', space=vmem, size = 0x2000, scoped, tag = 'scratch operand']
  %s0 = inlined_call_operand.vmem [shape: f32[8,2,176], index: 0, kind: input, shape index: {}]
  %s1 = inlined_call_operand.vmem [shape: f32[824,192], index: 1, kind: input, shape index: {}]
  %s2 = inlined_call_operand.hbm [shape: f32[2,2], index: 2, kind: output, shape index: {}]
  %s3 = sld [smem:[#allocation0]]
  $region18: #{forward.1} parent=0
    _
  %s5 = ssub.s32 1, %s3
  %s6 = scalar_select 0, %s5, %s3
  $region1: #{forward.1} parent=0
    #allocation4 [shape = 'u8[1024]{0}', space=vmem, size = 0x400, scoped, tag = 'output window, operand 0, single buffered']
    #allocation5 [shape = 's32[1]{0}', space=sflag, size = 0x4, scoped, tag = 'scoped memory for forward.1']
    %7 = vsyncpa [#allocation5], 0
    // Predicated region
    $region2: #{forward.1} parent=1 // pred_check
      _
    $region3: #{forward.1} parent=1 // pred_check_branch
      %9 = sbr.rel (0) target = $region5
    $region4: #{forward.1} parent=1 // pred_region
      _
    $region5: #{forward.1} parent=1 // pred_fallthru
      _
    // Predicated region
    $region6: #{forward.1} parent=1 // pred_check
      _
    $region7: #{forward.1} parent=1 // pred_check_branch
      %11 = sbr.rel (0) target = $region9
    $region8: #{forward.1} parent=1 // pred_region
      _
    $region9: #{forward.1} parent=1 // pred_fallthru
      _
    %v12 = vld [vmem:[%s0] sm:$0xf]
    %v13 = vld [vmem:[%s0 + $0x4] sm:$0xf]
    %v14 = vld [vmem:[%s0 + $0x8] sm:$0xf]
    %v15 = vld [vmem:[%s0 + $0xc] sm:$0xf]
    %v16 = vld [vmem:[%s0 + $0x10] sm:$0xf]
    %v17 = vld [vmem:[%s0 + $0x14] sm:$0xf]
    %v18 = vld [vmem:[%s0 + $0x18] sm:$0xf]
    %v19 = vld [vmem:[%s0 + $0x1c] sm:$0xf]
    %v20 = vld [vmem:[%s1] sm:$0xff]
    %v21 = vld [vmem:[%s1 + $0x8] sm:$0xff]
    %v22 = vld [vmem:[%s1 + $0x10] sm:$0xff]
    %v23 = vld [vmem:[%s1 + $0x18] sm:$0xff]
    %v24 = vld [vmem:[%s1 + $0x20] sm:$0xff]
    %v25 = vld [vmem:[%s1 + $0x28] sm:$0xff]
    %v26 = vld [vmem:[%s1 + $0x30] sm:$0xff]
    %v27 = vld [vmem:[%s1 + $0x38] sm:$0xff]
    %v28 = vld [vmem:[%s1 + $0x40] sm:$0xff]
    %v29 = vld [vmem:[%s1 + $0x48] sm:$0xff]
    %v30 = vld [vmem:[%s1 + $0x50] sm:$0xff]
    %v31 = vld [vmem:[%s1 + $0x58] sm:$0xff]
    %v32 = vld [vmem:[%s1 + $0x60] sm:$0xff]
    %v33 = vld [vmem:[%s1 + $0x68] sm:$0xff]
    %v34 = vld [vmem:[%s1 + $0x70] sm:$0xff]
    %v35 = vld [vmem:[%s1 + $0x78] sm:$0xff]
    %v36 = vld [vmem:[%s1 + $0x80] sm:$0xff]
    %v37 = vld [vmem:[%s1 + $0x88] sm:$0xff]
    %v38 = vld [vmem:[%s1 + $0x90] sm:$0xff]
    %v39 = vld [vmem:[%s1 + $0x98] sm:$0xff]
    %v40 = vld [vmem:[%s1 + $0xa0] sm:$0xff]
    %v41 = vld [vmem:[%s1 + $0xa8] sm:$0xff]
    %v42 = vld [vmem:[%s1 + $0xb0] sm:$0xff]
    %v43 = vld [vmem:[%s1 + $0xb8] sm:$0xff]
    %v44 = vld [vmem:[%s1 + $0xc0] sm:$0xff]
    %v45 = vld [vmem:[%s1 + $0xc8] sm:$0xff]
    %v46 = vld [vmem:[%s1 + $0xd0] sm:$0xff]
    %v47 = vld [vmem:[%s1 + $0xd8] sm:$0xff]
    %v48 = vld [vmem:[%s1 + $0xe0] sm:$0xff]
    %v49 = vld [vmem:[%s1 + $0xe8] sm:$0xff]
    %v50 = vld [vmem:[%s1 + $0xf0] sm:$0xff]
    %v51 = vld [vmem:[%s1 + $0xf8] sm:$0xff]
    %v52 = vld [vmem:[%s1 + $0x100] sm:$0xff]
    %v53 = vld [vmem:[%s1 + $0x108] sm:$0xff]
    %v54 = vld [vmem:[%s1 + $0x110] sm:$0xff]
    %v55 = vld [vmem:[%s1 + $0x118] sm:$0xff]
    %v56 = vld [vmem:[%s1 + $0x120] sm:$0xff]
    %v57 = vld [vmem:[%s1 + $0x128] sm:$0xff]
    %v58 = vld [vmem:[%s1 + $0x130] sm:$0xff]
    %v59 = vld [vmem:[%s1 + $0x138] sm:$0xff]
    %v60 = vld [vmem:[%s1 + $0x140] sm:$0xff]
    %v61 = vld [vmem:[%s1 + $0x148] sm:$0xff]
    %v62 = vld [vmem:[%s1 + $0x150] sm:$0xff]
    %v63 = vld [vmem:[%s1 + $0x158] sm:$0xff]
    %s64 = scalar_lea.vmem %s1, 352
    %v65 = vld [vmem:[%s64] ss:$8 sm:$0x3]
    %v66 = vld [vmem:[%s1 + $0x170] sm:$0xff]
    %v67 = vld [vmem:[%s1 + $0x178] sm:$0xff]
    %v68 = vld [vmem:[%s1 + $0x180] sm:$0xff]
    %v69 = vld [vmem:[%s1 + $0x188] sm:$0xff]
    %v70 = vld [vmem:[%s1 + $0x190] sm:$0xff]
    %v71 = vld [vmem:[%s1 + $0x198] sm:$0xff]
    %v72 = vld [vmem:[%s1 + $0x1a0] sm:$0xff]
    %v73 = vld [vmem:[%s1 + $0x1a8] sm:$0xff]
    %v74 = vld [vmem:[%s1 + $0x1b0] sm:$0xff]
    %v75 = vld [vmem:[%s1 + $0x1b8] sm:$0xff]
    %v76 = vld [vmem:[%s1 + $0x1c0] sm:$0xff]
    %v77 = vld [vmem:[%s1 + $0x1c8] sm:$0xff]
    %v78 = vld [vmem:[%s1 + $0x1d0] sm:$0xff]
    %v79 = vld [vmem:[%s1 + $0x1d8] sm:$0xff]
    %v80 = vld [vmem:[%s1 + $0x1e0] sm:$0xff]
    %v81 = vld [vmem:[%s1 + $0x1e8] sm:$0xff]
    %v82 = vld [vmem:[%s1 + $0x1f0] ss:$0 sm:$0xff]
    %v84 = vlaneseq
    %v85 = vshrl.u32 %v84, 7
    %v86 = vsub.s32 0, %v85
    %v87 = vrot.slane %v65, %v86
    %v88 = vlaneseq
    %v89 = vshrl.u32 %v88, 7
    %v90 = vsub.s32 1, %v89
    %v91 = vrot.slane %v65, %v90
    %v92 = vcombine.low %v87, %v91
    %v94 = vunpack.c.l.s4 1983009808
    %v95 = vunpack.c.0.s8 %v94
    %v96 = vlaneseq
    %v97 = vshrl.u32 %v96, 7
    %v98 = vsub.s32 %v95, %v97
    %v99 = vrot.slane %v92, %v98
    %v108 = vcombine.low %v12, %v13
    %v109 = vcombine.low %v14, %v15
    %v111 = vunpack.c.l.s4 1983009808
    %v112 = vunpack.c.0.s8 %v111
    %v113 = vlaneseq
    %v114 = vshrl.u32 %v113, 7
    %v115 = vsub.s32 %v112, %v114
    %v116 = vrot.slane %v108, %v115
    %v118 = vunpack.c.l.s4 1983009808
    %v119 = vunpack.c.0.s8 %v118
    %v120 = vlaneseq
    %v121 = vshrl.u32 %v120, 7
    %v122 = vsub.s32 %v119, %v121
    %v123 = vrot.slane %v109, %v122
    %v124 = vcombine.low %v116, %v123
    %v125 = vcombine.high %v116, %v123
    %v126 = vcombine.low %v16, %v17
    %v127 = vcombine.low %v18, %v19
    %v129 = vunpack.c.l.s4 1983009808
    %v130 = vunpack.c.0.s8 %v129
    %v131 = vlaneseq
    %v132 = vshrl.u32 %v131, 7
    %v133 = vsub.s32 %v130, %v132
    %v134 = vrot.slane %v126, %v133
    %v136 = vunpack.c.l.s4 1983009808
    %v137 = vunpack.c.0.s8 %v136
    %v138 = vlaneseq
    %v139 = vshrl.u32 %v138, 7
    %v140 = vsub.s32 %v137, %v139
    %v141 = vrot.slane %v127, %v140
    %v142 = vcombine.low %v134, %v141
    %v143 = vcombine.high %v134, %v141
    %v146 = vcombine.low %v99, %v99
    %v148 = vunpack.c.l.s4 1983009808
    %v149 = vunpack.c.0.s8 %v148
    %v150 = vlaneseq
    %v151 = vshrl.u32 %v150, 7
    %v152 = vsub.s32 %v149, %v151
    %v153 = vrot.slane %v146, %v152
    %v154 = vcombine.low %v153, %v153
    %v155 = vcombine.high %v153, %v153
    %vm158 = vcmask 392192
    %v159 = vsel %vm158, %v125, 0
    %v161 = vsel %vm158, %v143, 0
    %163 = vmatprep.subr.mxu0 %v21
    %164 = vmatpush1.msra.mxu0 %v20
    %165 = vmatprep.subr.mxu0 %v23
    %166 = vmatpush1.msra.mxu0 %v22
    %167 = vmatprep.subr.mxu0 %v25
    %168 = vmatpush1.msra.mxu0 %v24
    %169 = vmatprep.subr.mxu0 %v27
    %170 = vmatpush1.msra.mxu0 %v26
    %171 = vmatprep.subr.mxu0 %v29
    %172 = vmatpush1.msra.mxu0 %v28
    %173 = vmatprep.subr.mxu0 %v31
    %174 = vmatpush1.msra.mxu0 %v30
    %175 = vmatprep.subr.mxu0 %v33
    %176 = vmatpush1.msra.mxu0 %v32
    %177 = vmatprep.subr.mxu0 %v35
    %178 = vmatpush1.msra.mxu0 %v34
    %179 = vmatprep.subr.mxu0 %v37
    %180 = vmatpush1.msra.mxu0 %v36
    %181 = vmatprep.subr.mxu0 %v39
    %182 = vmatpush1.msra.mxu0 %v38
    %183 = vmatprep.subr.mxu0 %v41
    %184 = vmatpush1.msra.mxu0 %v40
    %185 = vmatprep.subr.mxu0 %v43
    %186 = vmatpush1.msra.mxu0 %v42
    %187 = vmatprep.subr.mxu0 %v45
    %188 = vmatpush1.msra.mxu0 %v44
    %189 = vmatprep.subr.mxu0 %v47
    %190 = vmatpush1.msra.mxu0 %v46
    %191 = vmatprep.subr.mxu0 %v49
    %192 = vmatpush1.msra.mxu0 %v48
    %193 = vmatprep.subr.mxu0 %v51
    %194 = vmatpush1.msra.mxu0 %v50
    %195 = vmatprep.subr.mxu0 %v53
    %196 = vmatpush1.msra.mxu0 %v52
    %197 = vmatprep.subr.mxu0 %v55
    %198 = vmatpush1.msra.mxu0 %v54
    %199 = vmatprep.subr.mxu0 %v57
    %200 = vmatpush1.msra.mxu0 %v56
    %201 = vmatprep.subr.mxu0 %v59
    %202 = vmatpush1.msra.mxu0 %v58
    %203 = vmatprep.subr.mxu0 %v61
    %204 = vmatpush1.msra.mxu0 %v60
    %205 = vmatprep.subr.mxu0 %v63
    %206 = vmatpush1.msra.mxu0 %v62
    %207 = vmatprep.subr.mxu0 0.0
    %208 = vmatpush1.msra.mxu0 0.0
    %209 = vmatprep.subr.mxu0 0.0
    %210 = vmatpush1.msra.mxu0 0.0
    %211 = vmatprep.subr.mxu0 0.0
    %212 = vmatpush1.msra.mxu0 0.0
    %213 = vmatprep.subr.mxu0 0.0
    %214 = vmatpush1.msra.mxu0 0.0
    %215 = vmatprep.subr.mxu0 0.0
    %216 = vmatpush1.msra.mxu0 0.0
    %217 = vmatprep.subr.mxu0 0.0
    %218 = vmatpush1.msra.mxu0 0.0
    %219 = vmatprep.subr.mxu0 0.0
    %220 = vmatpush1.msra.mxu0 0.0
    %221 = vmatprep.subr.mxu0 0.0
    %222 = vmatpush1.msra.mxu0 0.0
    %223 = vmatprep.subr.mxu0 0.0
    %224 = vmatpush1.msra.mxu0 0.0
    %225 = vmatprep.subr.mxu0 0.0
    %226 = vmatpush1.msra.mxu0 0.0
    %227 = vmatprep.mubr.f32.mxu0 %v159
    %228 = vmatmul.mubr.f32.gmra.mrb[0].mxu0 %v124
    %v229 = vpop.f32.mrb[0].mxu0
    %v230 = vadd.f32 %v154, %v229
    %v231 = vpop.f32.mrb[0].mxu0
    %v232 = vadd.f32 %v155, %v231
    %233 = vmatprep.mubr.f32.mxu0 %v161
    %234 = vmatmul.mubr.f32.gmra.mrb[0].mxu0 %v142
    %v235 = vpop.f32.mrb[0].mxu0
    %v236 = vadd.f32 %v154, %v235
    %v237 = vpop.f32.mrb[0].mxu0
    %v238 = vadd.f32 %v155, %v237
    %239 = vdwg.mxu0
    %v244 = vcombine.low %v230, %v232
    %v245 = vcombine.high %v230, %v232
    %v247 = vunpack.c.l.s4 1983009808
    %v248 = vunpack.c.0.s8 %v247
    %v249 = vlaneseq
    %v250 = vshrl.u32 %v249, 7
    %v251 = vsub.s32 %v248, %v250
    %v252 = vrot.slane %v244, %v251
    %v254 = vunpack.c.l.s4 1983009808
    %v255 = vunpack.c.0.s8 %v254
    %v256 = vlaneseq
    %v257 = vshrl.u32 %v256, 7
    %v258 = vsub.s32 %v255, %v257
    %v259 = vrot.slane %v245, %v258
    %v260 = vcombine.high %v252, %v252
    %v261 = vcombine.high %v259, %v259
    %v262 = vcombine.low %v236, %v238
    %v263 = vcombine.high %v236, %v238
    %v265 = vunpack.c.l.s4 1983009808
    %v266 = vunpack.c.0.s8 %v265
    %v267 = vlaneseq
    %v268 = vshrl.u32 %v267, 7
    %v269 = vsub.s32 %v266, %v268
    %v270 = vrot.slane %v262, %v269
    %v272 = vunpack.c.l.s4 1983009808
    %v273 = vunpack.c.0.s8 %v272
    %v274 = vlaneseq
    %v275 = vshrl.u32 %v274, 7
    %v276 = vsub.s32 %v273, %v275
    %v277 = vrot.slane %v263, %v276
    %v278 = vcombine.high %v270, %v270
    %v279 = vcombine.high %v277, %v277
    %vm288 = vcmask 523264
    %v290 = vsel %vm288, 0.0, 0
    %292 = vmatprep.subr.mxu0 %v67
    %293 = vmatpush1.msra.mxu0 %v66
    %294 = vmatprep.subr.mxu0 %v69
    %295 = vmatpush1.msra.mxu0 %v68
    %296 = vmatprep.subr.mxu0 %v71
    %297 = vmatpush1.msra.mxu0 %v70
    %298 = vmatprep.subr.mxu0 %v73
    %299 = vmatpush1.msra.mxu0 %v72
    %300 = vmatprep.subr.mxu0 %v75
    %301 = vmatpush1.msra.mxu0 %v74
    %302 = vmatprep.subr.mxu0 %v77
    %303 = vmatpush1.msra.mxu0 %v76
    %304 = vmatprep.subr.mxu0 %v79
    %305 = vmatpush1.msra.mxu0 %v78
    %306 = vmatprep.subr.mxu0 %v81
    %307 = vmatpush1.msra.mxu0 %v80
    %308 = vmatprep.subr.mxu0 0.0
    %309 = vmatpush1.msra.mxu0 0.0
    %310 = vmatprep.subr.mxu0 0.0
    %311 = vmatpush1.msra.mxu0 0.0
    %312 = vmatprep.subr.mxu0 0.0
    %313 = vmatpush1.msra.mxu0 0.0
    %314 = vmatprep.subr.mxu0 0.0
    %315 = vmatpush1.msra.mxu0 0.0
    %316 = vmatprep.subr.mxu0 0.0
    %317 = vmatpush1.msra.mxu0 0.0
    %318 = vmatprep.subr.mxu0 0.0
    %319 = vmatpush1.msra.mxu0 0.0
    %320 = vmatprep.subr.mxu0 0.0
    %321 = vmatpush1.msra.mxu0 0.0
    %322 = vmatprep.subr.mxu0 0.0
    %323 = vmatpush1.msra.mxu0 0.0
    %324 = vmatprep.subr.mxu0 0.0
    %325 = vmatpush1.msra.mxu0 0.0
    %326 = vmatprep.subr.mxu0 0.0
    %327 = vmatpush1.msra.mxu0 0.0
    %328 = vmatprep.subr.mxu0 0.0
    %329 = vmatpush1.msra.mxu0 0.0
    %330 = vmatprep.subr.mxu0 0.0
    %331 = vmatpush1.msra.mxu0 0.0
    %332 = vmatprep.subr.mxu0 0.0
    %333 = vmatpush1.msra.mxu0 0.0
    %334 = vmatprep.subr.mxu0 0.0
    %335 = vmatpush1.msra.mxu0 0.0
    %336 = vmatprep.subr.mxu0 0.0
    %337 = vmatpush1.msra.mxu0 0.0
    %338 = vmatprep.subr.mxu0 0.0
    %339 = vmatpush1.msra.mxu0 0.0
    %340 = vmatprep.subr.mxu0 0.0
    %341 = vmatpush1.msra.mxu0 0.0
    %342 = vmatprep.subr.mxu0 0.0
    %343 = vmatpush1.msra.mxu0 0.0
    %344 = vmatprep.subr.mxu0 0.0
    %345 = vmatpush1.msra.mxu0 0.0
    %346 = vmatprep.subr.mxu0 0.0
    %347 = vmatpush1.msra.mxu0 0.0
    %348 = vmatprep.subr.mxu0 0.0
    %349 = vmatpush1.msra.mxu0 0.0
    %350 = vmatprep.subr.mxu0 0.0
    %351 = vmatpush1.msra.mxu0 0.0
    %352 = vmatprep.subr.mxu0 0.0
    %353 = vmatpush1.msra.mxu0 0.0
    %354 = vmatprep.subr.mxu0 0.0
    %355 = vmatpush1.msra.mxu0 0.0
    %356 = vmatprep.mubr.f32.mxu0 0.0
    %357 = vmatmul.mubr.f32.gmra.mrb[0].mxu0 %v290
    %v358 = vpop.f32.mrb[0].mxu0
    %v359 = vadd.f32 0.0, %v358
    %v360 = vpop.f32.mrb[0].mxu0
    %v361 = vadd.f32 0.0, %v360
    %362 = vdwg.mxu0
    %v363 = vadd.f32 %v252, %v359
    %v364 = vxor.u32 %v363, 2147483648
    %v365 = vmul.f32 %v364, 1.442695
    %v366 = vpow.pop %v365
    %v367 = vadd.f32 %v366, 1.0
    %v368 = vrcp.pop %v367
    %v369 = vmul.f32 1.0, %v368
    %v370 = vadd.f32 %v361, %v82
    %v371 = vmul.f32 %v369, %v370
    %v372 = vrot.slane %v252, 2
    %v374 = vadd.f32 %v372, %v371
    %v375 = vtanh.pop %v374
    %v376 = vsub.f32 0.0, %v375
    %378 = vrot.lane.b32.xlu0 %v376, 64
    %v379 = vpop.permute.xlu0 %378
    %v381 = vmul.f32 %v369, %v379
    %383 = vrot.lane.b32.xlu0 %v381, 64
    %v384 = vpop.permute.xlu0 %383
    %v386 = vadd.f32 %v375, %v384
    %vm387 = vcmask 254976
    %388 = vst.msk [vmem:[#allocation2] sm:$0x3] %vm387, %v386
    %s389 = scalar_lea.vmem [#allocation2], 14
    %vm390 = vcmask 517376
    %391 = vst.msk [vmem:[%s389] sm:$0x3] %vm390, %v386
    %v394 = vunpack.c.l.s4 1983009808
    %v395 = vunpack.c.0.s8 %v394
    %v396 = vlaneseq
    %v397 = vshrl.u32 %v396, 7
    %v398 = vsub.s32 %v395, %v397
    %v399 = vrot.slane %v386, %v398
    %400 = vrot.lane.b32.xlu0 %v399, 64
    %v401 = vpop.permute.xlu0 %400
    %vm403 = vcmask 779776
    %404 = vst.msk [vmem:[%s389] sm:$0x3] %vm403, %v401
    %vm405 = vcmask 1042176
    %406 = vst.msk [vmem:[#allocation2] sm:$0x3] %vm405, %v401
    %v407 = vsel %vm288, %v386, 0
    %409 = vmatprep.subr.mxu0 %v67
    %410 = vmatpush1.msra.mxu0 %v66
    %411 = vmatprep.subr.mxu0 %v69
    %412 = vmatpush1.msra.mxu0 %v68
    %413 = vmatprep.subr.mxu0 %v71
    %414 = vmatpush1.msra.mxu0 %v70
    %415 = vmatprep.subr.mxu0 %v73
    %416 = vmatpush1.msra.mxu0 %v72
    %417 = vmatprep.subr.mxu0 %v75
    %418 = vmatpush1.msra.mxu0 %v74
    %419 = vmatprep.subr.mxu0 %v77
    %420 = vmatpush1.msra.mxu0 %v76
    %421 = vmatprep.subr.mxu0 %v79
    %422 = vmatpush1.msra.mxu0 %v78
    %423 = vmatprep.subr.mxu0 %v81
    %424 = vmatpush1.msra.mxu0 %v80
    %425 = vmatprep.subr.mxu0 0.0
    %426 = vmatpush1.msra.mxu0 0.0
    %427 = vmatprep.subr.mxu0 0.0
    %428 = vmatpush1.msra.mxu0 0.0
    %429 = vmatprep.subr.mxu0 0.0
    %430 = vmatpush1.msra.mxu0 0.0
    %431 = vmatprep.subr.mxu0 0.0
    %432 = vmatpush1.msra.mxu0 0.0
    %433 = vmatprep.subr.mxu0 0.0
    %434 = vmatpush1.msra.mxu0 0.0
    %435 = vmatprep.subr.mxu0 0.0
    %436 = vmatpush1.msra.mxu0 0.0
    %437 = vmatprep.subr.mxu0 0.0
    %438 = vmatpush1.msra.mxu0 0.0
    %439 = vmatprep.subr.mxu0 0.0
    %440 = vmatpush1.msra.mxu0 0.0
    %441 = vmatprep.subr.mxu0 0.0
    %442 = vmatpush1.msra.mxu0 0.0
    %443 = vmatprep.subr.mxu0 0.0
    %444 = vmatpush1.msra.mxu0 0.0
    %445 = vmatprep.subr.mxu0 0.0
    %446 = vmatpush1.msra.mxu0 0.0
    %447 = vmatprep.subr.mxu0 0.0
    %448 = vmatpush1.msra.mxu0 0.0
    %449 = vmatprep.subr.mxu0 0.0
    %450 = vmatpush1.msra.mxu0 0.0
    %451 = vmatprep.subr.mxu0 0.0
    %452 = vmatpush1.msra.mxu0 0.0
    %453 = vmatprep.subr.mxu0 0.0
    %454 = vmatpush1.msra.mxu0 0.0
    %455 = vmatprep.subr.mxu0 0.0
    %456 = vmatpush1.msra.mxu0 0.0
    %457 = vmatprep.subr.mxu0 0.0
    %458 = vmatpush1.msra.mxu0 0.0
    %459 = vmatprep.subr.mxu0 0.0
    %460 = vmatpush1.msra.mxu0 0.0
    %461 = vmatprep.subr.mxu0 0.0
    %462 = vmatpush1.msra.mxu0 0.0
    %463 = vmatprep.subr.mxu0 0.0
    %464 = vmatpush1.msra.mxu0 0.0
    %465 = vmatprep.subr.mxu0 0.0
    %466 = vmatpush1.msra.mxu0 0.0
    %467 = vmatprep.subr.mxu0 0.0
    %468 = vmatpush1.msra.mxu0 0.0
    %469 = vmatprep.subr.mxu0 0.0
    %470 = vmatpush1.msra.mxu0 0.0
    %471 = vmatprep.subr.mxu0 0.0
    %472 = vmatpush1.msra.mxu0 0.0
    %473 = vmatprep.mubr.f32.mxu0 0.0
    %474 = vmatmul.mubr.f32.gmra.mrb[0].mxu0 %v407
    %v475 = vpop.f32.mrb[0].mxu0
    %v476 = vadd.f32 0.0, %v475
    %v477 = vpop.f32.mrb[0].mxu0
    %v478 = vadd.f32 0.0, %v477
    %479 = vdwg.mxu0
    %v480 = vadd.f32 %v260, %v476
    %v481 = vxor.u32 %v480, 2147483648
    %v482 = vmul.f32 %v481, 1.442695
    %v483 = vpow.pop %v482
    %v484 = vadd.f32 %v483, 1.0
    %v485 = vrcp.pop %v484
    %v486 = vmul.f32 1.0, %v485
    %v487 = vadd.f32 %v478, %v82
    %v488 = vmul.f32 %v486, %v487
    %v489 = vrot.slane %v260, 2
    %v491 = vadd.f32 %v489, %v488
    %v492 = vtanh.pop %v491
    %v493 = vsub.f32 %v386, %v492
    %495 = vrot.lane.b32.xlu0 %v493, 64
    %v496 = vpop.permute.xlu0 %495
    %v498 = vmul.f32 %v486, %v496
    %500 = vrot.lane.b32.xlu0 %v498, 64
    %v501 = vpop.permute.xlu0 %500
    %v503 = vadd.f32 %v492, %v501
    %s504 = scalar_lea.vmem [#allocation2], 2
    %505 = vst.msk [vmem:[%s504] sm:$0x3] %vm387, %v503
    %s506 = scalar_lea.vmem [#allocation2], 12
    %507 = vst.msk [vmem:[%s506] sm:$0x3] %vm390, %v503
    %v510 = vunpack.c.l.s4 1983009808
    %v511 = vunpack.c.0.s8 %v510
    %v512 = vlaneseq
    %v513 = vshrl.u32 %v512, 7
    %v514 = vsub.s32 %v511, %v513
    %v515 = vrot.slane %v503, %v514
    %516 = vrot.lane.b32.xlu0 %v515, 64
    %v517 = vpop.permute.xlu0 %516
    %519 = vst.msk [vmem:[%s506] sm:$0x3] %vm403, %v517
    %520 = vst.msk [vmem:[%s504] sm:$0x3] %vm405, %v517
    %v521 = vsel %vm288, %v503, 0
    %523 = vmatprep.subr.mxu0 %v67
    %524 = vmatpush1.msra.mxu0 %v66
    %525 = vmatprep.subr.mxu0 %v69
    %526 = vmatpush1.msra.mxu0 %v68
    %527 = vmatprep.subr.mxu0 %v71
    %528 = vmatpush1.msra.mxu0 %v70
    %529 = vmatprep.subr.mxu0 %v73
    %530 = vmatpush1.msra.mxu0 %v72
    %531 = vmatprep.subr.mxu0 %v75
    %532 = vmatpush1.msra.mxu0 %v74
    %533 = vmatprep.subr.mxu0 %v77
    %534 = vmatpush1.msra.mxu0 %v76
    %535 = vmatprep.subr.mxu0 %v79
    %536 = vmatpush1.msra.mxu0 %v78
    %537 = vmatprep.subr.mxu0 %v81
    %538 = vmatpush1.msra.mxu0 %v80
    %539 = vmatprep.subr.mxu0 0.0
    %540 = vmatpush1.msra.mxu0 0.0
    %541 = vmatprep.subr.mxu0 0.0
    %542 = vmatpush1.msra.mxu0 0.0
    %543 = vmatprep.subr.mxu0 0.0
    %544 = vmatpush1.msra.mxu0 0.0
    %545 = vmatprep.subr.mxu0 0.0
    %546 = vmatpush1.msra.mxu0 0.0
    %547 = vmatprep.subr.mxu0 0.0
    %548 = vmatpush1.msra.mxu0 0.0
    %549 = vmatprep.subr.mxu0 0.0
    %550 = vmatpush1.msra.mxu0 0.0
    %551 = vmatprep.subr.mxu0 0.0
    %552 = vmatpush1.msra.mxu0 0.0
    %553 = vmatprep.subr.mxu0 0.0
    %554 = vmatpush1.msra.mxu0 0.0
    %555 = vmatprep.subr.mxu0 0.0
    %556 = vmatpush1.msra.mxu0 0.0
    %557 = vmatprep.subr.mxu0 0.0
    %558 = vmatpush1.msra.mxu0 0.0
    %559 = vmatprep.subr.mxu0 0.0
    %560 = vmatpush1.msra.mxu0 0.0
    %561 = vmatprep.subr.mxu0 0.0
    %562 = vmatpush1.msra.mxu0 0.0
    %563 = vmatprep.subr.mxu0 0.0
    %564 = vmatpush1.msra.mxu0 0.0
    %565 = vmatprep.subr.mxu0 0.0
    %566 = vmatpush1.msra.mxu0 0.0
    %567 = vmatprep.subr.mxu0 0.0
    %568 = vmatpush1.msra.mxu0 0.0
    %569 = vmatprep.subr.mxu0 0.0
    %570 = vmatpush1.msra.mxu0 0.0
    %571 = vmatprep.subr.mxu0 0.0
    %572 = vmatpush1.msra.mxu0 0.0
    %573 = vmatprep.subr.mxu0 0.0
    %574 = vmatpush1.msra.mxu0 0.0
    %575 = vmatprep.subr.mxu0 0.0
    %576 = vmatpush1.msra.mxu0 0.0
    %577 = vmatprep.subr.mxu0 0.0
    %578 = vmatpush1.msra.mxu0 0.0
    %579 = vmatprep.subr.mxu0 0.0
    %580 = vmatpush1.msra.mxu0 0.0
    %581 = vmatprep.subr.mxu0 0.0
    %582 = vmatpush1.msra.mxu0 0.0
    %583 = vmatprep.subr.mxu0 0.0
    %584 = vmatpush1.msra.mxu0 0.0
    %585 = vmatprep.subr.mxu0 0.0
    %586 = vmatpush1.msra.mxu0 0.0
    %587 = vmatprep.mubr.f32.mxu0 0.0
    %588 = vmatmul.mubr.f32.gmra.mrb[0].mxu0 %v521
    %v589 = vpop.f32.mrb[0].mxu0
    %v590 = vadd.f32 0.0, %v589
    %v591 = vpop.f32.mrb[0].mxu0
    %v592 = vadd.f32 0.0, %v591
    %593 = vdwg.mxu0
    %v594 = vadd.f32 %v259, %v590
    %v595 = vxor.u32 %v594, 2147483648
    %v596 = vmul.f32 %v595, 1.442695
    %v597 = vpow.pop %v596
    %v598 = vadd.f32 %v597, 1.0
    %v599 = vrcp.pop %v598
    %v600 = vmul.f32 1.0, %v599
    %v601 = vadd.f32 %v592, %v82
    %v602 = vmul.f32 %v600, %v601
    %v603 = vrot.slane %v259, 2
    %v605 = vadd.f32 %v603, %v602
    %v606 = vtanh.pop %v605
    %v607 = vsub.f32 %v503, %v606
    %609 = vrot.lane.b32.xlu0 %v607, 64
    %v610 = vpop.permute.xlu0 %609
    %v612 = vmul.f32 %v600, %v610
    %614 = vrot.lane.b32.xlu0 %v612, 64
    %v615 = vpop.permute.xlu0 %614
    %v617 = vadd.f32 %v606, %v615
    %s618 = scalar_lea.vmem [#allocation2], 4
    %619 = vst.msk [vmem:[%s618] sm:$0x3] %vm387, %v617
    %s620 = scalar_lea.vmem [#allocation2], 10
    %621 = vst.msk [vmem:[%s620] sm:$0x3] %vm390, %v617
    %v624 = vunpack.c.l.s4 1983009808
    %v625 = vunpack.c.0.s8 %v624
    %v626 = vlaneseq
    %v627 = vshrl.u32 %v626, 7
    %v628 = vsub.s32 %v625, %v627
    %v629 = vrot.slane %v617, %v628
    %630 = vrot.lane.b32.xlu0 %v629, 64
    %v631 = vpop.permute.xlu0 %630
    %633 = vst.msk [vmem:[%s620] sm:$0x3] %vm403, %v631
    %634 = vst.msk [vmem:[%s618] sm:$0x3] %vm405, %v631
    %v635 = vsel %vm288, %v617, 0
    %637 = vmatprep.subr.mxu0 %v67
    %638 = vmatpush1.msra.mxu0 %v66
    %639 = vmatprep.subr.mxu0 %v69
    %640 = vmatpush1.msra.mxu0 %v68
    %641 = vmatprep.subr.mxu0 %v71
    %642 = vmatpush1.msra.mxu0 %v70
    %643 = vmatprep.subr.mxu0 %v73
    %644 = vmatpush1.msra.mxu0 %v72
    %645 = vmatprep.subr.mxu0 %v75
    %646 = vmatpush1.msra.mxu0 %v74
    %647 = vmatprep.subr.mxu0 %v77
    %648 = vmatpush1.msra.mxu0 %v76
    %649 = vmatprep.subr.mxu0 %v79
    %650 = vmatpush1.msra.mxu0 %v78
    %651 = vmatprep.subr.mxu0 %v81
    %652 = vmatpush1.msra.mxu0 %v80
    %653 = vmatprep.subr.mxu0 0.0
    %654 = vmatpush1.msra.mxu0 0.0
    %655 = vmatprep.subr.mxu0 0.0
    %656 = vmatpush1.msra.mxu0 0.0
    %657 = vmatprep.subr.mxu0 0.0
    %658 = vmatpush1.msra.mxu0 0.0
    %659 = vmatprep.subr.mxu0 0.0
    %660 = vmatpush1.msra.mxu0 0.0
    %661 = vmatprep.subr.mxu0 0.0
    %662 = vmatpush1.msra.mxu0 0.0
    %663 = vmatprep.subr.mxu0 0.0
    %664 = vmatpush1.msra.mxu0 0.0
    %665 = vmatprep.subr.mxu0 0.0
    %666 = vmatpush1.msra.mxu0 0.0
    %667 = vmatprep.subr.mxu0 0.0
    %668 = vmatpush1.msra.mxu0 0.0
    %669 = vmatprep.subr.mxu0 0.0
    %670 = vmatpush1.msra.mxu0 0.0
    %671 = vmatprep.subr.mxu0 0.0
    %672 = vmatpush1.msra.mxu0 0.0
    %673 = vmatprep.subr.mxu0 0.0
    %674 = vmatpush1.msra.mxu0 0.0
    %675 = vmatprep.subr.mxu0 0.0
    %676 = vmatpush1.msra.mxu0 0.0
    %677 = vmatprep.subr.mxu0 0.0
    %678 = vmatpush1.msra.mxu0 0.0
    %679 = vmatprep.subr.mxu0 0.0
    %680 = vmatpush1.msra.mxu0 0.0
    %681 = vmatprep.subr.mxu0 0.0
    %682 = vmatpush1.msra.mxu0 0.0
    %683 = vmatprep.subr.mxu0 0.0
    %684 = vmatpush1.msra.mxu0 0.0
    %685 = vmatprep.subr.mxu0 0.0
    %686 = vmatpush1.msra.mxu0 0.0
    %687 = vmatprep.subr.mxu0 0.0
    %688 = vmatpush1.msra.mxu0 0.0
    %689 = vmatprep.subr.mxu0 0.0
    %690 = vmatpush1.msra.mxu0 0.0
    %691 = vmatprep.subr.mxu0 0.0
    %692 = vmatpush1.msra.mxu0 0.0
    %693 = vmatprep.subr.mxu0 0.0
    %694 = vmatpush1.msra.mxu0 0.0
    %695 = vmatprep.subr.mxu0 0.0
    %696 = vmatpush1.msra.mxu0 0.0
    %697 = vmatprep.subr.mxu0 0.0
    %698 = vmatpush1.msra.mxu0 0.0
    %699 = vmatprep.subr.mxu0 0.0
    %700 = vmatpush1.msra.mxu0 0.0
    %701 = vmatprep.mubr.f32.mxu0 0.0
    %702 = vmatmul.mubr.f32.gmra.mrb[0].mxu0 %v635
    %v703 = vpop.f32.mrb[0].mxu0
    %v704 = vadd.f32 0.0, %v703
    %v705 = vpop.f32.mrb[0].mxu0
    %v706 = vadd.f32 0.0, %v705
    %707 = vdwg.mxu0
    %v708 = vadd.f32 %v261, %v704
    %v709 = vxor.u32 %v708, 2147483648
    %v710 = vmul.f32 %v709, 1.442695
    %v711 = vpow.pop %v710
    %v712 = vadd.f32 %v711, 1.0
    %v713 = vrcp.pop %v712
    %v714 = vmul.f32 1.0, %v713
    %v715 = vadd.f32 %v706, %v82
    %v716 = vmul.f32 %v714, %v715
    %v717 = vrot.slane %v261, 2
    %v719 = vadd.f32 %v717, %v716
    %v720 = vtanh.pop %v719
    %v721 = vsub.f32 %v617, %v720
    %723 = vrot.lane.b32.xlu0 %v721, 64
    %v724 = vpop.permute.xlu0 %723
    %v726 = vmul.f32 %v714, %v724
    %728 = vrot.lane.b32.xlu0 %v726, 64
    %v729 = vpop.permute.xlu0 %728
    %v731 = vadd.f32 %v720, %v729
    %s732 = scalar_lea.vmem [#allocation2], 6
    %733 = vst.msk [vmem:[%s732] sm:$0x3] %vm387, %v731
    %s734 = scalar_lea.vmem [#allocation2], 8
    %735 = vst.msk [vmem:[%s734] sm:$0x3] %vm390, %v731
    %v738 = vunpack.c.l.s4 1983009808
    %v739 = vunpack.c.0.s8 %v738
    %v740 = vlaneseq
    %v741 = vshrl.u32 %v740, 7
    %v742 = vsub.s32 %v739, %v741
    %v743 = vrot.slane %v731, %v742
    %744 = vrot.lane.b32.xlu0 %v743, 64
    %v745 = vpop.permute.xlu0 %744
    %747 = vst.msk [vmem:[%s734] sm:$0x3] %vm403, %v745
    %748 = vst.msk [vmem:[%s732] sm:$0x3] %vm405, %v745
    %v749 = vsel %vm288, %v731, 0
    %751 = vmatprep.subr.mxu0 %v67
    %752 = vmatpush1.msra.mxu0 %v66
    %753 = vmatprep.subr.mxu0 %v69
    %754 = vmatpush1.msra.mxu0 %v68
    %755 = vmatprep.subr.mxu0 %v71
    %756 = vmatpush1.msra.mxu0 %v70
    %757 = vmatprep.subr.mxu0 %v73
    %758 = vmatpush1.msra.mxu0 %v72
    %759 = vmatprep.subr.mxu0 %v75
    %760 = vmatpush1.msra.mxu0 %v74
    %761 = vmatprep.subr.mxu0 %v77
    %762 = vmatpush1.msra.mxu0 %v76
    %763 = vmatprep.subr.mxu0 %v79
    %764 = vmatpush1.msra.mxu0 %v78
    %765 = vmatprep.subr.mxu0 %v81
    %766 = vmatpush1.msra.mxu0 %v80
    %767 = vmatprep.subr.mxu0 0.0
    %768 = vmatpush1.msra.mxu0 0.0
    %769 = vmatprep.subr.mxu0 0.0
    %770 = vmatpush1.msra.mxu0 0.0
    %771 = vmatprep.subr.mxu0 0.0
    %772 = vmatpush1.msra.mxu0 0.0
    %773 = vmatprep.subr.mxu0 0.0
    %774 = vmatpush1.msra.mxu0 0.0
    %775 = vmatprep.subr.mxu0 0.0
    %776 = vmatpush1.msra.mxu0 0.0
    %777 = vmatprep.subr.mxu0 0.0
    %778 = vmatpush1.msra.mxu0 0.0
    %779 = vmatprep.subr.mxu0 0.0
    %780 = vmatpush1.msra.mxu0 0.0
    %781 = vmatprep.subr.mxu0 0.0
    %782 = vmatpush1.msra.mxu0 0.0
    %783 = vmatprep.subr.mxu0 0.0
    %784 = vmatpush1.msra.mxu0 0.0
    %785 = vmatprep.subr.mxu0 0.0
    %786 = vmatpush1.msra.mxu0 0.0
    %787 = vmatprep.subr.mxu0 0.0
    %788 = vmatpush1.msra.mxu0 0.0
    %789 = vmatprep.subr.mxu0 0.0
    %790 = vmatpush1.msra.mxu0 0.0
    %791 = vmatprep.subr.mxu0 0.0
    %792 = vmatpush1.msra.mxu0 0.0
    %793 = vmatprep.subr.mxu0 0.0
    %794 = vmatpush1.msra.mxu0 0.0
    %795 = vmatprep.subr.mxu0 0.0
    %796 = vmatpush1.msra.mxu0 0.0
    %797 = vmatprep.subr.mxu0 0.0
    %798 = vmatpush1.msra.mxu0 0.0
    %799 = vmatprep.subr.mxu0 0.0
    %800 = vmatpush1.msra.mxu0 0.0
    %801 = vmatprep.subr.mxu0 0.0
    %802 = vmatpush1.msra.mxu0 0.0
    %803 = vmatprep.subr.mxu0 0.0
    %804 = vmatpush1.msra.mxu0 0.0
    %805 = vmatprep.subr.mxu0 0.0
    %806 = vmatpush1.msra.mxu0 0.0
    %807 = vmatprep.subr.mxu0 0.0
    %808 = vmatpush1.msra.mxu0 0.0
    %809 = vmatprep.subr.mxu0 0.0
    %810 = vmatpush1.msra.mxu0 0.0
    %811 = vmatprep.subr.mxu0 0.0
    %812 = vmatpush1.msra.mxu0 0.0
    %813 = vmatprep.subr.mxu0 0.0
    %814 = vmatpush1.msra.mxu0 0.0
    %815 = vmatprep.mubr.f32.mxu0 0.0
    %816 = vmatmul.mubr.f32.gmra.mrb[0].mxu0 %v749
    %v817 = vpop.f32.mrb[0].mxu0
    %v818 = vadd.f32 0.0, %v817
    %v819 = vpop.f32.mrb[0].mxu0
    %v820 = vadd.f32 0.0, %v819
    %821 = vdwg.mxu0
    %v822 = vadd.f32 %v270, %v818
    %v823 = vxor.u32 %v822, 2147483648
    %v824 = vmul.f32 %v823, 1.442695
    %v825 = vpow.pop %v824
    %v826 = vadd.f32 %v825, 1.0
    %v827 = vrcp.pop %v826
    %v828 = vmul.f32 1.0, %v827
    %v829 = vadd.f32 %v820, %v82
    %v830 = vmul.f32 %v828, %v829
    %v831 = vrot.slane %v270, 2
    %v833 = vadd.f32 %v831, %v830
    %v834 = vtanh.pop %v833
    %v835 = vsub.f32 %v731, %v834
    %837 = vrot.lane.b32.xlu0 %v835, 64
    %v838 = vpop.permute.xlu0 %837
    %v840 = vmul.f32 %v828, %v838
    %842 = vrot.lane.b32.xlu0 %v840, 64
    %v843 = vpop.permute.xlu0 %842
    %v845 = vadd.f32 %v834, %v843
    %846 = vst.msk [vmem:[%s734] sm:$0x3] %vm387, %v845
    %847 = vst.msk [vmem:[%s732] sm:$0x3] %vm390, %v845
    %v850 = vunpack.c.l.s4 1983009808
    %v851 = vunpack.c.0.s8 %v850
    %v852 = vlaneseq
    %v853 = vshrl.u32 %v852, 7
    %v854 = vsub.s32 %v851, %v853
    %v855 = vrot.slane %v845, %v854
    %856 = vrot.lane.b32.xlu0 %v855, 64
    %v857 = vpop.permute.xlu0 %856
    %859 = vst.msk [vmem:[%s732] sm:$0x3] %vm403, %v857
    %860 = vst.msk [vmem:[%s734] sm:$0x3] %vm405, %v857
    %v861 = vsel %vm288, %v845, 0
    %863 = vmatprep.subr.mxu0 %v67
    %864 = vmatpush1.msra.mxu0 %v66
    %865 = vmatprep.subr.mxu0 %v69
    %866 = vmatpush1.msra.mxu0 %v68
    %867 = vmatprep.subr.mxu0 %v71
    %868 = vmatpush1.msra.mxu0 %v70
    %869 = vmatprep.subr.mxu0 %v73
    %870 = vmatpush1.msra.mxu0 %v72
    %871 = vmatprep.subr.mxu0 %v75
    %872 = vmatpush1.msra.mxu0 %v74
    %873 = vmatprep.subr.mxu0 %v77
    %874 = vmatpush1.msra.mxu0 %v76
    %875 = vmatprep.subr.mxu0 %v79
    %876 = vmatpush1.msra.mxu0 %v78
    %877 = vmatprep.subr.mxu0 %v81
    %878 = vmatpush1.msra.mxu0 %v80
    %879 = vmatprep.subr.mxu0 0.0
    %880 = vmatpush1.msra.mxu0 0.0
    %881 = vmatprep.subr.mxu0 0.0
    %882 = vmatpush1.msra.mxu0 0.0
    %883 = vmatprep.subr.mxu0 0.0
    %884 = vmatpush1.msra.mxu0 0.0
    %885 = vmatprep.subr.mxu0 0.0
    %886 = vmatpush1.msra.mxu0 0.0
    %887 = vmatprep.subr.mxu0 0.0
    %888 = vmatpush1.msra.mxu0 0.0
    %889 = vmatprep.subr.mxu0 0.0
    %890 = vmatpush1.msra.mxu0 0.0
    %891 = vmatprep.subr.mxu0 0.0
    %892 = vmatpush1.msra.mxu0 0.0
    %893 = vmatprep.subr.mxu0 0.0
    %894 = vmatpush1.msra.mxu0 0.0
    %895 = vmatprep.subr.mxu0 0.0
    %896 = vmatpush1.msra.mxu0 0.0
    %897 = vmatprep.subr.mxu0 0.0
    %898 = vmatpush1.msra.mxu0 0.0
    %899 = vmatprep.subr.mxu0 0.0
    %900 = vmatpush1.msra.mxu0 0.0
    %901 = vmatprep.subr.mxu0 0.0
    %902 = vmatpush1.msra.mxu0 0.0
    %903 = vmatprep.subr.mxu0 0.0
    %904 = vmatpush1.msra.mxu0 0.0
    %905 = vmatprep.subr.mxu0 0.0
    %906 = vmatpush1.msra.mxu0 0.0
    %907 = vmatprep.subr.mxu0 0.0
    %908 = vmatpush1.msra.mxu0 0.0
    %909 = vmatprep.subr.mxu0 0.0
    %910 = vmatpush1.msra.mxu0 0.0
    %911 = vmatprep.subr.mxu0 0.0
    %912 = vmatpush1.msra.mxu0 0.0
    %913 = vmatprep.subr.mxu0 0.0
    %914 = vmatpush1.msra.mxu0 0.0
    %915 = vmatprep.subr.mxu0 0.0
    %916 = vmatpush1.msra.mxu0 0.0
    %917 = vmatprep.subr.mxu0 0.0
    %918 = vmatpush1.msra.mxu0 0.0
    %919 = vmatprep.subr.mxu0 0.0
    %920 = vmatpush1.msra.mxu0 0.0
    %921 = vmatprep.subr.mxu0 0.0
    %922 = vmatpush1.msra.mxu0 0.0
    %923 = vmatprep.subr.mxu0 0.0
    %924 = vmatpush1.msra.mxu0 0.0
    %925 = vmatprep.subr.mxu0 0.0
    %926 = vmatpush1.msra.mxu0 0.0
    %927 = vmatprep.mubr.f32.mxu0 0.0
    %928 = vmatmul.mubr.f32.gmra.mrb[0].mxu0 %v861
    %v929 = vpop.f32.mrb[0].mxu0
    %v930 = vadd.f32 0.0, %v929
    %v931 = vpop.f32.mrb[0].mxu0
    %v932 = vadd.f32 0.0, %v931
    %933 = vdwg.mxu0
    %v934 = vadd.f32 %v278, %v930
    %v935 = vxor.u32 %v934, 2147483648
    %v936 = vmul.f32 %v935, 1.442695
    %v937 = vpow.pop %v936
    %v938 = vadd.f32 %v937, 1.0
    %v939 = vrcp.pop %v938
    %v940 = vmul.f32 1.0, %v939
    %v941 = vadd.f32 %v932, %v82
    %v942 = vmul.f32 %v940, %v941
    %v943 = vrot.slane %v278, 2
    %v945 = vadd.f32 %v943, %v942
    %v946 = vtanh.pop %v945
    %v947 = vsub.f32 %v845, %v946
    %949 = vrot.lane.b32.xlu0 %v947, 64
    %v950 = vpop.permute.xlu0 %949
    %v952 = vmul.f32 %v940, %v950
    %954 = vrot.lane.b32.xlu0 %v952, 64
    %v955 = vpop.permute.xlu0 %954
    %v957 = vadd.f32 %v946, %v955
    %958 = vst.msk [vmem:[%s620] sm:$0x3] %vm387, %v957
    %959 = vst.msk [vmem:[%s618] sm:$0x3] %vm390, %v957
    %v962 = vunpack.c.l.s4 1983009808
    %v963 = vunpack.c.0.s8 %v962
    %v964 = vlaneseq
    %v965 = vshrl.u32 %v964, 7
    %v966 = vsub.s32 %v963, %v965
    %v967 = vrot.slane %v957, %v966
    %968 = vrot.lane.b32.xlu0 %v967, 64
    %v969 = vpop.permute.xlu0 %968
    %971 = vst.msk [vmem:[%s618] sm:$0x3] %vm403, %v969
    %972 = vst.msk [vmem:[%s620] sm:$0x3] %vm405, %v969
    %v973 = vsel %vm288, %v957, 0
    %975 = vmatprep.subr.mxu0 %v67
    %976 = vmatpush1.msra.mxu0 %v66
    %977 = vmatprep.subr.mxu0 %v69
    %978 = vmatpush1.msra.mxu0 %v68
    %979 = vmatprep.subr.mxu0 %v71
    %980 = vmatpush1.msra.mxu0 %v70
    %981 = vmatprep.subr.mxu0 %v73
    %982 = vmatpush1.msra.mxu0 %v72
    %983 = vmatprep.subr.mxu0 %v75
    %984 = vmatpush1.msra.mxu0 %v74
    %985 = vmatprep.subr.mxu0 %v77
    %986 = vmatpush1.msra.mxu0 %v76
    %987 = vmatprep.subr.mxu0 %v79
    %988 = vmatpush1.msra.mxu0 %v78
    %989 = vmatprep.subr.mxu0 %v81
    %990 = vmatpush1.msra.mxu0 %v80
    %991 = vmatprep.subr.mxu0 0.0
    %992 = vmatpush1.msra.mxu0 0.0
    %993 = vmatprep.subr.mxu0 0.0
    %994 = vmatpush1.msra.mxu0 0.0
    %995 = vmatprep.subr.mxu0 0.0
    %996 = vmatpush1.msra.mxu0 0.0
    %997 = vmatprep.subr.mxu0 0.0
    %998 = vmatpush1.msra.mxu0 0.0
    %999 = vmatprep.subr.mxu0 0.0
    %1000 = vmatpush1.msra.mxu0 0.0
    %1001 = vmatprep.subr.mxu0 0.0
    %1002 = vmatpush1.msra.mxu0 0.0
    %1003 = vmatprep.subr.mxu0 0.0
    %1004 = vmatpush1.msra.mxu0 0.0
    %1005 = vmatprep.subr.mxu0 0.0
    %1006 = vmatpush1.msra.mxu0 0.0
    %1007 = vmatprep.subr.mxu0 0.0
    %1008 = vmatpush1.msra.mxu0 0.0
    %1009 = vmatprep.subr.mxu0 0.0
    %1010 = vmatpush1.msra.mxu0 0.0
    %1011 = vmatprep.subr.mxu0 0.0
    %1012 = vmatpush1.msra.mxu0 0.0
    %1013 = vmatprep.subr.mxu0 0.0
    %1014 = vmatpush1.msra.mxu0 0.0
    %1015 = vmatprep.subr.mxu0 0.0
    %1016 = vmatpush1.msra.mxu0 0.0
    %1017 = vmatprep.subr.mxu0 0.0
    %1018 = vmatpush1.msra.mxu0 0.0
    %1019 = vmatprep.subr.mxu0 0.0
    %1020 = vmatpush1.msra.mxu0 0.0
    %1021 = vmatprep.subr.mxu0 0.0
    %1022 = vmatpush1.msra.mxu0 0.0
    %1023 = vmatprep.subr.mxu0 0.0
    %1024 = vmatpush1.msra.mxu0 0.0
    %1025 = vmatprep.subr.mxu0 0.0
    %1026 = vmatpush1.msra.mxu0 0.0
    %1027 = vmatprep.subr.mxu0 0.0
    %1028 = vmatpush1.msra.mxu0 0.0
    %1029 = vmatprep.subr.mxu0 0.0
    %1030 = vmatpush1.msra.mxu0 0.0
    %1031 = vmatprep.subr.mxu0 0.0
    %1032 = vmatpush1.msra.mxu0 0.0
    %1033 = vmatprep.subr.mxu0 0.0
    %1034 = vmatpush1.msra.mxu0 0.0
    %1035 = vmatprep.subr.mxu0 0.0
    %1036 = vmatpush1.msra.mxu0 0.0
    %1037 = vmatprep.subr.mxu0 0.0
    %1038 = vmatpush1.msra.mxu0 0.0
    %1039 = vmatprep.mubr.f32.mxu0 0.0
    %1040 = vmatmul.mubr.f32.gmra.mrb[0].mxu0 %v973
    %v1041 = vpop.f32.mrb[0].mxu0
    %v1042 = vadd.f32 0.0, %v1041
    %v1043 = vpop.f32.mrb[0].mxu0
    %v1044 = vadd.f32 0.0, %v1043
    %1045 = vdwg.mxu0
    %v1046 = vadd.f32 %v277, %v1042
    %v1047 = vxor.u32 %v1046, 2147483648
    %v1048 = vmul.f32 %v1047, 1.442695
    %v1049 = vpow.pop %v1048
    %v1050 = vadd.f32 %v1049, 1.0
    %v1051 = vrcp.pop %v1050
    %v1052 = vmul.f32 1.0, %v1051
    %v1053 = vadd.f32 %v1044, %v82
    %v1054 = vmul.f32 %v1052, %v1053
    %v1055 = vrot.slane %v277, 2
    %v1057 = vadd.f32 %v1055, %v1054
    %v1058 = vtanh.pop %v1057
    %v1059 = vsub.f32 %v957, %v1058
    %1061 = vrot.lane.b32.xlu0 %v1059, 64
    %v1062 = vpop.permute.xlu0 %1061
    %v1064 = vmul.f32 %v1052, %v1062
    %1066 = vrot.lane.b32.xlu0 %v1064, 64
    %v1067 = vpop.permute.xlu0 %1066
    %v1069 = vadd.f32 %v1058, %v1067
    %1070 = vst.msk [vmem:[%s506] sm:$0x3] %vm387, %v1069
    %1071 = vst.msk [vmem:[%s504] sm:$0x3] %vm390, %v1069
    %v1074 = vunpack.c.l.s4 1983009808
    %v1075 = vunpack.c.0.s8 %v1074
    %v1076 = vlaneseq
    %v1077 = vshrl.u32 %v1076, 7
    %v1078 = vsub.s32 %v1075, %v1077
    %v1079 = vrot.slane %v1069, %v1078
    %1080 = vrot.lane.b32.xlu0 %v1079, 64
    %v1081 = vpop.permute.xlu0 %1080
    %1083 = vst.msk [vmem:[%s504] sm:$0x3] %vm403, %v1081
    %1084 = vst.msk [vmem:[%s506] sm:$0x3] %vm405, %v1081
    %v1085 = vsel %vm288, %v1069, 0
    %1087 = vmatprep.subr.mxu0 %v67
    %1088 = vmatpush1.msra.mxu0 %v66
    %1089 = vmatprep.subr.mxu0 %v69
    %1090 = vmatpush1.msra.mxu0 %v68
    %1091 = vmatprep.subr.mxu0 %v71
    %1092 = vmatpush1.msra.mxu0 %v70
    %1093 = vmatprep.subr.mxu0 %v73
    %1094 = vmatpush1.msra.mxu0 %v72
    %1095 = vmatprep.subr.mxu0 %v75
    %1096 = vmatpush1.msra.mxu0 %v74
    %1097 = vmatprep.subr.mxu0 %v77
    %1098 = vmatpush1.msra.mxu0 %v76
    %1099 = vmatprep.subr.mxu0 %v79
    %1100 = vmatpush1.msra.mxu0 %v78
    %1101 = vmatprep.subr.mxu0 %v81
    %1102 = vmatpush1.msra.mxu0 %v80
    %1103 = vmatprep.subr.mxu0 0.0
    %1104 = vmatpush1.msra.mxu0 0.0
    %1105 = vmatprep.subr.mxu0 0.0
    %1106 = vmatpush1.msra.mxu0 0.0
    %1107 = vmatprep.subr.mxu0 0.0
    %1108 = vmatpush1.msra.mxu0 0.0
    %1109 = vmatprep.subr.mxu0 0.0
    %1110 = vmatpush1.msra.mxu0 0.0
    %1111 = vmatprep.subr.mxu0 0.0
    %1112 = vmatpush1.msra.mxu0 0.0
    %1113 = vmatprep.subr.mxu0 0.0
    %1114 = vmatpush1.msra.mxu0 0.0
    %1115 = vmatprep.subr.mxu0 0.0
    %1116 = vmatpush1.msra.mxu0 0.0
    %1117 = vmatprep.subr.mxu0 0.0
    %1118 = vmatpush1.msra.mxu0 0.0
    %1119 = vmatprep.subr.mxu0 0.0
    %1120 = vmatpush1.msra.mxu0 0.0
    %1121 = vmatprep.subr.mxu0 0.0
    %1122 = vmatpush1.msra.mxu0 0.0
    %1123 = vmatprep.subr.mxu0 0.0
    %1124 = vmatpush1.msra.mxu0 0.0
    %1125 = vmatprep.subr.mxu0 0.0
    %1126 = vmatpush1.msra.mxu0 0.0
    %1127 = vmatprep.subr.mxu0 0.0
    %1128 = vmatpush1.msra.mxu0 0.0
    %1129 = vmatprep.subr.mxu0 0.0
    %1130 = vmatpush1.msra.mxu0 0.0
    %1131 = vmatprep.subr.mxu0 0.0
    %1132 = vmatpush1.msra.mxu0 0.0
    %1133 = vmatprep.subr.mxu0 0.0
    %1134 = vmatpush1.msra.mxu0 0.0
    %1135 = vmatprep.subr.mxu0 0.0
    %1136 = vmatpush1.msra.mxu0 0.0
    %1137 = vmatprep.subr.mxu0 0.0
    %1138 = vmatpush1.msra.mxu0 0.0
    %1139 = vmatprep.subr.mxu0 0.0
    %1140 = vmatpush1.msra.mxu0 0.0
    %1141 = vmatprep.subr.mxu0 0.0
    %1142 = vmatpush1.msra.mxu0 0.0
    %1143 = vmatprep.subr.mxu0 0.0
    %1144 = vmatpush1.msra.mxu0 0.0
    %1145 = vmatprep.subr.mxu0 0.0
    %1146 = vmatpush1.msra.mxu0 0.0
    %1147 = vmatprep.subr.mxu0 0.0
    %1148 = vmatpush1.msra.mxu0 0.0
    %1149 = vmatprep.subr.mxu0 0.0
    %1150 = vmatpush1.msra.mxu0 0.0
    %1151 = vmatprep.mubr.f32.mxu0 0.0
    %1152 = vmatmul.mubr.f32.gmra.mrb[0].mxu0 %v1085
    %v1153 = vpop.f32.mrb[0].mxu0
    %v1154 = vadd.f32 0.0, %v1153
    %v1155 = vpop.f32.mrb[0].mxu0
    %v1156 = vadd.f32 0.0, %v1155
    %1157 = vdwg.mxu0
    %v1158 = vadd.f32 %v279, %v1154
    %v1159 = vxor.u32 %v1158, 2147483648
    %v1160 = vmul.f32 %v1159, 1.442695
    %v1161 = vpow.pop %v1160
    %v1162 = vadd.f32 %v1161, 1.0
    %v1163 = vrcp.pop %v1162
    %v1164 = vmul.f32 1.0, %v1163
    %v1165 = vadd.f32 %v1156, %v82
    %v1166 = vmul.f32 %v1164, %v1165
    %v1167 = vrot.slane %v279, 2
    %v1169 = vadd.f32 %v1167, %v1166
    %v1170 = vtanh.pop %v1169
    %v1171 = vsub.f32 %v1069, %v1170
    %1173 = vrot.lane.b32.xlu0 %v1171, 64
    %v1174 = vpop.permute.xlu0 %1173
    %v1176 = vmul.f32 %v1164, %v1174
    %1178 = vrot.lane.b32.xlu0 %v1176, 64
    %v1179 = vpop.permute.xlu0 %1178
    %v1181 = vadd.f32 %v1170, %v1179
    %1182 = vst.msk [vmem:[%s389] sm:$0x3] %vm387, %v1181
    %1183 = vst.msk [vmem:[#allocation2] sm:$0x3] %vm390, %v1181
    %v1186 = vunpack.c.l.s4 1983009808
    %v1187 = vunpack.c.0.s8 %v1186
    %v1188 = vlaneseq
    %v1189 = vshrl.u32 %v1188, 7
    %v1190 = vsub.s32 %v1187, %v1189
    %v1191 = vrot.slane %v1181, %v1190
    %1192 = vrot.lane.b32.xlu0 %v1191, 64
    %v1193 = vpop.permute.xlu0 %1192
    %1195 = vst.msk [vmem:[#allocation2] sm:$0x3] %vm403, %v1193
    %1196 = vst.msk [vmem:[%s389] sm:$0x3] %vm405, %v1193
    %v1197 = vld [vmem:[#allocation2] sm:$0x3]
    %v1198 = vld [vmem:[#allocation2 + $0x2] sm:$0x3]
    %v1199 = vld [vmem:[#allocation2 + $0x4] sm:$0x3]
    %v1200 = vld [vmem:[#allocation2 + $0x6] sm:$0x3]
    %v1201 = vld [vmem:[#allocation2 + $0x8] sm:$0x3]
    %v1202 = vld [vmem:[#allocation2 + $0xa] sm:$0x3]
    %v1203 = vld [vmem:[#allocation2 + $0xc] sm:$0x3]
    %v1204 = vld [vmem:[#allocation2 + $0xe] sm:$0x3]
    %v1205 = vld [vmem:[%s1 + $0x200] sm:$0xff]
    %v1206 = vld [vmem:[%s1 + $0x208] sm:$0xff]
    %v1207 = vld [vmem:[%s1 + $0x210] sm:$0xff]
    %v1208 = vld [vmem:[%s1 + $0x218] sm:$0xff]
    %v1209 = vld [vmem:[%s1 + $0x220] sm:$0xff]
    %v1210 = vld [vmem:[%s1 + $0x228] sm:$0xff]
    %v1211 = vld [vmem:[%s1 + $0x230] sm:$0xff]
    %v1212 = vld [vmem:[%s1 + $0x238] sm:$0xff]
    %v1213 = vld [vmem:[%s1 + $0x240] sm:$0xff]
    %v1214 = vld [vmem:[%s1 + $0x248] sm:$0xff]
    %v1215 = vld [vmem:[%s1 + $0x250] sm:$0xff]
    %v1216 = vld [vmem:[%s1 + $0x258] sm:$0xff]
    %v1217 = vld [vmem:[%s1 + $0x260] sm:$0xff]
    %v1218 = vld [vmem:[%s1 + $0x268] sm:$0xff]
    %v1219 = vld [vmem:[%s1 + $0x270] sm:$0xff]
    %v1220 = vld [vmem:[%s1 + $0x278] sm:$0xff]
    %v1221 = vld [vmem:[%s1 + $0x280] sm:$0xff]
    %v1222 = vld [vmem:[%s1 + $0x288] sm:$0xff]
    %v1223 = vld [vmem:[%s1 + $0x290] sm:$0xff]
    %v1224 = vld [vmem:[%s1 + $0x298] sm:$0xff]
    %v1225 = vld [vmem:[%s1 + $0x2a0] sm:$0xff]
    %v1226 = vld [vmem:[%s1 + $0x2a8] sm:$0xff]
    %v1227 = vld [vmem:[%s1 + $0x2b0] sm:$0xff]
    %v1228 = vld [vmem:[%s1 + $0x2b8] sm:$0xff]
    %v1229 = vld [vmem:[%s1 + $0x2c0] sm:$0xff]
    %v1230 = vld [vmem:[%s1 + $0x2c8] sm:$0xff]
    %v1231 = vld [vmem:[%s1 + $0x2d0] sm:$0xff]
    %v1232 = vld [vmem:[%s1 + $0x2d8] sm:$0xff]
    %v1233 = vld [vmem:[%s1 + $0x2e0] sm:$0xff]
    %v1234 = vld [vmem:[%s1 + $0x2e8] sm:$0xff]
    %v1235 = vld [vmem:[%s1 + $0x2f0] sm:$0xff]
    %v1236 = vld [vmem:[%s1 + $0x2f8] sm:$0xff]
    %s1237 = scalar_lea.vmem %s1, 768
    %v1238 = vld [vmem:[%s1237] ss:$8 sm:$0x3]
    %v1239 = vld [vmem:[%s1 + $0x310] sm:$0xff]
    %v1240 = vld [vmem:[%s1 + $0x318] sm:$0xff]
    %v1241 = vld [vmem:[%s1 + $0x320] sm:$0xff]
    %v1242 = vld [vmem:[%s1 + $0x328] sm:$0xff]
    %v1243 = vld [vmem:[%s1 + $0x330] sm:$0xff]
    %v1244 = vld [vmem:[%s1 + $0x338] sm:$0xff]
    %v1245 = vld [vmem:[%s1 + $0x340] sm:$0xff]
    %v1246 = vld [vmem:[%s1 + $0x348] sm:$0xff]
    %v1247 = vld [vmem:[%s1 + $0x350] sm:$0xff]
    %v1248 = vld [vmem:[%s1 + $0x358] sm:$0xff]
    %v1249 = vld [vmem:[%s1 + $0x360] sm:$0xff]
    %v1250 = vld [vmem:[%s1 + $0x368] sm:$0xff]
    %v1251 = vld [vmem:[%s1 + $0x370] sm:$0xff]
    %v1252 = vld [vmem:[%s1 + $0x378] sm:$0xff]
    %v1253 = vld [vmem:[%s1 + $0x380] sm:$0xff]
    %v1254 = vld [vmem:[%s1 + $0x388] sm:$0xff]
    %v1255 = vld [vmem:[%s1 + $0x390] ss:$0 sm:$0xff]
    %v1257 = vlaneseq
    %v1258 = vshrl.u32 %v1257, 7
    %v1259 = vsub.s32 0, %v1258
    %v1260 = vrot.slane %v1238, %v1259
    %v1261 = vlaneseq
    %v1262 = vshrl.u32 %v1261, 7
    %v1263 = vsub.s32 1, %v1262
    %v1264 = vrot.slane %v1238, %v1263
    %v1265 = vcombine.low %v1260, %v1264
    %v1267 = vunpack.c.l.s4 1983009808
    %v1268 = vunpack.c.0.s8 %v1267
    %v1269 = vlaneseq
    %v1270 = vshrl.u32 %v1269, 7
    %v1271 = vsub.s32 %v1268, %v1270
    %v1272 = vrot.slane %v1265, %v1271
    %v1281 = vcombine.low %v1197, %v1198
    %v1282 = vcombine.low %v1199, %v1200
    %v1284 = vunpack.c.l.s4 1983009808
    %v1285 = vunpack.c.0.s8 %v1284
    %v1286 = vlaneseq
    %v1287 = vshrl.u32 %v1286, 7
    %v1288 = vsub.s32 %v1285, %v1287
    %v1289 = vrot.slane %v1281, %v1288
    %v1291 = vunpack.c.l.s4 1983009808
    %v1292 = vunpack.c.0.s8 %v1291
    %v1293 = vlaneseq
    %v1294 = vshrl.u32 %v1293, 7
    %v1295 = vsub.s32 %v1292, %v1294
    %v1296 = vrot.slane %v1282, %v1295
    %v1297 = vcombine.low %v1289, %v1296
    %v1298 = vcombine.low %v1201, %v1202
    %v1299 = vcombine.low %v1203, %v1204
    %v1301 = vunpack.c.l.s4 1983009808
    %v1302 = vunpack.c.0.s8 %v1301
    %v1303 = vlaneseq
    %v1304 = vshrl.u32 %v1303, 7
    %v1305 = vsub.s32 %v1302, %v1304
    %v1306 = vrot.slane %v1298, %v1305
    %v1308 = vunpack.c.l.s4 1983009808
    %v1309 = vunpack.c.0.s8 %v1308
    %v1310 = vlaneseq
    %v1311 = vshrl.u32 %v1310, 7
    %v1312 = vsub.s32 %v1309, %v1311
    %v1313 = vrot.slane %v1299, %v1312
    %v1314 = vcombine.low %v1306, %v1313
    %v1317 = vcombine.low %v1272, %v1272
    %v1319 = vunpack.c.l.s4 1983009808
    %v1320 = vunpack.c.0.s8 %v1319
    %v1321 = vlaneseq
    %v1322 = vshrl.u32 %v1321, 7
    %v1323 = vsub.s32 %v1320, %v1322
    %v1324 = vrot.slane %v1317, %v1323
    %v1325 = vcombine.low %v1324, %v1324
    %v1326 = vcombine.high %v1324, %v1324
    %1329 = vmatprep.subr.mxu0 %v1206
    %1330 = vmatpush1.msra.mxu0 %v1205
    %1331 = vmatprep.subr.mxu0 %v1208
    %1332 = vmatpush1.msra.mxu0 %v1207
    %1333 = vmatprep.subr.mxu0 %v1210
    %1334 = vmatpush1.msra.mxu0 %v1209
    %1335 = vmatprep.subr.mxu0 %v1212
    %1336 = vmatpush1.msra.mxu0 %v1211
    %1337 = vmatprep.subr.mxu0 %v1214
    %1338 = vmatpush1.msra.mxu0 %v1213
    %1339 = vmatprep.subr.mxu0 %v1216
    %1340 = vmatpush1.msra.mxu0 %v1215
    %1341 = vmatprep.subr.mxu0 %v1218
    %1342 = vmatpush1.msra.mxu0 %v1217
    %1343 = vmatprep.subr.mxu0 %v1220
    %1344 = vmatpush1.msra.mxu0 %v1219
    %1345 = vmatprep.subr.mxu0 %v1222
    %1346 = vmatpush1.msra.mxu0 %v1221
    %1347 = vmatprep.subr.mxu0 %v1224
    %1348 = vmatpush1.msra.mxu0 %v1223
    %1349 = vmatprep.subr.mxu0 %v1226
    %1350 = vmatpush1.msra.mxu0 %v1225
    %1351 = vmatprep.subr.mxu0 %v1228
    %1352 = vmatpush1.msra.mxu0 %v1227
    %1353 = vmatprep.subr.mxu0 %v1230
    %1354 = vmatpush1.msra.mxu0 %v1229
    %1355 = vmatprep.subr.mxu0 %v1232
    %1356 = vmatpush1.msra.mxu0 %v1231
    %1357 = vmatprep.subr.mxu0 %v1234
    %1358 = vmatpush1.msra.mxu0 %v1233
    %1359 = vmatprep.subr.mxu0 %v1236
    %1360 = vmatpush1.msra.mxu0 %v1235
    %1361 = vmatprep.subr.mxu0 0.0
    %1362 = vmatpush1.msra.mxu0 0.0
    %1363 = vmatprep.subr.mxu0 0.0
    %1364 = vmatpush1.msra.mxu0 0.0
    %1365 = vmatprep.subr.mxu0 0.0
    %1366 = vmatpush1.msra.mxu0 0.0
    %1367 = vmatprep.subr.mxu0 0.0
    %1368 = vmatpush1.msra.mxu0 0.0
    %1369 = vmatprep.subr.mxu0 0.0
    %1370 = vmatpush1.msra.mxu0 0.0
    %1371 = vmatprep.subr.mxu0 0.0
    %1372 = vmatpush1.msra.mxu0 0.0
    %1373 = vmatprep.subr.mxu0 0.0
    %1374 = vmatpush1.msra.mxu0 0.0
    %1375 = vmatprep.subr.mxu0 0.0
    %1376 = vmatpush1.msra.mxu0 0.0
    %1377 = vmatprep.subr.mxu0 0.0
    %1378 = vmatpush1.msra.mxu0 0.0
    %1379 = vmatprep.subr.mxu0 0.0
    %1380 = vmatpush1.msra.mxu0 0.0
    %1381 = vmatprep.subr.mxu0 0.0
    %1382 = vmatpush1.msra.mxu0 0.0
    %1383 = vmatprep.subr.mxu0 0.0
    %1384 = vmatpush1.msra.mxu0 0.0
    %1385 = vmatprep.subr.mxu0 0.0
    %1386 = vmatpush1.msra.mxu0 0.0
    %1387 = vmatprep.subr.mxu0 0.0
    %1388 = vmatpush1.msra.mxu0 0.0
    %1389 = vmatprep.subr.mxu0 0.0
    %1390 = vmatpush1.msra.mxu0 0.0
    %1391 = vmatprep.subr.mxu0 0.0
    %1392 = vmatpush1.msra.mxu0 0.0
    %1393 = vmatprep.mubr.f32.mxu0 0.0
    %1394 = vmatmul.mubr.f32.gmra.mrb[0].mxu0 %v1297
    %v1395 = vpop.f32.mrb[0].mxu0
    %v1396 = vadd.f32 %v1325, %v1395
    %v1397 = vpop.f32.mrb[0].mxu0
    %v1398 = vadd.f32 %v1326, %v1397
    %1399 = vmatprep.mubr.f32.mxu0 0.0
    %1400 = vmatmul.mubr.f32.gmra.mrb[0].mxu0 %v1314
    %v1401 = vpop.f32.mrb[0].mxu0
    %v1402 = vadd.f32 %v1325, %v1401
    %v1403 = vpop.f32.mrb[0].mxu0
    %v1404 = vadd.f32 %v1326, %v1403
    %1405 = vdwg.mxu0
    %v1410 = vcombine.low %v1396, %v1398
    %v1411 = vcombine.high %v1396, %v1398
    %v1413 = vunpack.c.l.s4 1983009808
    %v1414 = vunpack.c.0.s8 %v1413
    %v1415 = vlaneseq
    %v1416 = vshrl.u32 %v1415, 7
    %v1417 = vsub.s32 %v1414, %v1416
    %v1418 = vrot.slane %v1410, %v1417
    %v1420 = vunpack.c.l.s4 1983009808
    %v1421 = vunpack.c.0.s8 %v1420
    %v1422 = vlaneseq
    %v1423 = vshrl.u32 %v1422, 7
    %v1424 = vsub.s32 %v1421, %v1423
    %v1425 = vrot.slane %v1411, %v1424
    %v1426 = vcombine.high %v1418, %v1418
    %v1427 = vcombine.high %v1425, %v1425
    %v1428 = vcombine.low %v1402, %v1404
    %v1429 = vcombine.high %v1402, %v1404
    %v1431 = vunpack.c.l.s4 1983009808
    %v1432 = vunpack.c.0.s8 %v1431
    %v1433 = vlaneseq
    %v1434 = vshrl.u32 %v1433, 7
    %v1435 = vsub.s32 %v1432, %v1434
    %v1436 = vrot.slane %v1428, %v1435
    %v1438 = vunpack.c.l.s4 1983009808
    %v1439 = vunpack.c.0.s8 %v1438
    %v1440 = vlaneseq
    %v1441 = vshrl.u32 %v1440, 7
    %v1442 = vsub.s32 %v1439, %v1441
    %v1443 = vrot.slane %v1429, %v1442
    %v1444 = vcombine.high %v1436, %v1436
    %v1445 = vcombine.high %v1443, %v1443
    %1454 = vmatprep.subr.mxu0 %v1240
    %1455 = vmatpush1.msra.mxu0 %v1239
    %1456 = vmatprep.subr.mxu0 %v1242
    %1457 = vmatpush1.msra.mxu0 %v1241
    %1458 = vmatprep.subr.mxu0 %v1244
    %1459 = vmatpush1.msra.mxu0 %v1243
    %1460 = vmatprep.subr.mxu0 %v1246
    %1461 = vmatpush1.msra.mxu0 %v1245
    %1462 = vmatprep.subr.mxu0 %v1248
    %1463 = vmatpush1.msra.mxu0 %v1247
    %1464 = vmatprep.subr.mxu0 %v1250
    %1465 = vmatpush1.msra.mxu0 %v1249
    %1466 = vmatprep.subr.mxu0 %v1252
    %1467 = vmatpush1.msra.mxu0 %v1251
    %1468 = vmatprep.subr.mxu0 %v1254
    %1469 = vmatpush1.msra.mxu0 %v1253
    %1470 = vmatprep.subr.mxu0 0.0
    %1471 = vmatpush1.msra.mxu0 0.0
    %1472 = vmatprep.subr.mxu0 0.0
    %1473 = vmatpush1.msra.mxu0 0.0
    %1474 = vmatprep.subr.mxu0 0.0
    %1475 = vmatpush1.msra.mxu0 0.0
    %1476 = vmatprep.subr.mxu0 0.0
    %1477 = vmatpush1.msra.mxu0 0.0
    %1478 = vmatprep.subr.mxu0 0.0
    %1479 = vmatpush1.msra.mxu0 0.0
    %1480 = vmatprep.subr.mxu0 0.0
    %1481 = vmatpush1.msra.mxu0 0.0
    %1482 = vmatprep.subr.mxu0 0.0
    %1483 = vmatpush1.msra.mxu0 0.0
    %1484 = vmatprep.subr.mxu0 0.0
    %1485 = vmatpush1.msra.mxu0 0.0
    %1486 = vmatprep.subr.mxu0 0.0
    %1487 = vmatpush1.msra.mxu0 0.0
    %1488 = vmatprep.subr.mxu0 0.0
    %1489 = vmatpush1.msra.mxu0 0.0
    %1490 = vmatprep.subr.mxu0 0.0
    %1491 = vmatpush1.msra.mxu0 0.0
    %1492 = vmatprep.subr.mxu0 0.0
    %1493 = vmatpush1.msra.mxu0 0.0
    %1494 = vmatprep.subr.mxu0 0.0
    %1495 = vmatpush1.msra.mxu0 0.0
    %1496 = vmatprep.subr.mxu0 0.0
    %1497 = vmatpush1.msra.mxu0 0.0
    %1498 = vmatprep.subr.mxu0 0.0
    %1499 = vmatpush1.msra.mxu0 0.0
    %1500 = vmatprep.subr.mxu0 0.0
    %1501 = vmatpush1.msra.mxu0 0.0
    %1502 = vmatprep.subr.mxu0 0.0
    %1503 = vmatpush1.msra.mxu0 0.0
    %1504 = vmatprep.subr.mxu0 0.0
    %1505 = vmatpush1.msra.mxu0 0.0
    %1506 = vmatprep.subr.mxu0 0.0
    %1507 = vmatpush1.msra.mxu0 0.0
    %1508 = vmatprep.subr.mxu0 0.0
    %1509 = vmatpush1.msra.mxu0 0.0
    %1510 = vmatprep.subr.mxu0 0.0
    %1511 = vmatpush1.msra.mxu0 0.0
    %1512 = vmatprep.subr.mxu0 0.0
    %1513 = vmatpush1.msra.mxu0 0.0
    %1514 = vmatprep.subr.mxu0 0.0
    %1515 = vmatpush1.msra.mxu0 0.0
    %1516 = vmatprep.subr.mxu0 0.0
    %1517 = vmatpush1.msra.mxu0 0.0
    %1518 = vmatprep.mubr.f32.mxu0 0.0
    %1519 = vmatmul.mubr.f32.gmra.mrb[0].mxu0 %v290
    %v1520 = vpop.f32.mrb[0].mxu0
    %v1521 = vadd.f32 0.0, %v1520
    %v1522 = vpop.f32.mrb[0].mxu0
    %v1523 = vadd.f32 0.0, %v1522
    %1524 = vdwg.mxu0
    %v1525 = vadd.f32 %v1418, %v1521
    %v1526 = vxor.u32 %v1525, 2147483648
    %v1527 = vmul.f32 %v1526, 1.442695
    %v1528 = vpow.pop %v1527
    %v1529 = vadd.f32 %v1528, 1.0
    %v1530 = vrcp.pop %v1529
    %v1531 = vmul.f32 1.0, %v1530
    %v1532 = vadd.f32 %v1523, %v1255
    %v1533 = vmul.f32 %v1531, %v1532
    %v1534 = vrot.slane %v1418, 2
    %v1536 = vadd.f32 %v1534, %v1533
    %v1537 = vtanh.pop %v1536
    %v1538 = vsub.f32 0.0, %v1537
    %1540 = vrot.lane.b32.xlu0 %v1538, 64
    %v1541 = vpop.permute.xlu0 %1540
    %v1543 = vmul.f32 %v1531, %v1541
    %1545 = vrot.lane.b32.xlu0 %v1543, 64
    %v1546 = vpop.permute.xlu0 %1545
    %v1548 = vadd.f32 %v1537, %v1546
    %1549 = vst.msk [vmem:[#allocation3] sm:$0x3] %vm387, %v1548
    %s1550 = scalar_lea.vmem [#allocation3], 14
    %1551 = vst.msk [vmem:[%s1550] sm:$0x3] %vm390, %v1548
    %v1554 = vunpack.c.l.s4 1983009808
    %v1555 = vunpack.c.0.s8 %v1554
    %v1556 = vlaneseq
    %v1557 = vshrl.u32 %v1556, 7
    %v1558 = vsub.s32 %v1555, %v1557
    %v1559 = vrot.slane %v1548, %v1558
    %1560 = vrot.lane.b32.xlu0 %v1559, 64
    %v1561 = vpop.permute.xlu0 %1560
    %1563 = vst.msk [vmem:[%s1550] sm:$0x3] %vm403, %v1561
    %1564 = vst.msk [vmem:[#allocation3] sm:$0x3] %vm405, %v1561
    %v1565 = vsel %vm288, %v1548, 0
    %1567 = vmatprep.subr.mxu0 %v1240
    %1568 = vmatpush1.msra.mxu0 %v1239
    %1569 = vmatprep.subr.mxu0 %v1242
    %1570 = vmatpush1.msra.mxu0 %v1241
    %1571 = vmatprep.subr.mxu0 %v1244
    %1572 = vmatpush1.msra.mxu0 %v1243
    %1573 = vmatprep.subr.mxu0 %v1246
    %1574 = vmatpush1.msra.mxu0 %v1245
    %1575 = vmatprep.subr.mxu0 %v1248
    %1576 = vmatpush1.msra.mxu0 %v1247
    %1577 = vmatprep.subr.mxu0 %v1250
    %1578 = vmatpush1.msra.mxu0 %v1249
    %1579 = vmatprep.subr.mxu0 %v1252
    %1580 = vmatpush1.msra.mxu0 %v1251
    %1581 = vmatprep.subr.mxu0 %v1254
    %1582 = vmatpush1.msra.mxu0 %v1253
    %1583 = vmatprep.subr.mxu0 0.0
    %1584 = vmatpush1.msra.mxu0 0.0
    %1585 = vmatprep.subr.mxu0 0.0
    %1586 = vmatpush1.msra.mxu0 0.0
    %1587 = vmatprep.subr.mxu0 0.0
    %1588 = vmatpush1.msra.mxu0 0.0
    %1589 = vmatprep.subr.mxu0 0.0
    %1590 = vmatpush1.msra.mxu0 0.0
    %1591 = vmatprep.subr.mxu0 0.0
    %1592 = vmatpush1.msra.mxu0 0.0
    %1593 = vmatprep.subr.mxu0 0.0
    %1594 = vmatpush1.msra.mxu0 0.0
    %1595 = vmatprep.subr.mxu0 0.0
    %1596 = vmatpush1.msra.mxu0 0.0
    %1597 = vmatprep.subr.mxu0 0.0
    %1598 = vmatpush1.msra.mxu0 0.0
    %1599 = vmatprep.subr.mxu0 0.0
    %1600 = vmatpush1.msra.mxu0 0.0
    %1601 = vmatprep.subr.mxu0 0.0
    %1602 = vmatpush1.msra.mxu0 0.0
    %1603 = vmatprep.subr.mxu0 0.0
    %1604 = vmatpush1.msra.mxu0 0.0
    %1605 = vmatprep.subr.mxu0 0.0
    %1606 = vmatpush1.msra.mxu0 0.0
    %1607 = vmatprep.subr.mxu0 0.0
    %1608 = vmatpush1.msra.mxu0 0.0
    %1609 = vmatprep.subr.mxu0 0.0
    %1610 = vmatpush1.msra.mxu0 0.0
    %1611 = vmatprep.subr.mxu0 0.0
    %1612 = vmatpush1.msra.mxu0 0.0
    %1613 = vmatprep.subr.mxu0 0.0
    %1614 = vmatpush1.msra.mxu0 0.0
    %1615 = vmatprep.subr.mxu0 0.0
    %1616 = vmatpush1.msra.mxu0 0.0
    %1617 = vmatprep.subr.mxu0 0.0
    %1618 = vmatpush1.msra.mxu0 0.0
    %1619 = vmatprep.subr.mxu0 0.0
    %1620 = vmatpush1.msra.mxu0 0.0
    %1621 = vmatprep.subr.mxu0 0.0
    %1622 = vmatpush1.msra.mxu0 0.0
    %1623 = vmatprep.subr.mxu0 0.0
    %1624 = vmatpush1.msra.mxu0 0.0
    %1625 = vmatprep.subr.mxu0 0.0
    %1626 = vmatpush1.msra.mxu0 0.0
    %1627 = vmatprep.subr.mxu0 0.0
    %1628 = vmatpush1.msra.mxu0 0.0
    %1629 = vmatprep.subr.mxu0 0.0
    %1630 = vmatpush1.msra.mxu0 0.0
    %1631 = vmatprep.mubr.f32.mxu0 0.0
    %1632 = vmatmul.mubr.f32.gmra.mrb[0].mxu0 %v1565
    %v1633 = vpop.f32.mrb[0].mxu0
    %v1634 = vadd.f32 0.0, %v1633
    %v1635 = vpop.f32.mrb[0].mxu0
    %v1636 = vadd.f32 0.0, %v1635
    %1637 = vdwg.mxu0
    %v1638 = vadd.f32 %v1426, %v1634
    %v1639 = vxor.u32 %v1638, 2147483648
    %v1640 = vmul.f32 %v1639, 1.442695
    %v1641 = vpow.pop %v1640
    %v1642 = vadd.f32 %v1641, 1.0
    %v1643 = vrcp.pop %v1642
    %v1644 = vmul.f32 1.0, %v1643
    %v1645 = vadd.f32 %v1636, %v1255
    %v1646 = vmul.f32 %v1644, %v1645
    %v1647 = vrot.slane %v1426, 2
    %v1649 = vadd.f32 %v1647, %v1646
    %v1650 = vtanh.pop %v1649
    %v1651 = vsub.f32 %v1548, %v1650
    %1653 = vrot.lane.b32.xlu0 %v1651, 64
    %v1654 = vpop.permute.xlu0 %1653
    %v1656 = vmul.f32 %v1644, %v1654
    %1658 = vrot.lane.b32.xlu0 %v1656, 64
    %v1659 = vpop.permute.xlu0 %1658
    %v1661 = vadd.f32 %v1650, %v1659
    %s1662 = scalar_lea.vmem [#allocation3], 2
    %1663 = vst.msk [vmem:[%s1662] sm:$0x3] %vm387, %v1661
    %s1664 = scalar_lea.vmem [#allocation3], 12
    %1665 = vst.msk [vmem:[%s1664] sm:$0x3] %vm390, %v1661
    %v1668 = vunpack.c.l.s4 1983009808
    %v1669 = vunpack.c.0.s8 %v1668
    %v1670 = vlaneseq
    %v1671 = vshrl.u32 %v1670, 7
    %v1672 = vsub.s32 %v1669, %v1671
    %v1673 = vrot.slane %v1661, %v1672
    %1674 = vrot.lane.b32.xlu0 %v1673, 64
    %v1675 = vpop.permute.xlu0 %1674
    %1677 = vst.msk [vmem:[%s1664] sm:$0x3] %vm403, %v1675
    %1678 = vst.msk [vmem:[%s1662] sm:$0x3] %vm405, %v1675
    %v1679 = vsel %vm288, %v1661, 0
    %1681 = vmatprep.subr.mxu0 %v1240
    %1682 = vmatpush1.msra.mxu0 %v1239
    %1683 = vmatprep.subr.mxu0 %v1242
    %1684 = vmatpush1.msra.mxu0 %v1241
    %1685 = vmatprep.subr.mxu0 %v1244
    %1686 = vmatpush1.msra.mxu0 %v1243
    %1687 = vmatprep.subr.mxu0 %v1246
    %1688 = vmatpush1.msra.mxu0 %v1245
    %1689 = vmatprep.subr.mxu0 %v1248
    %1690 = vmatpush1.msra.mxu0 %v1247
    %1691 = vmatprep.subr.mxu0 %v1250
    %1692 = vmatpush1.msra.mxu0 %v1249
    %1693 = vmatprep.subr.mxu0 %v1252
    %1694 = vmatpush1.msra.mxu0 %v1251
    %1695 = vmatprep.subr.mxu0 %v1254
    %1696 = vmatpush1.msra.mxu0 %v1253
    %1697 = vmatprep.subr.mxu0 0.0
    %1698 = vmatpush1.msra.mxu0 0.0
    %1699 = vmatprep.subr.mxu0 0.0
    %1700 = vmatpush1.msra.mxu0 0.0
    %1701 = vmatprep.subr.mxu0 0.0
    %1702 = vmatpush1.msra.mxu0 0.0
    %1703 = vmatprep.subr.mxu0 0.0
    %1704 = vmatpush1.msra.mxu0 0.0
    %1705 = vmatprep.subr.mxu0 0.0
    %1706 = vmatpush1.msra.mxu0 0.0
    %1707 = vmatprep.subr.mxu0 0.0
    %1708 = vmatpush1.msra.mxu0 0.0
    %1709 = vmatprep.subr.mxu0 0.0
    %1710 = vmatpush1.msra.mxu0 0.0
    %1711 = vmatprep.subr.mxu0 0.0
    %1712 = vmatpush1.msra.mxu0 0.0
    %1713 = vmatprep.subr.mxu0 0.0
    %1714 = vmatpush1.msra.mxu0 0.0
    %1715 = vmatprep.subr.mxu0 0.0
    %1716 = vmatpush1.msra.mxu0 0.0
    %1717 = vmatprep.subr.mxu0 0.0
    %1718 = vmatpush1.msra.mxu0 0.0
    %1719 = vmatprep.subr.mxu0 0.0
    %1720 = vmatpush1.msra.mxu0 0.0
    %1721 = vmatprep.subr.mxu0 0.0
    %1722 = vmatpush1.msra.mxu0 0.0
    %1723 = vmatprep.subr.mxu0 0.0
    %1724 = vmatpush1.msra.mxu0 0.0
    %1725 = vmatprep.subr.mxu0 0.0
    %1726 = vmatpush1.msra.mxu0 0.0
    %1727 = vmatprep.subr.mxu0 0.0
    %1728 = vmatpush1.msra.mxu0 0.0
    %1729 = vmatprep.subr.mxu0 0.0
    %1730 = vmatpush1.msra.mxu0 0.0
    %1731 = vmatprep.subr.mxu0 0.0
    %1732 = vmatpush1.msra.mxu0 0.0
    %1733 = vmatprep.subr.mxu0 0.0
    %1734 = vmatpush1.msra.mxu0 0.0
    %1735 = vmatprep.subr.mxu0 0.0
    %1736 = vmatpush1.msra.mxu0 0.0
    %1737 = vmatprep.subr.mxu0 0.0
    %1738 = vmatpush1.msra.mxu0 0.0
    %1739 = vmatprep.subr.mxu0 0.0
    %1740 = vmatpush1.msra.mxu0 0.0
    %1741 = vmatprep.subr.mxu0 0.0
    %1742 = vmatpush1.msra.mxu0 0.0
    %1743 = vmatprep.subr.mxu0 0.0
    %1744 = vmatpush1.msra.mxu0 0.0
    %1745 = vmatprep.mubr.f32.mxu0 0.0
    %1746 = vmatmul.mubr.f32.gmra.mrb[0].mxu0 %v1679
    %v1747 = vpop.f32.mrb[0].mxu0
    %v1748 = vadd.f32 0.0, %v1747
    %v1749 = vpop.f32.mrb[0].mxu0
    %v1750 = vadd.f32 0.0, %v1749
    %1751 = vdwg.mxu0
    %v1752 = vadd.f32 %v1425, %v1748
    %v1753 = vxor.u32 %v1752, 2147483648
    %v1754 = vmul.f32 %v1753, 1.442695
    %v1755 = vpow.pop %v1754
    %v1756 = vadd.f32 %v1755, 1.0
    %v1757 = vrcp.pop %v1756
    %v1758 = vmul.f32 1.0, %v1757
    %v1759 = vadd.f32 %v1750, %v1255
    %v1760 = vmul.f32 %v1758, %v1759
    %v1761 = vrot.slane %v1425, 2
    %v1763 = vadd.f32 %v1761, %v1760
    %v1764 = vtanh.pop %v1763
    %v1765 = vsub.f32 %v1661, %v1764
    %1767 = vrot.lane.b32.xlu0 %v1765, 64
    %v1768 = vpop.permute.xlu0 %1767
    %v1770 = vmul.f32 %v1758, %v1768
    %1772 = vrot.lane.b32.xlu0 %v1770, 64
    %v1773 = vpop.permute.xlu0 %1772
    %v1775 = vadd.f32 %v1764, %v1773
    %s1776 = scalar_lea.vmem [#allocation3], 4
    %1777 = vst.msk [vmem:[%s1776] sm:$0x3] %vm387, %v1775
    %s1778 = scalar_lea.vmem [#allocation3], 10
    %1779 = vst.msk [vmem:[%s1778] sm:$0x3] %vm390, %v1775
    %v1782 = vunpack.c.l.s4 1983009808
    %v1783 = vunpack.c.0.s8 %v1782
    %v1784 = vlaneseq
    %v1785 = vshrl.u32 %v1784, 7
    %v1786 = vsub.s32 %v1783, %v1785
    %v1787 = vrot.slane %v1775, %v1786
    %1788 = vrot.lane.b32.xlu0 %v1787, 64
    %v1789 = vpop.permute.xlu0 %1788
    %1791 = vst.msk [vmem:[%s1778] sm:$0x3] %vm403, %v1789
    %1792 = vst.msk [vmem:[%s1776] sm:$0x3] %vm405, %v1789
    %v1793 = vsel %vm288, %v1775, 0
    %1795 = vmatprep.subr.mxu0 %v1240
    %1796 = vmatpush1.msra.mxu0 %v1239
    %1797 = vmatprep.subr.mxu0 %v1242
    %1798 = vmatpush1.msra.mxu0 %v1241
    %1799 = vmatprep.subr.mxu0 %v1244
    %1800 = vmatpush1.msra.mxu0 %v1243
    %1801 = vmatprep.subr.mxu0 %v1246
    %1802 = vmatpush1.msra.mxu0 %v1245
    %1803 = vmatprep.subr.mxu0 %v1248
    %1804 = vmatpush1.msra.mxu0 %v1247
    %1805 = vmatprep.subr.mxu0 %v1250
    %1806 = vmatpush1.msra.mxu0 %v1249
    %1807 = vmatprep.subr.mxu0 %v1252
    %1808 = vmatpush1.msra.mxu0 %v1251
    %1809 = vmatprep.subr.mxu0 %v1254
    %1810 = vmatpush1.msra.mxu0 %v1253
    %1811 = vmatprep.subr.mxu0 0.0
    %1812 = vmatpush1.msra.mxu0 0.0
    %1813 = vmatprep.subr.mxu0 0.0
    %1814 = vmatpush1.msra.mxu0 0.0
    %1815 = vmatprep.subr.mxu0 0.0
    %1816 = vmatpush1.msra.mxu0 0.0
    %1817 = vmatprep.subr.mxu0 0.0
    %1818 = vmatpush1.msra.mxu0 0.0
    %1819 = vmatprep.subr.mxu0 0.0
    %1820 = vmatpush1.msra.mxu0 0.0
    %1821 = vmatprep.subr.mxu0 0.0
    %1822 = vmatpush1.msra.mxu0 0.0
    %1823 = vmatprep.subr.mxu0 0.0
    %1824 = vmatpush1.msra.mxu0 0.0
    %1825 = vmatprep.subr.mxu0 0.0
    %1826 = vmatpush1.msra.mxu0 0.0
    %1827 = vmatprep.subr.mxu0 0.0
    %1828 = vmatpush1.msra.mxu0 0.0
    %1829 = vmatprep.subr.mxu0 0.0
    %1830 = vmatpush1.msra.mxu0 0.0
    %1831 = vmatprep.subr.mxu0 0.0
    %1832 = vmatpush1.msra.mxu0 0.0
    %1833 = vmatprep.subr.mxu0 0.0
    %1834 = vmatpush1.msra.mxu0 0.0
    %1835 = vmatprep.subr.mxu0 0.0
    %1836 = vmatpush1.msra.mxu0 0.0
    %1837 = vmatprep.subr.mxu0 0.0
    %1838 = vmatpush1.msra.mxu0 0.0
    %1839 = vmatprep.subr.mxu0 0.0
    %1840 = vmatpush1.msra.mxu0 0.0
    %1841 = vmatprep.subr.mxu0 0.0
    %1842 = vmatpush1.msra.mxu0 0.0
    %1843 = vmatprep.subr.mxu0 0.0
    %1844 = vmatpush1.msra.mxu0 0.0
    %1845 = vmatprep.subr.mxu0 0.0
    %1846 = vmatpush1.msra.mxu0 0.0
    %1847 = vmatprep.subr.mxu0 0.0
    %1848 = vmatpush1.msra.mxu0 0.0
    %1849 = vmatprep.subr.mxu0 0.0
    %1850 = vmatpush1.msra.mxu0 0.0
    %1851 = vmatprep.subr.mxu0 0.0
    %1852 = vmatpush1.msra.mxu0 0.0
    %1853 = vmatprep.subr.mxu0 0.0
    %1854 = vmatpush1.msra.mxu0 0.0
    %1855 = vmatprep.subr.mxu0 0.0
    %1856 = vmatpush1.msra.mxu0 0.0
    %1857 = vmatprep.subr.mxu0 0.0
    %1858 = vmatpush1.msra.mxu0 0.0
    %1859 = vmatprep.mubr.f32.mxu0 0.0
    %1860 = vmatmul.mubr.f32.gmra.mrb[0].mxu0 %v1793
    %v1861 = vpop.f32.mrb[0].mxu0
    %v1862 = vadd.f32 0.0, %v1861
    %v1863 = vpop.f32.mrb[0].mxu0
    %v1864 = vadd.f32 0.0, %v1863
    %1865 = vdwg.mxu0
    %v1866 = vadd.f32 %v1427, %v1862
    %v1867 = vxor.u32 %v1866, 2147483648
    %v1868 = vmul.f32 %v1867, 1.442695
    %v1869 = vpow.pop %v1868
    %v1870 = vadd.f32 %v1869, 1.0
    %v1871 = vrcp.pop %v1870
    %v1872 = vmul.f32 1.0, %v1871
    %v1873 = vadd.f32 %v1864, %v1255
    %v1874 = vmul.f32 %v1872, %v1873
    %v1875 = vrot.slane %v1427, 2
    %v1877 = vadd.f32 %v1875, %v1874
    %v1878 = vtanh.pop %v1877
    %v1879 = vsub.f32 %v1775, %v1878
    %1881 = vrot.lane.b32.xlu0 %v1879, 64
    %v1882 = vpop.permute.xlu0 %1881
    %v1884 = vmul.f32 %v1872, %v1882
    %1886 = vrot.lane.b32.xlu0 %v1884, 64
    %v1887 = vpop.permute.xlu0 %1886
    %v1889 = vadd.f32 %v1878, %v1887
    %s1890 = scalar_lea.vmem [#allocation3], 6
    %1891 = vst.msk [vmem:[%s1890] sm:$0x3] %vm387, %v1889
    %s1892 = scalar_lea.vmem [#allocation3], 8
    %1893 = vst.msk [vmem:[%s1892] sm:$0x3] %vm390, %v1889
    %v1896 = vunpack.c.l.s4 1983009808
    %v1897 = vunpack.c.0.s8 %v1896
    %v1898 = vlaneseq
    %v1899 = vshrl.u32 %v1898, 7
    %v1900 = vsub.s32 %v1897, %v1899
    %v1901 = vrot.slane %v1889, %v1900
    %1902 = vrot.lane.b32.xlu0 %v1901, 64
    %v1903 = vpop.permute.xlu0 %1902
    %1905 = vst.msk [vmem:[%s1892] sm:$0x3] %vm403, %v1903
    %1906 = vst.msk [vmem:[%s1890] sm:$0x3] %vm405, %v1903
    %v1907 = vsel %vm288, %v1889, 0
    %1909 = vmatprep.subr.mxu0 %v1240
    %1910 = vmatpush1.msra.mxu0 %v1239
    %1911 = vmatprep.subr.mxu0 %v1242
    %1912 = vmatpush1.msra.mxu0 %v1241
    %1913 = vmatprep.subr.mxu0 %v1244
    %1914 = vmatpush1.msra.mxu0 %v1243
    %1915 = vmatprep.subr.mxu0 %v1246
    %1916 = vmatpush1.msra.mxu0 %v1245
    %1917 = vmatprep.subr.mxu0 %v1248
    %1918 = vmatpush1.msra.mxu0 %v1247
    %1919 = vmatprep.subr.mxu0 %v1250
    %1920 = vmatpush1.msra.mxu0 %v1249
    %1921 = vmatprep.subr.mxu0 %v1252
    %1922 = vmatpush1.msra.mxu0 %v1251
    %1923 = vmatprep.subr.mxu0 %v1254
    %1924 = vmatpush1.msra.mxu0 %v1253
    %1925 = vmatprep.subr.mxu0 0.0
    %1926 = vmatpush1.msra.mxu0 0.0
    %1927 = vmatprep.subr.mxu0 0.0
    %1928 = vmatpush1.msra.mxu0 0.0
    %1929 = vmatprep.subr.mxu0 0.0
    %1930 = vmatpush1.msra.mxu0 0.0
    %1931 = vmatprep.subr.mxu0 0.0
    %1932 = vmatpush1.msra.mxu0 0.0
    %1933 = vmatprep.subr.mxu0 0.0
    %1934 = vmatpush1.msra.mxu0 0.0
    %1935 = vmatprep.subr.mxu0 0.0
    %1936 = vmatpush1.msra.mxu0 0.0
    %1937 = vmatprep.subr.mxu0 0.0
    %1938 = vmatpush1.msra.mxu0 0.0
    %1939 = vmatprep.subr.mxu0 0.0
    %1940 = vmatpush1.msra.mxu0 0.0
    %1941 = vmatprep.subr.mxu0 0.0
    %1942 = vmatpush1.msra.mxu0 0.0
    %1943 = vmatprep.subr.mxu0 0.0
    %1944 = vmatpush1.msra.mxu0 0.0
    %1945 = vmatprep.subr.mxu0 0.0
    %1946 = vmatpush1.msra.mxu0 0.0
    %1947 = vmatprep.subr.mxu0 0.0
    %1948 = vmatpush1.msra.mxu0 0.0
    %1949 = vmatprep.subr.mxu0 0.0
    %1950 = vmatpush1.msra.mxu0 0.0
    %1951 = vmatprep.subr.mxu0 0.0
    %1952 = vmatpush1.msra.mxu0 0.0
    %1953 = vmatprep.subr.mxu0 0.0
    %1954 = vmatpush1.msra.mxu0 0.0
    %1955 = vmatprep.subr.mxu0 0.0
    %1956 = vmatpush1.msra.mxu0 0.0
    %1957 = vmatprep.subr.mxu0 0.0
    %1958 = vmatpush1.msra.mxu0 0.0
    %1959 = vmatprep.subr.mxu0 0.0
    %1960 = vmatpush1.msra.mxu0 0.0
    %1961 = vmatprep.subr.mxu0 0.0
    %1962 = vmatpush1.msra.mxu0 0.0
    %1963 = vmatprep.subr.mxu0 0.0
    %1964 = vmatpush1.msra.mxu0 0.0
    %1965 = vmatprep.subr.mxu0 0.0
    %1966 = vmatpush1.msra.mxu0 0.0
    %1967 = vmatprep.subr.mxu0 0.0
    %1968 = vmatpush1.msra.mxu0 0.0
    %1969 = vmatprep.subr.mxu0 0.0
    %1970 = vmatpush1.msra.mxu0 0.0
    %1971 = vmatprep.subr.mxu0 0.0
    %1972 = vmatpush1.msra.mxu0 0.0
    %1973 = vmatprep.mubr.f32.mxu0 0.0
    %1974 = vmatmul.mubr.f32.gmra.mrb[0].mxu0 %v1907
    %v1975 = vpop.f32.mrb[0].mxu0
    %v1976 = vadd.f32 0.0, %v1975
    %v1977 = vpop.f32.mrb[0].mxu0
    %v1978 = vadd.f32 0.0, %v1977
    %1979 = vdwg.mxu0
    %v1980 = vadd.f32 %v1436, %v1976
    %v1981 = vxor.u32 %v1980, 2147483648
    %v1982 = vmul.f32 %v1981, 1.442695
    %v1983 = vpow.pop %v1982
    %v1984 = vadd.f32 %v1983, 1.0
    %v1985 = vrcp.pop %v1984
    %v1986 = vmul.f32 1.0, %v1985
    %v1987 = vadd.f32 %v1978, %v1255
    %v1988 = vmul.f32 %v1986, %v1987
    %v1989 = vrot.slane %v1436, 2
    %v1991 = vadd.f32 %v1989, %v1988
    %v1992 = vtanh.pop %v1991
    %v1993 = vsub.f32 %v1889, %v1992
    %1995 = vrot.lane.b32.xlu0 %v1993, 64
    %v1996 = vpop.permute.xlu0 %1995
    %v1998 = vmul.f32 %v1986, %v1996
    %2000 = vrot.lane.b32.xlu0 %v1998, 64
    %v2001 = vpop.permute.xlu0 %2000
    %v2003 = vadd.f32 %v1992, %v2001
    %2004 = vst.msk [vmem:[%s1892] sm:$0x3] %vm387, %v2003
    %2005 = vst.msk [vmem:[%s1890] sm:$0x3] %vm390, %v2003
    %v2008 = vunpack.c.l.s4 1983009808
    %v2009 = vunpack.c.0.s8 %v2008
    %v2010 = vlaneseq
    %v2011 = vshrl.u32 %v2010, 7
    %v2012 = vsub.s32 %v2009, %v2011
    %v2013 = vrot.slane %v2003, %v2012
    %2014 = vrot.lane.b32.xlu0 %v2013, 64
    %v2015 = vpop.permute.xlu0 %2014
    %2017 = vst.msk [vmem:[%s1890] sm:$0x3] %vm403, %v2015
    %2018 = vst.msk [vmem:[%s1892] sm:$0x3] %vm405, %v2015
    %v2019 = vsel %vm288, %v2003, 0
    %2021 = vmatprep.subr.mxu0 %v1240
    %2022 = vmatpush1.msra.mxu0 %v1239
    %2023 = vmatprep.subr.mxu0 %v1242
    %2024 = vmatpush1.msra.mxu0 %v1241
    %2025 = vmatprep.subr.mxu0 %v1244
    %2026 = vmatpush1.msra.mxu0 %v1243
    %2027 = vmatprep.subr.mxu0 %v1246
    %2028 = vmatpush1.msra.mxu0 %v1245
    %2029 = vmatprep.subr.mxu0 %v1248
    %2030 = vmatpush1.msra.mxu0 %v1247
    %2031 = vmatprep.subr.mxu0 %v1250
    %2032 = vmatpush1.msra.mxu0 %v1249
    %2033 = vmatprep.subr.mxu0 %v1252
    %2034 = vmatpush1.msra.mxu0 %v1251
    %2035 = vmatprep.subr.mxu0 %v1254
    %2036 = vmatpush1.msra.mxu0 %v1253
    %2037 = vmatprep.subr.mxu0 0.0
    %2038 = vmatpush1.msra.mxu0 0.0
    %2039 = vmatprep.subr.mxu0 0.0
    %2040 = vmatpush1.msra.mxu0 0.0
    %2041 = vmatprep.subr.mxu0 0.0
    %2042 = vmatpush1.msra.mxu0 0.0
    %2043 = vmatprep.subr.mxu0 0.0
    %2044 = vmatpush1.msra.mxu0 0.0
    %2045 = vmatprep.subr.mxu0 0.0
    %2046 = vmatpush1.msra.mxu0 0.0
    %2047 = vmatprep.subr.mxu0 0.0
    %2048 = vmatpush1.msra.mxu0 0.0
    %2049 = vmatprep.subr.mxu0 0.0
    %2050 = vmatpush1.msra.mxu0 0.0
    %2051 = vmatprep.subr.mxu0 0.0
    %2052 = vmatpush1.msra.mxu0 0.0
    %2053 = vmatprep.subr.mxu0 0.0
    %2054 = vmatpush1.msra.mxu0 0.0
    %2055 = vmatprep.subr.mxu0 0.0
    %2056 = vmatpush1.msra.mxu0 0.0
    %2057 = vmatprep.subr.mxu0 0.0
    %2058 = vmatpush1.msra.mxu0 0.0
    %2059 = vmatprep.subr.mxu0 0.0
    %2060 = vmatpush1.msra.mxu0 0.0
    %2061 = vmatprep.subr.mxu0 0.0
    %2062 = vmatpush1.msra.mxu0 0.0
    %2063 = vmatprep.subr.mxu0 0.0
    %2064 = vmatpush1.msra.mxu0 0.0
    %2065 = vmatprep.subr.mxu0 0.0
    %2066 = vmatpush1.msra.mxu0 0.0
    %2067 = vmatprep.subr.mxu0 0.0
    %2068 = vmatpush1.msra.mxu0 0.0
    %2069 = vmatprep.subr.mxu0 0.0
    %2070 = vmatpush1.msra.mxu0 0.0
    %2071 = vmatprep.subr.mxu0 0.0
    %2072 = vmatpush1.msra.mxu0 0.0
    %2073 = vmatprep.subr.mxu0 0.0
    %2074 = vmatpush1.msra.mxu0 0.0
    %2075 = vmatprep.subr.mxu0 0.0
    %2076 = vmatpush1.msra.mxu0 0.0
    %2077 = vmatprep.subr.mxu0 0.0
    %2078 = vmatpush1.msra.mxu0 0.0
    %2079 = vmatprep.subr.mxu0 0.0
    %2080 = vmatpush1.msra.mxu0 0.0
    %2081 = vmatprep.subr.mxu0 0.0
    %2082 = vmatpush1.msra.mxu0 0.0
    %2083 = vmatprep.subr.mxu0 0.0
    %2084 = vmatpush1.msra.mxu0 0.0
    %2085 = vmatprep.mubr.f32.mxu0 0.0
    %2086 = vmatmul.mubr.f32.gmra.mrb[0].mxu0 %v2019
    %v2087 = vpop.f32.mrb[0].mxu0
    %v2088 = vadd.f32 0.0, %v2087
    %v2089 = vpop.f32.mrb[0].mxu0
    %v2090 = vadd.f32 0.0, %v2089
    %2091 = vdwg.mxu0
    %v2092 = vadd.f32 %v1444, %v2088
    %v2093 = vxor.u32 %v2092, 2147483648
    %v2094 = vmul.f32 %v2093, 1.442695
    %v2095 = vpow.pop %v2094
    %v2096 = vadd.f32 %v2095, 1.0
    %v2097 = vrcp.pop %v2096
    %v2098 = vmul.f32 1.0, %v2097
    %v2099 = vadd.f32 %v2090, %v1255
    %v2100 = vmul.f32 %v2098, %v2099
    %v2101 = vrot.slane %v1444, 2
    %v2103 = vadd.f32 %v2101, %v2100
    %v2104 = vtanh.pop %v2103
    %v2105 = vsub.f32 %v2003, %v2104
    %2107 = vrot.lane.b32.xlu0 %v2105, 64
    %v2108 = vpop.permute.xlu0 %2107
    %v2110 = vmul.f32 %v2098, %v2108
    %2112 = vrot.lane.b32.xlu0 %v2110, 64
    %v2113 = vpop.permute.xlu0 %2112
    %v2115 = vadd.f32 %v2104, %v2113
    %2116 = vst.msk [vmem:[%s1778] sm:$0x3] %vm387, %v2115
    %2117 = vst.msk [vmem:[%s1776] sm:$0x3] %vm390, %v2115
    %v2120 = vunpack.c.l.s4 1983009808
    %v2121 = vunpack.c.0.s8 %v2120
    %v2122 = vlaneseq
    %v2123 = vshrl.u32 %v2122, 7
    %v2124 = vsub.s32 %v2121, %v2123
    %v2125 = vrot.slane %v2115, %v2124
    %2126 = vrot.lane.b32.xlu0 %v2125, 64
    %v2127 = vpop.permute.xlu0 %2126
    %2129 = vst.msk [vmem:[%s1776] sm:$0x3] %vm403, %v2127
    %2130 = vst.msk [vmem:[%s1778] sm:$0x3] %vm405, %v2127
    %v2131 = vsel %vm288, %v2115, 0
    %2133 = vmatprep.subr.mxu0 %v1240
    %2134 = vmatpush1.msra.mxu0 %v1239
    %2135 = vmatprep.subr.mxu0 %v1242
    %2136 = vmatpush1.msra.mxu0 %v1241
    %2137 = vmatprep.subr.mxu0 %v1244
    %2138 = vmatpush1.msra.mxu0 %v1243
    %2139 = vmatprep.subr.mxu0 %v1246
    %2140 = vmatpush1.msra.mxu0 %v1245
    %2141 = vmatprep.subr.mxu0 %v1248
    %2142 = vmatpush1.msra.mxu0 %v1247
    %2143 = vmatprep.subr.mxu0 %v1250
    %2144 = vmatpush1.msra.mxu0 %v1249
    %2145 = vmatprep.subr.mxu0 %v1252
    %2146 = vmatpush1.msra.mxu0 %v1251
    %2147 = vmatprep.subr.mxu0 %v1254
    %2148 = vmatpush1.msra.mxu0 %v1253
    %2149 = vmatprep.subr.mxu0 0.0
    %2150 = vmatpush1.msra.mxu0 0.0
    %2151 = vmatprep.subr.mxu0 0.0
    %2152 = vmatpush1.msra.mxu0 0.0
    %2153 = vmatprep.subr.mxu0 0.0
    %2154 = vmatpush1.msra.mxu0 0.0
    %2155 = vmatprep.subr.mxu0 0.0
    %2156 = vmatpush1.msra.mxu0 0.0
    %2157 = vmatprep.subr.mxu0 0.0
    %2158 = vmatpush1.msra.mxu0 0.0
    %2159 = vmatprep.subr.mxu0 0.0
    %2160 = vmatpush1.msra.mxu0 0.0
    %2161 = vmatprep.subr.mxu0 0.0
    %2162 = vmatpush1.msra.mxu0 0.0
    %2163 = vmatprep.subr.mxu0 0.0
    %2164 = vmatpush1.msra.mxu0 0.0
    %2165 = vmatprep.subr.mxu0 0.0
    %2166 = vmatpush1.msra.mxu0 0.0
    %2167 = vmatprep.subr.mxu0 0.0
    %2168 = vmatpush1.msra.mxu0 0.0
    %2169 = vmatprep.subr.mxu0 0.0
    %2170 = vmatpush1.msra.mxu0 0.0
    %2171 = vmatprep.subr.mxu0 0.0
    %2172 = vmatpush1.msra.mxu0 0.0
    %2173 = vmatprep.subr.mxu0 0.0
    %2174 = vmatpush1.msra.mxu0 0.0
    %2175 = vmatprep.subr.mxu0 0.0
    %2176 = vmatpush1.msra.mxu0 0.0
    %2177 = vmatprep.subr.mxu0 0.0
    %2178 = vmatpush1.msra.mxu0 0.0
    %2179 = vmatprep.subr.mxu0 0.0
    %2180 = vmatpush1.msra.mxu0 0.0
    %2181 = vmatprep.subr.mxu0 0.0
    %2182 = vmatpush1.msra.mxu0 0.0
    %2183 = vmatprep.subr.mxu0 0.0
    %2184 = vmatpush1.msra.mxu0 0.0
    %2185 = vmatprep.subr.mxu0 0.0
    %2186 = vmatpush1.msra.mxu0 0.0
    %2187 = vmatprep.subr.mxu0 0.0
    %2188 = vmatpush1.msra.mxu0 0.0
    %2189 = vmatprep.subr.mxu0 0.0
    %2190 = vmatpush1.msra.mxu0 0.0
    %2191 = vmatprep.subr.mxu0 0.0
    %2192 = vmatpush1.msra.mxu0 0.0
    %2193 = vmatprep.subr.mxu0 0.0
    %2194 = vmatpush1.msra.mxu0 0.0
    %2195 = vmatprep.subr.mxu0 0.0
    %2196 = vmatpush1.msra.mxu0 0.0
    %2197 = vmatprep.mubr.f32.mxu0 0.0
    %2198 = vmatmul.mubr.f32.gmra.mrb[0].mxu0 %v2131
    %v2199 = vpop.f32.mrb[0].mxu0
    %v2200 = vadd.f32 0.0, %v2199
    %v2201 = vpop.f32.mrb[0].mxu0
    %v2202 = vadd.f32 0.0, %v2201
    %2203 = vdwg.mxu0
    %v2204 = vadd.f32 %v1443, %v2200
    %v2205 = vxor.u32 %v2204, 2147483648
    %v2206 = vmul.f32 %v2205, 1.442695
    %v2207 = vpow.pop %v2206
    %v2208 = vadd.f32 %v2207, 1.0
    %v2209 = vrcp.pop %v2208
    %v2210 = vmul.f32 1.0, %v2209
    %v2211 = vadd.f32 %v2202, %v1255
    %v2212 = vmul.f32 %v2210, %v2211
    %v2213 = vrot.slane %v1443, 2
    %v2215 = vadd.f32 %v2213, %v2212
    %v2216 = vtanh.pop %v2215
    %v2217 = vsub.f32 %v2115, %v2216
    %2219 = vrot.lane.b32.xlu0 %v2217, 64
    %v2220 = vpop.permute.xlu0 %2219
    %v2222 = vmul.f32 %v2210, %v2220
    %2224 = vrot.lane.b32.xlu0 %v2222, 64
    %v2225 = vpop.permute.xlu0 %2224
    %v2227 = vadd.f32 %v2216, %v2225
    %2228 = vst.msk [vmem:[%s1664] sm:$0x3] %vm387, %v2227
    %2229 = vst.msk [vmem:[%s1662] sm:$0x3] %vm390, %v2227
    %v2232 = vunpack.c.l.s4 1983009808
    %v2233 = vunpack.c.0.s8 %v2232
    %v2234 = vlaneseq
    %v2235 = vshrl.u32 %v2234, 7
    %v2236 = vsub.s32 %v2233, %v2235
    %v2237 = vrot.slane %v2227, %v2236
    %2238 = vrot.lane.b32.xlu0 %v2237, 64
    %v2239 = vpop.permute.xlu0 %2238
    %2241 = vst.msk [vmem:[%s1662] sm:$0x3] %vm403, %v2239
    %2242 = vst.msk [vmem:[%s1664] sm:$0x3] %vm405, %v2239
    %v2243 = vsel %vm288, %v2227, 0
    %2245 = vmatprep.subr.mxu0 %v1240
    %2246 = vmatpush1.msra.mxu0 %v1239
    %2247 = vmatprep.subr.mxu0 %v1242
    %2248 = vmatpush1.msra.mxu0 %v1241
    %2249 = vmatprep.subr.mxu0 %v1244
    %2250 = vmatpush1.msra.mxu0 %v1243
    %2251 = vmatprep.subr.mxu0 %v1246
    %2252 = vmatpush1.msra.mxu0 %v1245
    %2253 = vmatprep.subr.mxu0 %v1248
    %2254 = vmatpush1.msra.mxu0 %v1247
    %2255 = vmatprep.subr.mxu0 %v1250
    %2256 = vmatpush1.msra.mxu0 %v1249
    %2257 = vmatprep.subr.mxu0 %v1252
    %2258 = vmatpush1.msra.mxu0 %v1251
    %2259 = vmatprep.subr.mxu0 %v1254
    %2260 = vmatpush1.msra.mxu0 %v1253
    %2261 = vmatprep.subr.mxu0 0.0
    %2262 = vmatpush1.msra.mxu0 0.0
    %2263 = vmatprep.subr.mxu0 0.0
    %2264 = vmatpush1.msra.mxu0 0.0
    %2265 = vmatprep.subr.mxu0 0.0
    %2266 = vmatpush1.msra.mxu0 0.0
    %2267 = vmatprep.subr.mxu0 0.0
    %2268 = vmatpush1.msra.mxu0 0.0
    %2269 = vmatprep.subr.mxu0 0.0
    %2270 = vmatpush1.msra.mxu0 0.0
    %2271 = vmatprep.subr.mxu0 0.0
    %2272 = vmatpush1.msra.mxu0 0.0
    %2273 = vmatprep.subr.mxu0 0.0
    %2274 = vmatpush1.msra.mxu0 0.0
    %2275 = vmatprep.subr.mxu0 0.0
    %2276 = vmatpush1.msra.mxu0 0.0
    %2277 = vmatprep.subr.mxu0 0.0
    %2278 = vmatpush1.msra.mxu0 0.0
    %2279 = vmatprep.subr.mxu0 0.0
    %2280 = vmatpush1.msra.mxu0 0.0
    %2281 = vmatprep.subr.mxu0 0.0
    %2282 = vmatpush1.msra.mxu0 0.0
    %2283 = vmatprep.subr.mxu0 0.0
    %2284 = vmatpush1.msra.mxu0 0.0
    %2285 = vmatprep.subr.mxu0 0.0
    %2286 = vmatpush1.msra.mxu0 0.0
    %2287 = vmatprep.subr.mxu0 0.0
    %2288 = vmatpush1.msra.mxu0 0.0
    %2289 = vmatprep.subr.mxu0 0.0
    %2290 = vmatpush1.msra.mxu0 0.0
    %2291 = vmatprep.subr.mxu0 0.0
    %2292 = vmatpush1.msra.mxu0 0.0
    %2293 = vmatprep.subr.mxu0 0.0
    %2294 = vmatpush1.msra.mxu0 0.0
    %2295 = vmatprep.subr.mxu0 0.0
    %2296 = vmatpush1.msra.mxu0 0.0
    %2297 = vmatprep.subr.mxu0 0.0
    %2298 = vmatpush1.msra.mxu0 0.0
    %2299 = vmatprep.subr.mxu0 0.0
    %2300 = vmatpush1.msra.mxu0 0.0
    %2301 = vmatprep.subr.mxu0 0.0
    %2302 = vmatpush1.msra.mxu0 0.0
    %2303 = vmatprep.subr.mxu0 0.0
    %2304 = vmatpush1.msra.mxu0 0.0
    %2305 = vmatprep.subr.mxu0 0.0
    %2306 = vmatpush1.msra.mxu0 0.0
    %2307 = vmatprep.subr.mxu0 0.0
    %2308 = vmatpush1.msra.mxu0 0.0
    %2309 = vmatprep.mubr.f32.mxu0 0.0
    %2310 = vmatmul.mubr.f32.gmra.mrb[0].mxu0 %v2243
    %v2311 = vpop.f32.mrb[0].mxu0
    %v2312 = vadd.f32 0.0, %v2311
    %v2313 = vpop.f32.mrb[0].mxu0
    %v2314 = vadd.f32 0.0, %v2313
    %2315 = vdwg.mxu0
    %v2316 = vadd.f32 %v1445, %v2312
    %v2317 = vxor.u32 %v2316, 2147483648
    %v2318 = vmul.f32 %v2317, 1.442695
    %v2319 = vpow.pop %v2318
    %v2320 = vadd.f32 %v2319, 1.0
    %v2321 = vrcp.pop %v2320
    %v2322 = vmul.f32 1.0, %v2321
    %v2323 = vadd.f32 %v2314, %v1255
    %v2324 = vmul.f32 %v2322, %v2323
    %v2325 = vrot.slane %v1445, 2
    %v2327 = vadd.f32 %v2325, %v2324
    %v2328 = vtanh.pop %v2327
    %v2329 = vsub.f32 %v2227, %v2328
    %2331 = vrot.lane.b32.xlu0 %v2329, 64
    %v2332 = vpop.permute.xlu0 %2331
    %v2334 = vmul.f32 %v2322, %v2332
    %2336 = vrot.lane.b32.xlu0 %v2334, 64
    %v2337 = vpop.permute.xlu0 %2336
    %v2339 = vadd.f32 %v2328, %v2337
    %2340 = vst.msk [vmem:[%s1550] sm:$0x3] %vm387, %v2339
    %2341 = vst.msk [vmem:[#allocation3] sm:$0x3] %vm390, %v2339
    %v2344 = vunpack.c.l.s4 1983009808
    %v2345 = vunpack.c.0.s8 %v2344
    %v2346 = vlaneseq
    %v2347 = vshrl.u32 %v2346, 7
    %v2348 = vsub.s32 %v2345, %v2347
    %v2349 = vrot.slane %v2339, %v2348
    %2350 = vrot.lane.b32.xlu0 %v2349, 64
    %v2351 = vpop.permute.xlu0 %2350
    %2353 = vst.msk [vmem:[#allocation3] sm:$0x3] %vm403, %v2351
    %2354 = vst.msk [vmem:[%s1550] sm:$0x3] %vm405, %v2351
    %v2355 = vld [vmem:[#allocation3] sm:$0x3]
    %v2356 = vld [vmem:[#allocation3 + $0x2] sm:$0x3]
    %v2357 = vld [vmem:[#allocation3 + $0x4] sm:$0x3]
    %v2358 = vld [vmem:[#allocation3 + $0x6] sm:$0x3]
    %v2359 = vld [vmem:[#allocation3 + $0x8] sm:$0x3]
    %v2360 = vld [vmem:[#allocation3 + $0xa] sm:$0x3]
    %v2361 = vld [vmem:[#allocation3 + $0xc] sm:$0x3]
    %v2362 = vld [vmem:[#allocation3 + $0xe] sm:$0x3]
    %2371 = vrot.lane.b32.xlu0 %v2355, 112
    %v2372 = vpop.permute.xlu0 %2371
    %2373 = vrot.lane.b32.xlu0 %v2356, 112
    %v2374 = vpop.permute.xlu0 %2373
    %2375 = vrot.lane.b32.xlu0 %v2357, 112
    %v2376 = vpop.permute.xlu0 %2375
    %2377 = vrot.lane.b32.xlu0 %v2358, 112
    %v2378 = vpop.permute.xlu0 %2377
    %2379 = vrot.lane.b32.xlu0 %v2359, 112
    %v2380 = vpop.permute.xlu0 %2379
    %2381 = vrot.lane.b32.xlu0 %v2360, 112
    %v2382 = vpop.permute.xlu0 %2381
    %2383 = vrot.lane.b32.xlu0 %v2361, 112
    %v2384 = vpop.permute.xlu0 %2383
    %2385 = vrot.lane.b32.xlu0 %v2362, 112
    %v2386 = vpop.permute.xlu0 %2385
    %2395 = vrot.lane.b32.xlu0 %v2355, 16
    %v2396 = vpop.permute.xlu0 %2395
    %2397 = vrot.lane.b32.xlu0 %v2356, 16
    %v2398 = vpop.permute.xlu0 %2397
    %2399 = vrot.lane.b32.xlu0 %v2357, 16
    %v2400 = vpop.permute.xlu0 %2399
    %2401 = vrot.lane.b32.xlu0 %v2358, 16
    %v2402 = vpop.permute.xlu0 %2401
    %2403 = vrot.lane.b32.xlu0 %v2359, 16
    %v2404 = vpop.permute.xlu0 %2403
    %2405 = vrot.lane.b32.xlu0 %v2360, 16
    %v2406 = vpop.permute.xlu0 %2405
    %2407 = vrot.lane.b32.xlu0 %v2361, 16
    %v2408 = vpop.permute.xlu0 %2407
    %2409 = vrot.lane.b32.xlu0 %v2362, 16
    %v2410 = vpop.permute.xlu0 %2409
    %vm2419 = vcmask 130048
    %v2420 = vsel %vm2419, %v2355, %v2372
    %v2421 = vsel %vm2419, %v2356, %v2374
    %v2422 = vsel %vm2419, %v2357, %v2376
    %v2423 = vsel %vm2419, %v2358, %v2378
    %v2424 = vsel %vm2419, %v2359, %v2380
    %v2425 = vsel %vm2419, %v2360, %v2382
    %v2426 = vsel %vm2419, %v2361, %v2384
    %v2427 = vsel %vm2419, %v2362, %v2386
    %vm2428 = vcmask 261120
    %v2429 = vsel %vm2428, %v2420, %v2396
    %v2430 = vsel %vm2428, %v2421, %v2398
    %v2431 = vsel %vm2428, %v2422, %v2400
    %v2432 = vsel %vm2428, %v2423, %v2402
    %v2433 = vsel %vm2428, %v2424, %v2404
    %v2434 = vsel %vm2428, %v2425, %v2406
    %v2435 = vsel %vm2428, %v2426, %v2408
    %v2436 = vsel %vm2428, %v2427, %v2410
    %v2437 = vsel %vm158, %v2429, %v2355
    %v2438 = vsel %vm158, %v2430, %v2356
    %v2439 = vsel %vm158, %v2431, %v2357
    %v2440 = vsel %vm158, %v2432, %v2358
    %v2441 = vsel %vm158, %v2433, %v2359
    %v2442 = vsel %vm158, %v2434, %v2360
    %v2443 = vsel %vm158, %v2435, %v2361
    %v2444 = vsel %vm158, %v2436, %v2362
    %v2445 = vsel %vm387, %v2437, 0.0
    %2446 = vadd.xlane.f32.xlu0 %v2445
    %v2447 = vpop.xlane.xlu0 %2446
    %v2448 = vsel %vm387, %v2438, 0.0
    %2449 = vadd.xlane.f32.xlu0 %v2448
    %v2450 = vpop.xlane.xlu0 %2449
    %v2451 = vsel %vm387, %v2439, 0.0
    %2452 = vadd.xlane.f32.xlu0 %v2451
    %v2453 = vpop.xlane.xlu0 %2452
    %v2454 = vsel %vm387, %v2440, 0.0
    %2455 = vadd.xlane.f32.xlu0 %v2454
    %v2456 = vpop.xlane.xlu0 %2455
    %v2457 = vsel %vm387, %v2441, 0.0
    %2458 = vadd.xlane.f32.xlu0 %v2457
    %v2459 = vpop.xlane.xlu0 %2458
    %v2460 = vsel %vm387, %v2442, 0.0
    %2461 = vadd.xlane.f32.xlu0 %v2460
    %v2462 = vpop.xlane.xlu0 %2461
    %v2463 = vsel %vm387, %v2443, 0.0
    %2464 = vadd.xlane.f32.xlu0 %v2463
    %v2465 = vpop.xlane.xlu0 %2464
    %v2466 = vsel %vm387, %v2444, 0.0
    %2467 = vadd.xlane.f32.xlu0 %v2466
    %v2468 = vpop.xlane.xlu0 %2467
    %v2469 = vrcp.pop 32.0
    %v2470 = vmul.f32 %v2447, %v2469
    %v2471 = vmul.f32 %v2450, %v2469
    %v2472 = vmul.f32 %v2453, %v2469
    %v2473 = vmul.f32 %v2456, %v2469
    %v2474 = vmul.f32 %v2459, %v2469
    %v2475 = vmul.f32 %v2462, %v2469
    %v2476 = vmul.f32 %v2465, %v2469
    %v2477 = vmul.f32 %v2468, %v2469
    %2486 = vrot.lane.b32.xlu0 %v2437, 96
    %v2487 = vpop.permute.xlu0 %2486
    %2488 = vrot.lane.b32.xlu0 %v2438, 96
    %v2489 = vpop.permute.xlu0 %2488
    %2490 = vrot.lane.b32.xlu0 %v2439, 96
    %v2491 = vpop.permute.xlu0 %2490
    %2492 = vrot.lane.b32.xlu0 %v2440, 96
    %v2493 = vpop.permute.xlu0 %2492
    %2494 = vrot.lane.b32.xlu0 %v2441, 96
    %v2495 = vpop.permute.xlu0 %2494
    %2496 = vrot.lane.b32.xlu0 %v2442, 96
    %v2497 = vpop.permute.xlu0 %2496
    %2498 = vrot.lane.b32.xlu0 %v2443, 96
    %v2499 = vpop.permute.xlu0 %2498
    %2500 = vrot.lane.b32.xlu0 %v2444, 96
    %v2501 = vpop.permute.xlu0 %2500
    %v2510 = vsel %vm387, %v2487, 0.0
    %2511 = vadd.xlane.f32.xlu0 %v2510
    %v2512 = vpop.xlane.xlu0 %2511
    %v2513 = vsel %vm387, %v2489, 0.0
    %2514 = vadd.xlane.f32.xlu0 %v2513
    %v2515 = vpop.xlane.xlu0 %2514
    %v2516 = vsel %vm387, %v2491, 0.0
    %2517 = vadd.xlane.f32.xlu0 %v2516
    %v2518 = vpop.xlane.xlu0 %2517
    %v2519 = vsel %vm387, %v2493, 0.0
    %2520 = vadd.xlane.f32.xlu0 %v2519
    %v2521 = vpop.xlane.xlu0 %2520
    %v2522 = vsel %vm387, %v2495, 0.0
    %2523 = vadd.xlane.f32.xlu0 %v2522
    %v2524 = vpop.xlane.xlu0 %2523
    %v2525 = vsel %vm387, %v2497, 0.0
    %2526 = vadd.xlane.f32.xlu0 %v2525
    %v2527 = vpop.xlane.xlu0 %2526
    %v2528 = vsel %vm387, %v2499, 0.0
    %2529 = vadd.xlane.f32.xlu0 %v2528
    %v2530 = vpop.xlane.xlu0 %2529
    %v2531 = vsel %vm387, %v2501, 0.0
    %2532 = vadd.xlane.f32.xlu0 %v2531
    %v2533 = vpop.xlane.xlu0 %2532
    %v2534 = vmul.f32 %v2512, %v2469
    %v2535 = vmul.f32 %v2515, %v2469
    %v2536 = vmul.f32 %v2518, %v2469
    %v2537 = vmul.f32 %v2521, %v2469
    %v2538 = vmul.f32 %v2524, %v2469
    %v2539 = vmul.f32 %v2527, %v2469
    %v2540 = vmul.f32 %v2530, %v2469
    %v2541 = vmul.f32 %v2533, %v2469
    %v2542 = vsub.f32 %v2437, %v2470
    %v2543 = vsub.f32 %v2438, %v2471
    %v2544 = vsub.f32 %v2439, %v2472
    %v2545 = vsub.f32 %v2440, %v2473
    %v2546 = vsub.f32 %v2441, %v2474
    %v2547 = vsub.f32 %v2442, %v2475
    %v2548 = vsub.f32 %v2443, %v2476
    %v2549 = vsub.f32 %v2444, %v2477
    %v2550 = vmul.f32 %v2542, %v2542
    %v2551 = vmul.f32 %v2543, %v2543
    %v2552 = vmul.f32 %v2544, %v2544
    %v2553 = vmul.f32 %v2545, %v2545
    %v2554 = vmul.f32 %v2546, %v2546
    %v2555 = vmul.f32 %v2547, %v2547
    %v2556 = vmul.f32 %v2548, %v2548
    %v2557 = vmul.f32 %v2549, %v2549
    %v2558 = vsel %vm387, %v2550, 0.0
    %2559 = vadd.xlane.f32.xlu0 %v2558
    %v2560 = vpop.xlane.xlu0 %2559
    %v2561 = vsel %vm387, %v2551, 0.0
    %2562 = vadd.xlane.f32.xlu0 %v2561
    %v2563 = vpop.xlane.xlu0 %2562
    %v2564 = vsel %vm387, %v2552, 0.0
    %2565 = vadd.xlane.f32.xlu0 %v2564
    %v2566 = vpop.xlane.xlu0 %2565
    %v2567 = vsel %vm387, %v2553, 0.0
    %2568 = vadd.xlane.f32.xlu0 %v2567
    %v2569 = vpop.xlane.xlu0 %2568
    %v2570 = vsel %vm387, %v2554, 0.0
    %2571 = vadd.xlane.f32.xlu0 %v2570
    %v2572 = vpop.xlane.xlu0 %2571
    %v2573 = vsel %vm387, %v2555, 0.0
    %2574 = vadd.xlane.f32.xlu0 %v2573
    %v2575 = vpop.xlane.xlu0 %2574
    %v2576 = vsel %vm387, %v2556, 0.0
    %2577 = vadd.xlane.f32.xlu0 %v2576
    %v2578 = vpop.xlane.xlu0 %2577
    %v2579 = vsel %vm387, %v2557, 0.0
    %2580 = vadd.xlane.f32.xlu0 %v2579
    %v2581 = vpop.xlane.xlu0 %2580
    %v2582 = vmul.f32 %v2560, %v2469
    %v2583 = vmul.f32 %v2563, %v2469
    %v2584 = vmul.f32 %v2566, %v2469
    %v2585 = vmul.f32 %v2569, %v2469
    %v2586 = vmul.f32 %v2572, %v2469
    %v2587 = vmul.f32 %v2575, %v2469
    %v2588 = vmul.f32 %v2578, %v2469
    %v2589 = vmul.f32 %v2581, %v2469
    %v2590 = vsub.f32 %v2437, %v2534
    %v2591 = vsub.f32 %v2438, %v2535
    %v2592 = vsub.f32 %v2439, %v2536
    %v2593 = vsub.f32 %v2440, %v2537
    %v2594 = vsub.f32 %v2441, %v2538
    %v2595 = vsub.f32 %v2442, %v2539
    %v2596 = vsub.f32 %v2443, %v2540
    %v2597 = vsub.f32 %v2444, %v2541
    %v2598 = vmul.f32 %v2590, %v2590
    %v2599 = vmul.f32 %v2591, %v2591
    %v2600 = vmul.f32 %v2592, %v2592
    %v2601 = vmul.f32 %v2593, %v2593
    %v2602 = vmul.f32 %v2594, %v2594
    %v2603 = vmul.f32 %v2595, %v2595
    %v2604 = vmul.f32 %v2596, %v2596
    %v2605 = vmul.f32 %v2597, %v2597
    %2614 = vrot.lane.b32.xlu0 %v2598, 96
    %v2615 = vpop.permute.xlu0 %2614
    %2616 = vrot.lane.b32.xlu0 %v2599, 96
    %v2617 = vpop.permute.xlu0 %2616
    %2618 = vrot.lane.b32.xlu0 %v2600, 96
    %v2619 = vpop.permute.xlu0 %2618
    %2620 = vrot.lane.b32.xlu0 %v2601, 96
    %v2621 = vpop.permute.xlu0 %2620
    %2622 = vrot.lane.b32.xlu0 %v2602, 96
    %v2623 = vpop.permute.xlu0 %2622
    %2624 = vrot.lane.b32.xlu0 %v2603, 96
    %v2625 = vpop.permute.xlu0 %2624
    %2626 = vrot.lane.b32.xlu0 %v2604, 96
    %v2627 = vpop.permute.xlu0 %2626
    %2628 = vrot.lane.b32.xlu0 %v2605, 96
    %v2629 = vpop.permute.xlu0 %2628
    %v2638 = vsel %vm387, %v2615, 0.0
    %2639 = vadd.xlane.f32.xlu0 %v2638
    %v2640 = vpop.xlane.xlu0 %2639
    %v2641 = vsel %vm387, %v2617, 0.0
    %2642 = vadd.xlane.f32.xlu0 %v2641
    %v2643 = vpop.xlane.xlu0 %2642
    %v2644 = vsel %vm387, %v2619, 0.0
    %2645 = vadd.xlane.f32.xlu0 %v2644
    %v2646 = vpop.xlane.xlu0 %2645
    %v2647 = vsel %vm387, %v2621, 0.0
    %2648 = vadd.xlane.f32.xlu0 %v2647
    %v2649 = vpop.xlane.xlu0 %2648
    %v2650 = vsel %vm387, %v2623, 0.0
    %2651 = vadd.xlane.f32.xlu0 %v2650
    %v2652 = vpop.xlane.xlu0 %2651
    %v2653 = vsel %vm387, %v2625, 0.0
    %2654 = vadd.xlane.f32.xlu0 %v2653
    %v2655 = vpop.xlane.xlu0 %2654
    %v2656 = vsel %vm387, %v2627, 0.0
    %2657 = vadd.xlane.f32.xlu0 %v2656
    %v2658 = vpop.xlane.xlu0 %2657
    %v2659 = vsel %vm387, %v2629, 0.0
    %2660 = vadd.xlane.f32.xlu0 %v2659
    %v2661 = vpop.xlane.xlu0 %2660
    %v2662 = vmul.f32 %v2640, %v2469
    %v2663 = vmul.f32 %v2643, %v2469
    %v2664 = vmul.f32 %v2646, %v2469
    %v2665 = vmul.f32 %v2649, %v2469
    %v2666 = vmul.f32 %v2652, %v2469
    %v2667 = vmul.f32 %v2655, %v2469
    %v2668 = vmul.f32 %v2658, %v2469
    %v2669 = vmul.f32 %v2661, %v2469
    %v2670 = vadd.f32 %v2582, 1e-05
    %v2671 = vadd.f32 %v2583, 1e-05
    %v2672 = vadd.f32 %v2584, 1e-05
    %v2673 = vadd.f32 %v2585, 1e-05
    %v2674 = vadd.f32 %v2586, 1e-05
    %v2675 = vadd.f32 %v2587, 1e-05
    %v2676 = vadd.f32 %v2588, 1e-05
    %v2677 = vadd.f32 %v2589, 1e-05
    %v2678 = vrsqrt.pop %v2670
    %v2679 = vrsqrt.pop %v2671
    %v2680 = vrsqrt.pop %v2672
    %v2681 = vrsqrt.pop %v2673
    %v2682 = vrsqrt.pop %v2674
    %v2683 = vrsqrt.pop %v2675
    %v2684 = vrsqrt.pop %v2676
    %v2685 = vrsqrt.pop %v2677
    %v2686 = vmul.f32 %v2542, %v2678
    %v2687 = vmul.f32 %v2543, %v2679
    %v2688 = vmul.f32 %v2544, %v2680
    %v2689 = vmul.f32 %v2545, %v2681
    %v2690 = vmul.f32 %v2546, %v2682
    %v2691 = vmul.f32 %v2547, %v2683
    %v2692 = vmul.f32 %v2548, %v2684
    %v2693 = vmul.f32 %v2549, %v2685
    %v2694 = vadd.f32 %v2662, 1e-05
    %v2695 = vadd.f32 %v2663, 1e-05
    %v2696 = vadd.f32 %v2664, 1e-05
    %v2697 = vadd.f32 %v2665, 1e-05
    %v2698 = vadd.f32 %v2666, 1e-05
    %v2699 = vadd.f32 %v2667, 1e-05
    %v2700 = vadd.f32 %v2668, 1e-05
    %v2701 = vadd.f32 %v2669, 1e-05
    %v2702 = vrsqrt.pop %v2694
    %v2703 = vrsqrt.pop %v2695
    %v2704 = vrsqrt.pop %v2696
    %v2705 = vrsqrt.pop %v2697
    %v2706 = vrsqrt.pop %v2698
    %v2707 = vrsqrt.pop %v2699
    %v2708 = vrsqrt.pop %v2700
    %v2709 = vrsqrt.pop %v2701
    %v2710 = vmul.f32 %v2590, %v2702
    %v2711 = vmul.f32 %v2591, %v2703
    %v2712 = vmul.f32 %v2592, %v2704
    %v2713 = vmul.f32 %v2593, %v2705
    %v2714 = vmul.f32 %v2594, %v2706
    %v2715 = vmul.f32 %v2595, %v2707
    %v2716 = vmul.f32 %v2596, %v2708
    %v2717 = vmul.f32 %v2597, %v2709
    %v2718 = vsel %vm2428, %v2686, %v2710
    %v2719 = vsel %vm2428, %v2687, %v2711
    %v2720 = vsel %vm2428, %v2688, %v2712
    %v2721 = vsel %vm2428, %v2689, %v2713
    %v2722 = vsel %vm2428, %v2690, %v2714
    %v2723 = vsel %vm2428, %v2691, %v2715
    %v2724 = vsel %vm2428, %v2692, %v2716
    %v2725 = vsel %vm2428, %v2693, %v2717
    %v2726 = vld [vmem:[%s1 + $0x3a0] ss:$0 sm:$0xff]
    %v2727 = vmul.f32 %v2718, %v2726
    %v2728 = vmul.f32 %v2719, %v2726
    %v2729 = vmul.f32 %v2720, %v2726
    %v2730 = vmul.f32 %v2721, %v2726
    %v2731 = vmul.f32 %v2722, %v2726
    %v2732 = vmul.f32 %v2723, %v2726
    %v2733 = vmul.f32 %v2724, %v2726
    %v2734 = vmul.f32 %v2725, %v2726
    %v2735 = vld [vmem:[%s1 + $0x3b0] ss:$0 sm:$0xff]
    %v2736 = vadd.f32 %v2727, %v2735
    %v2737 = vadd.f32 %v2728, %v2735
    %v2738 = vadd.f32 %v2729, %v2735
    %v2739 = vadd.f32 %v2730, %v2735
    %v2740 = vadd.f32 %v2731, %v2735
    %v2741 = vadd.f32 %v2732, %v2735
    %v2742 = vadd.f32 %v2733, %v2735
    %v2743 = vadd.f32 %v2734, %v2735
    %v2744 = vld [vmem:[%s1 + $0x3c0] sm:$0xff]
    %v2745 = vld [vmem:[%s1 + $0x3d0] sm:$0xff]
    %v2746 = vld [vmem:[%s1 + $0x3e0] sm:$0xff]
    %v2747 = vld [vmem:[%s1 + $0x3f0] sm:$0xff]
    %v2748 = vld [vmem:[%s1 + $0x400] sm:$0xff]
    %v2749 = vld [vmem:[%s1 + $0x410] sm:$0xff]
    %v2750 = vld [vmem:[%s1 + $0x420] sm:$0xff]
    %v2751 = vld [vmem:[%s1 + $0x430] sm:$0xff]
    %v2752 = vld [vmem:[%s1 + $0x440] ss:$0 sm:$0xff]
    %v2761 = vcombine.low %v2736, %v2737
    %v2762 = vcombine.low %v2738, %v2739
    %v2764 = vunpack.c.l.s4 1983009808
    %v2765 = vunpack.c.0.s8 %v2764
    %v2766 = vlaneseq
    %v2767 = vshrl.u32 %v2766, 7
    %v2768 = vsub.s32 %v2765, %v2767
    %v2769 = vrot.slane %v2761, %v2768
    %v2771 = vunpack.c.l.s4 1983009808
    %v2772 = vunpack.c.0.s8 %v2771
    %v2773 = vlaneseq
    %v2774 = vshrl.u32 %v2773, 7
    %v2775 = vsub.s32 %v2772, %v2774
    %v2776 = vrot.slane %v2762, %v2775
    %v2777 = vcombine.low %v2769, %v2776
    %v2778 = vcombine.low %v2740, %v2741
    %v2779 = vcombine.low %v2742, %v2743
    %v2781 = vunpack.c.l.s4 1983009808
    %v2782 = vunpack.c.0.s8 %v2781
    %v2783 = vlaneseq
    %v2784 = vshrl.u32 %v2783, 7
    %v2785 = vsub.s32 %v2782, %v2784
    %v2786 = vrot.slane %v2778, %v2785
    %v2788 = vunpack.c.l.s4 1983009808
    %v2789 = vunpack.c.0.s8 %v2788
    %v2790 = vlaneseq
    %v2791 = vshrl.u32 %v2790, 7
    %v2792 = vsub.s32 %v2789, %v2791
    %v2793 = vrot.slane %v2779, %v2792
    %v2794 = vcombine.low %v2786, %v2793
    %v2796 = vcombine.low %v2752, %v2752
    %v2798 = vunpack.c.l.s4 1983009808
    %v2799 = vunpack.c.0.s8 %v2798
    %v2800 = vlaneseq
    %v2801 = vshrl.u32 %v2800, 7
    %v2802 = vsub.s32 %v2799, %v2801
    %v2803 = vrot.slane %v2796, %v2802
    %v2804 = vcombine.low %v2803, %v2803
    %v2806 = vsel %vm288, %v2777, 0
    %v2808 = vsel %vm288, %v2794, 0
    %2810 = vmatprep.subr.mxu0 0.0
    %2811 = vmatpush1.msra.mxu0 %v2744
    %2812 = vmatprep.subr.mxu0 0.0
    %2813 = vmatpush1.msra.mxu0 %v2745
    %2814 = vmatprep.subr.mxu0 0.0
    %2815 = vmatpush1.msra.mxu0 %v2746
    %2816 = vmatprep.subr.mxu0 0.0
    %2817 = vmatpush1.msra.mxu0 %v2747
    %2818 = vmatprep.subr.mxu0 0.0
    %2819 = vmatpush1.msra.mxu0 %v2748
    %2820 = vmatprep.subr.mxu0 0.0
    %2821 = vmatpush1.msra.mxu0 %v2749
    %2822 = vmatprep.subr.mxu0 0.0
    %2823 = vmatpush1.msra.mxu0 %v2750
    %2824 = vmatprep.subr.mxu0 0.0
    %2825 = vmatpush1.msra.mxu0 %v2751
    %2826 = vmatprep.subr.mxu0 0.0
    %2827 = vmatpush1.msra.mxu0 0.0
    %2828 = vmatprep.subr.mxu0 0.0
    %2829 = vmatpush1.msra.mxu0 0.0
    %2830 = vmatprep.subr.mxu0 0.0
    %2831 = vmatpush1.msra.mxu0 0.0
    %2832 = vmatprep.subr.mxu0 0.0
    %2833 = vmatpush1.msra.mxu0 0.0
    %2834 = vmatprep.subr.mxu0 0.0
    %2835 = vmatpush1.msra.mxu0 0.0
    %2836 = vmatprep.subr.mxu0 0.0
    %2837 = vmatpush1.msra.mxu0 0.0
    %2838 = vmatprep.subr.mxu0 0.0
    %2839 = vmatpush1.msra.mxu0 0.0
    %2840 = vmatprep.subr.mxu0 0.0
    %2841 = vmatpush1.msra.mxu0 0.0
    %2842 = vmatprep.subr.mxu0 0.0
    %2843 = vmatpush1.msra.mxu0 0.0
    %2844 = vmatprep.subr.mxu0 0.0
    %2845 = vmatpush1.msra.mxu0 0.0
    %2846 = vmatprep.subr.mxu0 0.0
    %2847 = vmatpush1.msra.mxu0 0.0
    %2848 = vmatprep.subr.mxu0 0.0
    %2849 = vmatpush1.msra.mxu0 0.0
    %2850 = vmatprep.subr.mxu0 0.0
    %2851 = vmatpush1.msra.mxu0 0.0
    %2852 = vmatprep.subr.mxu0 0.0
    %2853 = vmatpush1.msra.mxu0 0.0
    %2854 = vmatprep.subr.mxu0 0.0
    %2855 = vmatpush1.msra.mxu0 0.0
    %2856 = vmatprep.subr.mxu0 0.0
    %2857 = vmatpush1.msra.mxu0 0.0
    %2858 = vmatprep.subr.mxu0 0.0
    %2859 = vmatpush1.msra.mxu0 0.0
    %2860 = vmatprep.subr.mxu0 0.0
    %2861 = vmatpush1.msra.mxu0 0.0
    %2862 = vmatprep.subr.mxu0 0.0
    %2863 = vmatpush1.msra.mxu0 0.0
    %2864 = vmatprep.subr.mxu0 0.0
    %2865 = vmatpush1.msra.mxu0 0.0
    %2866 = vmatprep.subr.mxu0 0.0
    %2867 = vmatpush1.msra.mxu0 0.0
    %2868 = vmatprep.subr.mxu0 0.0
    %2869 = vmatpush1.msra.mxu0 0.0
    %2870 = vmatprep.subr.mxu0 0.0
    %2871 = vmatpush1.msra.mxu0 0.0
    %2872 = vmatprep.subr.mxu0 0.0
    %2873 = vmatpush1.msra.mxu0 0.0
    %2874 = vmatprep.mubr.f32.mxu0 0.0
    %2875 = vmatmul.mubr.f32.gmra.mrb[0].mxu0 %v2806
    %v2876 = vpop.f32.mrb[0].mxu0
    %v2877 = vadd.f32 %v2804, %v2876
    %v2878 = vpop.f32.mrb[0].mxu0
    %2879 = vmatprep.mubr.f32.mxu0 0.0
    %2880 = vmatmul.mubr.f32.gmra.mrb[0].mxu0 %v2808
    %v2881 = vpop.f32.mrb[0].mxu0
    %v2882 = vadd.f32 %v2804, %v2881
    %v2883 = vpop.f32.mrb[0].mxu0
    %2884 = vdwg.mxu0
    %v2887 = vcombine.high %v2877, %v2877
    %v2889 = vunpack.c.l.s4 1983009808
    %v2890 = vunpack.c.0.s8 %v2889
    %v2891 = vlaneseq
    %v2892 = vshrl.u32 %v2891, 7
    %v2893 = vsub.s32 %v2890, %v2892
    %v2894 = vrot.slane %v2877, %v2893
    %v2896 = vunpack.c.l.s4 1983009808
    %v2897 = vunpack.c.0.s8 %v2896
    %v2898 = vlaneseq
    %v2899 = vshrl.u32 %v2898, 7
    %v2900 = vsub.s32 %v2897, %v2899
    %v2901 = vrot.slane %v2887, %v2900
    %v2902 = vcombine.high %v2894, %v2894
    %v2903 = vcombine.high %v2901, %v2901
    %v2904 = vcombine.high %v2882, %v2882
    %v2906 = vunpack.c.l.s4 1983009808
    %v2907 = vunpack.c.0.s8 %v2906
    %v2908 = vlaneseq
    %v2909 = vshrl.u32 %v2908, 7
    %v2910 = vsub.s32 %v2907, %v2909
    %v2911 = vrot.slane %v2882, %v2910
    %v2913 = vunpack.c.l.s4 1983009808
    %v2914 = vunpack.c.0.s8 %v2913
    %v2915 = vlaneseq
    %v2916 = vshrl.u32 %v2915, 7
    %v2917 = vsub.s32 %v2914, %v2916
    %v2918 = vrot.slane %v2904, %v2917
    %v2919 = vcombine.high %v2911, %v2911
    %v2920 = vcombine.high %v2918, %v2918
    %v2929 = vtanh.pop %v2894
    %v2930 = vtanh.pop %v2902
    %v2931 = vtanh.pop %v2901
    %v2932 = vtanh.pop %v2903
    %v2933 = vtanh.pop %v2911
    %v2934 = vtanh.pop %v2919
    %v2935 = vtanh.pop %v2918
    %v2936 = vtanh.pop %v2920
    %v2937 = vld [vmem:[%s1 + $0x450] ss:$0 sm:$0xff]
    %v2938 = vmul.f32 %v2929, %v2937
    %v2939 = vmul.f32 %v2930, %v2937
    %v2940 = vmul.f32 %v2931, %v2937
    %v2941 = vmul.f32 %v2932, %v2937
    %v2942 = vmul.f32 %v2933, %v2937
    %v2943 = vmul.f32 %v2934, %v2937
    %v2944 = vmul.f32 %v2935, %v2937
    %v2945 = vmul.f32 %v2936, %v2937
    %vm2946 = vcmask 123904
    %v2947 = vsel %vm2946, %v2938, 0.0
    %2948 = vadd.xlane.f32.xlu0 %v2947
    %v2949 = vpop.xlane.xlu0 %2948
    %v2950 = vsel %vm2946, %v2939, 0.0
    %2951 = vadd.xlane.f32.xlu0 %v2950
    %v2952 = vpop.xlane.xlu0 %2951
    %v2953 = vsel %vm2946, %v2940, 0.0
    %2954 = vadd.xlane.f32.xlu0 %v2953
    %v2955 = vpop.xlane.xlu0 %2954
    %v2956 = vsel %vm2946, %v2941, 0.0
    %2957 = vadd.xlane.f32.xlu0 %v2956
    %v2958 = vpop.xlane.xlu0 %2957
    %v2959 = vsel %vm2946, %v2942, 0.0
    %2960 = vadd.xlane.f32.xlu0 %v2959
    %v2961 = vpop.xlane.xlu0 %2960
    %v2962 = vsel %vm2946, %v2943, 0.0
    %2963 = vadd.xlane.f32.xlu0 %v2962
    %v2964 = vpop.xlane.xlu0 %2963
    %v2965 = vsel %vm2946, %v2944, 0.0
    %2966 = vadd.xlane.f32.xlu0 %v2965
    %v2967 = vpop.xlane.xlu0 %2966
    %v2968 = vsel %vm2946, %v2945, 0.0
    %2969 = vadd.xlane.f32.xlu0 %v2968
    %v2970 = vpop.xlane.xlu0 %2969
    %v2980 = vunpack.c.l.s4 1983009808
    %v2981 = vunpack.c.0.s8 %v2980
    %v2982 = vlaneseq
    %v2983 = vshrl.u32 %v2982, 7
    %v2984 = vsub.s32 %v2981, %v2983
    %v2985 = vrot.slane %v2938, %v2984
    %v2987 = vunpack.c.l.s4 1983009808
    %v2988 = vunpack.c.0.s8 %v2987
    %v2989 = vlaneseq
    %v2990 = vshrl.u32 %v2989, 7
    %v2991 = vsub.s32 %v2988, %v2990
    %v2992 = vrot.slane %v2939, %v2991
    %v2994 = vunpack.c.l.s4 1983009808
    %v2995 = vunpack.c.0.s8 %v2994
    %v2996 = vlaneseq
    %v2997 = vshrl.u32 %v2996, 7
    %v2998 = vsub.s32 %v2995, %v2997
    %v2999 = vrot.slane %v2940, %v2998
    %v3001 = vunpack.c.l.s4 1983009808
    %v3002 = vunpack.c.0.s8 %v3001
    %v3003 = vlaneseq
    %v3004 = vshrl.u32 %v3003, 7
    %v3005 = vsub.s32 %v3002, %v3004
    %v3006 = vrot.slane %v2941, %v3005
    %v3008 = vunpack.c.l.s4 1983009808
    %v3009 = vunpack.c.0.s8 %v3008
    %v3010 = vlaneseq
    %v3011 = vshrl.u32 %v3010, 7
    %v3012 = vsub.s32 %v3009, %v3011
    %v3013 = vrot.slane %v2942, %v3012
    %v3015 = vunpack.c.l.s4 1983009808
    %v3016 = vunpack.c.0.s8 %v3015
    %v3017 = vlaneseq
    %v3018 = vshrl.u32 %v3017, 7
    %v3019 = vsub.s32 %v3016, %v3018
    %v3020 = vrot.slane %v2943, %v3019
    %v3022 = vunpack.c.l.s4 1983009808
    %v3023 = vunpack.c.0.s8 %v3022
    %v3024 = vlaneseq
    %v3025 = vshrl.u32 %v3024, 7
    %v3026 = vsub.s32 %v3023, %v3025
    %v3027 = vrot.slane %v2944, %v3026
    %v3029 = vunpack.c.l.s4 1983009808
    %v3030 = vunpack.c.0.s8 %v3029
    %v3031 = vlaneseq
    %v3032 = vshrl.u32 %v3031, 7
    %v3033 = vsub.s32 %v3030, %v3032
    %v3034 = vrot.slane %v2945, %v3033
    %3035 = vrot.lane.b32.xlu0 %v2985, 112
    %v3036 = vpop.permute.xlu0 %3035
    %3037 = vrot.lane.b32.xlu0 %v2992, 112
    %v3038 = vpop.permute.xlu0 %3037
    %3039 = vrot.lane.b32.xlu0 %v2999, 112
    %v3040 = vpop.permute.xlu0 %3039
    %3041 = vrot.lane.b32.xlu0 %v3006, 112
    %v3042 = vpop.permute.xlu0 %3041
    %3043 = vrot.lane.b32.xlu0 %v3013, 112
    %v3044 = vpop.permute.xlu0 %3043
    %3045 = vrot.lane.b32.xlu0 %v3020, 112
    %v3046 = vpop.permute.xlu0 %3045
    %3047 = vrot.lane.b32.xlu0 %v3027, 112
    %v3048 = vpop.permute.xlu0 %3047
    %3049 = vrot.lane.b32.xlu0 %v3034, 112
    %v3050 = vpop.permute.xlu0 %3049
    %v3059 = vsel %vm2946, %v3036, 0.0
    %3060 = vadd.xlane.f32.xlu0 %v3059
    %v3061 = vpop.xlane.xlu0 %3060
    %v3062 = vsel %vm2946, %v3038, 0.0
    %3063 = vadd.xlane.f32.xlu0 %v3062
    %v3064 = vpop.xlane.xlu0 %3063
    %v3065 = vsel %vm2946, %v3040, 0.0
    %3066 = vadd.xlane.f32.xlu0 %v3065
    %v3067 = vpop.xlane.xlu0 %3066
    %v3068 = vsel %vm2946, %v3042, 0.0
    %3069 = vadd.xlane.f32.xlu0 %v3068
    %v3070 = vpop.xlane.xlu0 %3069
    %v3071 = vsel %vm2946, %v3044, 0.0
    %3072 = vadd.xlane.f32.xlu0 %v3071
    %v3073 = vpop.xlane.xlu0 %3072
    %v3074 = vsel %vm2946, %v3046, 0.0
    %3075 = vadd.xlane.f32.xlu0 %v3074
    %v3076 = vpop.xlane.xlu0 %3075
    %v3077 = vsel %vm2946, %v3048, 0.0
    %3078 = vadd.xlane.f32.xlu0 %v3077
    %v3079 = vpop.xlane.xlu0 %3078
    %v3080 = vsel %vm2946, %v3050, 0.0
    %3081 = vadd.xlane.f32.xlu0 %v3080
    %v3082 = vpop.xlane.xlu0 %3081
    %vm3083 = vcmask 7168
    %v3084 = vsel %vm3083, %v2949, %v3061
    %v3085 = vsel %vm3083, %v2952, %v3064
    %v3086 = vsel %vm3083, %v2955, %v3067
    %v3087 = vsel %vm3083, %v2958, %v3070
    %v3088 = vsel %vm3083, %v2961, %v3073
    %v3089 = vsel %vm3083, %v2964, %v3076
    %v3090 = vsel %vm3083, %v2967, %v3079
    %v3091 = vsel %vm3083, %v2970, %v3082
    %vm3092 = vcmask 9216
    %v3093 = vsel %vm3092, %v3084, -inf
    %v3094 = vsel %vm3092, %v3085, -inf
    %v3095 = vsel %vm3092, %v3086, -inf
    %v3096 = vsel %vm3092, %v3087, -inf
    %v3097 = vsel %vm3092, %v3088, -inf
    %v3098 = vmax.f32 %v3093, %v3097
    %v3099 = vsel %vm3092, %v3089, -inf
    %v3100 = vmax.f32 %v3094, %v3099
    %v3101 = vsel %vm3092, %v3090, -inf
    %v3102 = vmax.f32 %v3095, %v3101
    %v3103 = vsel %vm3092, %v3091, -inf
    %v3104 = vmax.f32 %v3096, %v3103
    %v3105 = vmax.f32 %v3098, %v3100
    %v3106 = vmax.f32 %v3102, %v3104
    %v3107 = vmax.f32 %v3105, %v3106
    %v3108 = vsub.f32 %v3084, %v3107
    %v3109 = vsub.f32 %v3085, %v3107
    %v3110 = vsub.f32 %v3086, %v3107
    %v3111 = vsub.f32 %v3087, %v3107
    %v3112 = vsub.f32 %v3088, %v3107
    %v3113 = vsub.f32 %v3089, %v3107
    %v3114 = vsub.f32 %v3090, %v3107
    %v3115 = vsub.f32 %v3091, %v3107
    %v3116 = vmul.f32 %v3108, 1.442695
    %v3117 = vpow.pop %v3116
    %v3118 = vmul.f32 %v3109, 1.442695
    %v3119 = vpow.pop %v3118
    %v3120 = vmul.f32 %v3110, 1.442695
    %v3121 = vpow.pop %v3120
    %v3122 = vmul.f32 %v3111, 1.442695
    %v3123 = vpow.pop %v3122
    %v3124 = vmul.f32 %v3112, 1.442695
    %v3125 = vpow.pop %v3124
    %v3126 = vmul.f32 %v3113, 1.442695
    %v3127 = vpow.pop %v3126
    %v3128 = vmul.f32 %v3114, 1.442695
    %v3129 = vpow.pop %v3128
    %v3130 = vmul.f32 %v3115, 1.442695
    %v3131 = vpow.pop %v3130
    %v3132 = vsel %vm3092, %v3117, 0.0
    %v3133 = vsel %vm3092, %v3119, 0.0
    %v3134 = vadd.f32 %v3132, %v3133
    %v3135 = vsel %vm3092, %v3121, 0.0
    %v3136 = vadd.f32 %v3134, %v3135
    %v3137 = vsel %vm3092, %v3123, 0.0
    %v3138 = vadd.f32 %v3136, %v3137
    %v3139 = vsel %vm3092, %v3125, 0.0
    %v3140 = vadd.f32 %v3138, %v3139
    %v3141 = vsel %vm3092, %v3127, 0.0
    %v3142 = vadd.f32 %v3140, %v3141
    %v3143 = vsel %vm3092, %v3129, 0.0
    %v3144 = vadd.f32 %v3142, %v3143
    %v3145 = vsel %vm3092, %v3131, 0.0
    %v3146 = vadd.f32 %v3144, %v3145
    %v3147 = vrcp.pop %v3146
    %v3148 = vmul.f32 %v3117, %v3147
    %v3149 = vmul.f32 %v3119, %v3147
    %v3150 = vmul.f32 %v3121, %v3147
    %v3151 = vmul.f32 %v3123, %v3147
    %v3152 = vmul.f32 %v3125, %v3147
    %v3153 = vmul.f32 %v3127, %v3147
    %v3154 = vmul.f32 %v3129, %v3147
    %v3155 = vmul.f32 %v3131, %v3147
    %3157 = vset.pattern.permute.xlu0 0
    %3158 = vperm.xlu0 %3157, %v3148
    %v3159 = vpop.permute.xlu0 %3158
    %3162 = vset.pattern.permute.xlu0 0
    %3163 = vperm.xlu0 %3162, %v3149
    %v3164 = vpop.permute.xlu0 %3163
    %3167 = vset.pattern.permute.xlu0 0
    %3168 = vperm.xlu0 %3167, %v3150
    %v3169 = vpop.permute.xlu0 %3168
    %3172 = vset.pattern.permute.xlu0 0
    %3173 = vperm.xlu0 %3172, %v3151
    %v3174 = vpop.permute.xlu0 %3173
    %3177 = vset.pattern.permute.xlu0 0
    %3178 = vperm.xlu0 %3177, %v3152
    %v3179 = vpop.permute.xlu0 %3178
    %3182 = vset.pattern.permute.xlu0 0
    %3183 = vperm.xlu0 %3182, %v3153
    %v3184 = vpop.permute.xlu0 %3183
    %3187 = vset.pattern.permute.xlu0 0
    %3188 = vperm.xlu0 %3187, %v3154
    %v3189 = vpop.permute.xlu0 %3188
    %3192 = vset.pattern.permute.xlu0 0
    %3193 = vperm.xlu0 %3192, %v3155
    %v3194 = vpop.permute.xlu0 %3193
    %v3196 = vmul.f32 %v2736, %v3159
    %v3197 = vmul.f32 %v2737, %v3164
    %v3198 = vmul.f32 %v2738, %v3169
    %v3199 = vmul.f32 %v2739, %v3174
    %v3200 = vmul.f32 %v2740, %v3179
    %v3201 = vmul.f32 %v2741, %v3184
    %v3202 = vmul.f32 %v2742, %v3189
    %v3203 = vmul.f32 %v2743, %v3194
    %v3204 = vsel %vm387, %v3196, 0.0
    %v3205 = vsel %vm387, %v3197, 0.0
    %v3206 = vadd.f32 %v3204, %v3205
    %v3207 = vsel %vm387, %v3198, 0.0
    %v3208 = vadd.f32 %v3206, %v3207
    %v3209 = vsel %vm387, %v3199, 0.0
    %v3210 = vadd.f32 %v3208, %v3209
    %v3211 = vsel %vm387, %v3200, 0.0
    %v3212 = vadd.f32 %v3210, %v3211
    %v3213 = vsel %vm387, %v3201, 0.0
    %v3214 = vadd.f32 %v3212, %v3213
    %v3215 = vsel %vm387, %v3202, 0.0
    %v3216 = vadd.f32 %v3214, %v3215
    %v3217 = vsel %vm387, %v3203, 0.0
    %v3218 = vadd.f32 %v3216, %v3217
    %3219 = vset.pattern.permute.xlu0 1
    %3220 = vperm.xlu0 %3219, %v3148
    %v3221 = vpop.permute.xlu0 %3220
    %3223 = vset.pattern.permute.xlu0 1
    %3224 = vperm.xlu0 %3223, %v3149
    %v3225 = vpop.permute.xlu0 %3224
    %3227 = vset.pattern.permute.xlu0 1
    %3228 = vperm.xlu0 %3227, %v3150
    %v3229 = vpop.permute.xlu0 %3228
    %3231 = vset.pattern.permute.xlu0 1
    %3232 = vperm.xlu0 %3231, %v3151
    %v3233 = vpop.permute.xlu0 %3232
    %3235 = vset.pattern.permute.xlu0 1
    %3236 = vperm.xlu0 %3235, %v3152
    %v3237 = vpop.permute.xlu0 %3236
    %3239 = vset.pattern.permute.xlu0 1
    %3240 = vperm.xlu0 %3239, %v3153
    %v3241 = vpop.permute.xlu0 %3240
    %3243 = vset.pattern.permute.xlu0 1
    %3244 = vperm.xlu0 %3243, %v3154
    %v3245 = vpop.permute.xlu0 %3244
    %3247 = vset.pattern.permute.xlu0 1
    %3248 = vperm.xlu0 %3247, %v3155
    %v3249 = vpop.permute.xlu0 %3248
    %v3251 = vmul.f32 %v2736, %v3221
    %v3252 = vmul.f32 %v2737, %v3225
    %v3253 = vmul.f32 %v2738, %v3229
    %v3254 = vmul.f32 %v2739, %v3233
    %v3255 = vmul.f32 %v2740, %v3237
    %v3256 = vmul.f32 %v2741, %v3241
    %v3257 = vmul.f32 %v2742, %v3245
    %v3258 = vmul.f32 %v2743, %v3249
    %v3259 = vsel %vm390, %v3251, 0.0
    %v3260 = vsel %vm390, %v3252, 0.0
    %v3261 = vadd.f32 %v3259, %v3260
    %v3262 = vsel %vm390, %v3253, 0.0
    %v3263 = vadd.f32 %v3261, %v3262
    %v3264 = vsel %vm390, %v3254, 0.0
    %v3265 = vadd.f32 %v3263, %v3264
    %v3266 = vsel %vm390, %v3255, 0.0
    %v3267 = vadd.f32 %v3265, %v3266
    %v3268 = vsel %vm390, %v3256, 0.0
    %v3269 = vadd.f32 %v3267, %v3268
    %v3270 = vsel %vm390, %v3257, 0.0
    %v3271 = vadd.f32 %v3269, %v3270
    %v3272 = vsel %vm390, %v3258, 0.0
    %v3273 = vadd.f32 %v3271, %v3272
    %v3274 = vsel %vm2428, %v3218, %v3273
    %v3275 = vld [vmem:[%s1 + $0x460] sm:$0xff]
    %v3276 = vld [vmem:[%s1 + $0x470] sm:$0xff]
    %v3277 = vld [vmem:[%s1 + $0x480] sm:$0xff]
    %v3278 = vld [vmem:[%s1 + $0x490] sm:$0xff]
    %v3279 = vld [vmem:[%s1 + $0x4a0] sm:$0xff]
    %v3280 = vld [vmem:[%s1 + $0x4b0] sm:$0xff]
    %v3281 = vld [vmem:[%s1 + $0x4c0] sm:$0xff]
    %v3282 = vld [vmem:[%s1 + $0x4d0] sm:$0xff]
    %v3283 = vld [vmem:[%s1 + $0x4e0] ss:$0 sm:$0xff]
    %v3285 = vsel %vm288, %v3274, 0
    %3287 = vmatprep.subr.mxu0 0.0
    %3288 = vmatpush1.msra.mxu0 %v3275
    %3289 = vmatprep.subr.mxu0 0.0
    %3290 = vmatpush1.msra.mxu0 %v3276
    %3291 = vmatprep.subr.mxu0 0.0
    %3292 = vmatpush1.msra.mxu0 %v3277
    %3293 = vmatprep.subr.mxu0 0.0
    %3294 = vmatpush1.msra.mxu0 %v3278
    %3295 = vmatprep.subr.mxu0 0.0
    %3296 = vmatpush1.msra.mxu0 %v3279
    %3297 = vmatprep.subr.mxu0 0.0
    %3298 = vmatpush1.msra.mxu0 %v3280
    %3299 = vmatprep.subr.mxu0 0.0
    %3300 = vmatpush1.msra.mxu0 %v3281
    %3301 = vmatprep.subr.mxu0 0.0
    %3302 = vmatpush1.msra.mxu0 %v3282
    %3303 = vmatprep.subr.mxu0 0.0
    %3304 = vmatpush1.msra.mxu0 0.0
    %3305 = vmatprep.subr.mxu0 0.0
    %3306 = vmatpush1.msra.mxu0 0.0
    %3307 = vmatprep.subr.mxu0 0.0
    %3308 = vmatpush1.msra.mxu0 0.0
    %3309 = vmatprep.subr.mxu0 0.0
    %3310 = vmatpush1.msra.mxu0 0.0
    %3311 = vmatprep.subr.mxu0 0.0
    %3312 = vmatpush1.msra.mxu0 0.0
    %3313 = vmatprep.subr.mxu0 0.0
    %3314 = vmatpush1.msra.mxu0 0.0
    %3315 = vmatprep.subr.mxu0 0.0
    %3316 = vmatpush1.msra.mxu0 0.0
    %3317 = vmatprep.subr.mxu0 0.0
    %3318 = vmatpush1.msra.mxu0 0.0
    %3319 = vmatprep.subr.mxu0 0.0
    %3320 = vmatpush1.msra.mxu0 0.0
    %3321 = vmatprep.subr.mxu0 0.0
    %3322 = vmatpush1.msra.mxu0 0.0
    %3323 = vmatprep.subr.mxu0 0.0
    %3324 = vmatpush1.msra.mxu0 0.0
    %3325 = vmatprep.subr.mxu0 0.0
    %3326 = vmatpush1.msra.mxu0 0.0
    %3327 = vmatprep.subr.mxu0 0.0
    %3328 = vmatpush1.msra.mxu0 0.0
    %3329 = vmatprep.subr.mxu0 0.0
    %3330 = vmatpush1.msra.mxu0 0.0
    %3331 = vmatprep.subr.mxu0 0.0
    %3332 = vmatpush1.msra.mxu0 0.0
    %3333 = vmatprep.subr.mxu0 0.0
    %3334 = vmatpush1.msra.mxu0 0.0
    %3335 = vmatprep.subr.mxu0 0.0
    %3336 = vmatpush1.msra.mxu0 0.0
    %3337 = vmatprep.subr.mxu0 0.0
    %3338 = vmatpush1.msra.mxu0 0.0
    %3339 = vmatprep.subr.mxu0 0.0
    %3340 = vmatpush1.msra.mxu0 0.0
    %3341 = vmatprep.subr.mxu0 0.0
    %3342 = vmatpush1.msra.mxu0 0.0
    %3343 = vmatprep.subr.mxu0 0.0
    %3344 = vmatpush1.msra.mxu0 0.0
    %3345 = vmatprep.subr.mxu0 0.0
    %3346 = vmatpush1.msra.mxu0 0.0
    %3347 = vmatprep.subr.mxu0 0.0
    %3348 = vmatpush1.msra.mxu0 0.0
    %3349 = vmatprep.subr.mxu0 0.0
    %3350 = vmatpush1.msra.mxu0 0.0
    %3351 = vmatprep.mubr.f32.mxu0 0.0
    %3352 = vmatmul.mubr.f32.gmra.mrb[0].mxu0 %v3285
    %v3353 = vpop.f32.mrb[0].mxu0
    %v3354 = vadd.f32 %v3283, %v3353
    %v3355 = vpop.f32.mrb[0].mxu0
    %3356 = vdwg.mxu0
    %v3357 = vmul.f32 %v3354, 0.5
    %v3358 = vmul.f32 %v3354, 0.70710677
    %v3359 = verf.f32.pop %v3358
    %v3360 = vadd.f32 %v3359, 1.0
    %v3361 = vmul.f32 %v3357, %v3360
    %v3362 = vld [vmem:[%s1 + $0x4f0] sm:$0xff]
    %v3363 = vld [vmem:[%s1 + $0x500] sm:$0xff]
    %v3364 = vld [vmem:[%s1 + $0x510] sm:$0xff]
    %v3365 = vld [vmem:[%s1 + $0x520] sm:$0xff]
    %v3366 = vld [vmem:[%s1 + $0x530] ss:$0 sm:$0xff]
    %3368 = vrot.lane.b32.xlu0 %v3361, 96
    %v3369 = vpop.permute.xlu0 %3368
    %v3370 = vsel %vm2428, %v3369, 0
    %3372 = vmatprep.subr.mxu0 0.0
    %3373 = vmatpush1.msra.mxu0 %v3362
    %3374 = vmatprep.subr.mxu0 0.0
    %3375 = vmatpush1.msra.mxu0 %v3363
    %3376 = vmatprep.subr.mxu0 0.0
    %3377 = vmatpush1.msra.mxu0 %v3364
    %3378 = vmatprep.subr.mxu0 0.0
    %3379 = vmatpush1.msra.mxu0 %v3365
    %3380 = vmatprep.subr.mxu0 0.0
    %3381 = vmatpush1.msra.mxu0 0.0
    %3382 = vmatprep.subr.mxu0 0.0
    %3383 = vmatpush1.msra.mxu0 0.0
    %3384 = vmatprep.subr.mxu0 0.0
    %3385 = vmatpush1.msra.mxu0 0.0
    %3386 = vmatprep.subr.mxu0 0.0
    %3387 = vmatpush1.msra.mxu0 0.0
    %3388 = vmatprep.subr.mxu0 0.0
    %3389 = vmatpush1.msra.mxu0 0.0
    %3390 = vmatprep.subr.mxu0 0.0
    %3391 = vmatpush1.msra.mxu0 0.0
    %3392 = vmatprep.subr.mxu0 0.0
    %3393 = vmatpush1.msra.mxu0 0.0
    %3394 = vmatprep.subr.mxu0 0.0
    %3395 = vmatpush1.msra.mxu0 0.0
    %3396 = vmatprep.subr.mxu0 0.0
    %3397 = vmatpush1.msra.mxu0 0.0
    %3398 = vmatprep.subr.mxu0 0.0
    %3399 = vmatpush1.msra.mxu0 0.0
    %3400 = vmatprep.subr.mxu0 0.0
    %3401 = vmatpush1.msra.mxu0 0.0
    %3402 = vmatprep.subr.mxu0 0.0
    %3403 = vmatpush1.msra.mxu0 0.0
    %3404 = vmatprep.subr.mxu0 0.0
    %3405 = vmatpush1.msra.mxu0 0.0
    %3406 = vmatprep.subr.mxu0 0.0
    %3407 = vmatpush1.msra.mxu0 0.0
    %3408 = vmatprep.subr.mxu0 0.0
    %3409 = vmatpush1.msra.mxu0 0.0
    %3410 = vmatprep.subr.mxu0 0.0
    %3411 = vmatpush1.msra.mxu0 0.0
    %3412 = vmatprep.subr.mxu0 0.0
    %3413 = vmatpush1.msra.mxu0 0.0
    %3414 = vmatprep.subr.mxu0 0.0
    %3415 = vmatpush1.msra.mxu0 0.0
    %3416 = vmatprep.subr.mxu0 0.0
    %3417 = vmatpush1.msra.mxu0 0.0
    %3418 = vmatprep.subr.mxu0 0.0
    %3419 = vmatpush1.msra.mxu0 0.0
    %3420 = vmatprep.subr.mxu0 0.0
    %3421 = vmatpush1.msra.mxu0 0.0
    %3422 = vmatprep.subr.mxu0 0.0
    %3423 = vmatpush1.msra.mxu0 0.0
    %3424 = vmatprep.subr.mxu0 0.0
    %3425 = vmatpush1.msra.mxu0 0.0
    %3426 = vmatprep.subr.mxu0 0.0
    %3427 = vmatpush1.msra.mxu0 0.0
    %3428 = vmatprep.subr.mxu0 0.0
    %3429 = vmatpush1.msra.mxu0 0.0
    %3430 = vmatprep.subr.mxu0 0.0
    %3431 = vmatpush1.msra.mxu0 0.0
    %3432 = vmatprep.subr.mxu0 0.0
    %3433 = vmatpush1.msra.mxu0 0.0
    %3434 = vmatprep.subr.mxu0 0.0
    %3435 = vmatpush1.msra.mxu0 0.0
    %3436 = vmatprep.mubr.f32.mxu0 0.0
    %3437 = vmatmul.mubr.f32.gmra.mrb[0].mxu0 %v3370
    %v3438 = vpop.f32.mrb[0].mxu0
    %v3439 = vadd.f32 %v3366, %v3438
    %v3440 = vpop.f32.mrb[0].mxu0
    %3441 = vdwg.mxu0
    %3443 = vrot.lane.b32.xlu0 %v3439, 32
    %v3444 = vpop.permute.xlu0 %3443
    %v3446 = vsel %vm2428, %v3361, %v3444
    %v3447 = vld [vmem:[%s1 + $0x540] sm:$0xff]
    %v3448 = vld [vmem:[%s1 + $0x550] sm:$0xff]
    %v3449 = vld [vmem:[%s1 + $0x560] sm:$0xff]
    %v3450 = vld [vmem:[%s1 + $0x570] sm:$0xff]
    %v3451 = vld [vmem:[%s1 + $0x580] sm:$0xff]
    %v3452 = vld [vmem:[%s1 + $0x590] sm:$0xff]
    %v3453 = vld [vmem:[%s1 + $0x5a0] sm:$0xff]
    %v3454 = vld [vmem:[%s1 + $0x5b0] sm:$0xff]
    %v3455 = vld [vmem:[%s1 + $0x5c0] ss:$0 sm:$0xff]
    %v3457 = vsel %vm288, %v3446, 0
    %3459 = vmatprep.subr.mxu0 0.0
    %3460 = vmatpush1.msra.mxu0 %v3447
    %3461 = vmatprep.subr.mxu0 0.0
    %3462 = vmatpush1.msra.mxu0 %v3448
    %3463 = vmatprep.subr.mxu0 0.0
    %3464 = vmatpush1.msra.mxu0 %v3449
    %3465 = vmatprep.subr.mxu0 0.0
    %3466 = vmatpush1.msra.mxu0 %v3450
    %3467 = vmatprep.subr.mxu0 0.0
    %3468 = vmatpush1.msra.mxu0 %v3451
    %3469 = vmatprep.subr.mxu0 0.0
    %3470 = vmatpush1.msra.mxu0 %v3452
    %3471 = vmatprep.subr.mxu0 0.0
    %3472 = vmatpush1.msra.mxu0 %v3453
    %3473 = vmatprep.subr.mxu0 0.0
    %3474 = vmatpush1.msra.mxu0 %v3454
    %3475 = vmatprep.subr.mxu0 0.0
    %3476 = vmatpush1.msra.mxu0 0.0
    %3477 = vmatprep.subr.mxu0 0.0
    %3478 = vmatpush1.msra.mxu0 0.0
    %3479 = vmatprep.subr.mxu0 0.0
    %3480 = vmatpush1.msra.mxu0 0.0
    %3481 = vmatprep.subr.mxu0 0.0
    %3482 = vmatpush1.msra.mxu0 0.0
    %3483 = vmatprep.subr.mxu0 0.0
    %3484 = vmatpush1.msra.mxu0 0.0
    %3485 = vmatprep.subr.mxu0 0.0
    %3486 = vmatpush1.msra.mxu0 0.0
    %3487 = vmatprep.subr.mxu0 0.0
    %3488 = vmatpush1.msra.mxu0 0.0
    %3489 = vmatprep.subr.mxu0 0.0
    %3490 = vmatpush1.msra.mxu0 0.0
    %3491 = vmatprep.subr.mxu0 0.0
    %3492 = vmatpush1.msra.mxu0 0.0
    %3493 = vmatprep.subr.mxu0 0.0
    %3494 = vmatpush1.msra.mxu0 0.0
    %3495 = vmatprep.subr.mxu0 0.0
    %3496 = vmatpush1.msra.mxu0 0.0
    %3497 = vmatprep.subr.mxu0 0.0
    %3498 = vmatpush1.msra.mxu0 0.0
    %3499 = vmatprep.subr.mxu0 0.0
    %3500 = vmatpush1.msra.mxu0 0.0
    %3501 = vmatprep.subr.mxu0 0.0
    %3502 = vmatpush1.msra.mxu0 0.0
    %3503 = vmatprep.subr.mxu0 0.0
    %3504 = vmatpush1.msra.mxu0 0.0
    %3505 = vmatprep.subr.mxu0 0.0
    %3506 = vmatpush1.msra.mxu0 0.0
    %3507 = vmatprep.subr.mxu0 0.0
    %3508 = vmatpush1.msra.mxu0 0.0
    %3509 = vmatprep.subr.mxu0 0.0
    %3510 = vmatpush1.msra.mxu0 0.0
    %3511 = vmatprep.subr.mxu0 0.0
    %3512 = vmatpush1.msra.mxu0 0.0
    %3513 = vmatprep.subr.mxu0 0.0
    %3514 = vmatpush1.msra.mxu0 0.0
    %3515 = vmatprep.subr.mxu0 0.0
    %3516 = vmatpush1.msra.mxu0 0.0
    %3517 = vmatprep.subr.mxu0 0.0
    %3518 = vmatpush1.msra.mxu0 0.0
    %3519 = vmatprep.subr.mxu0 0.0
    %3520 = vmatpush1.msra.mxu0 0.0
    %3521 = vmatprep.subr.mxu0 0.0
    %3522 = vmatpush1.msra.mxu0 0.0
    %3523 = vmatprep.mubr.f32.mxu0 0.0
    %3524 = vmatmul.mubr.f32.gmra.mrb[0].mxu0 %v3457
    %v3525 = vpop.f32.mrb[0].mxu0
    %v3526 = vadd.f32 %v3455, %v3525
    %v3527 = vpop.f32.mrb[0].mxu0
    %3528 = vdwg.mxu0
    %v3529 = vxor.u32 %v3526, 2147483648
    %v3530 = vmul.f32 %v3529, 1.442695
    %v3531 = vpow.pop %v3530
    %v3532 = vadd.f32 %v3531, 1.0
    %v3533 = vrcp.pop %v3532
    %v3534 = vmul.f32 1.0, %v3533
    %v3535 = vmul.f32 %v3534, %v3439
    %v3536 = vadd.f32 %v3361, %v3535
    %v3537 = vsel %vm387, %v3536, 0.0
    %3538 = vadd.xlane.f32.xlu0 %v3537
    %v3539 = vpop.xlane.xlu0 %3538
    %v3540 = vmul.f32 %v3539, %v2469
    %v3541 = vsub.f32 %v3536, %v3540
    %v3542 = vmul.f32 %v3541, %v3541
    %v3543 = vsel %vm387, %v3542, 0.0
    %3544 = vadd.xlane.f32.xlu0 %v3543
    %v3545 = vpop.xlane.xlu0 %3544
    %v3546 = vmul.f32 %v3545, %v2469
    %v3547 = vadd.f32 %v3546, 1e-05
    %v3548 = vrsqrt.pop %v3547
    %v3549 = vmul.f32 %v3541, %v3548
    %v3550 = vld [vmem:[%s1 + $0x5d0] ss:$0 sm:$0xff]
    %v3551 = vmul.f32 %v3549, %v3550
    %v3552 = vld [vmem:[%s1 + $0x5e0] ss:$0 sm:$0xff]
    %v3553 = vadd.f32 %v3551, %v3552
    %v3554 = vld [vmem:[%s1 + $0x5f0] sm:$0xff]
    %v3555 = vld [vmem:[%s1 + $0x600] sm:$0xff]
    %v3556 = vld [vmem:[%s1 + $0x610] sm:$0xff]
    %v3557 = vld [vmem:[%s1 + $0x620] sm:$0xff]
    %v3558 = vld [vmem:[%s1 + $0x630] ss:$0 sm:$0xff]
    %v3560 = vsel %vm2428, %v3553, 0
    %3562 = vmatprep.subr.mxu0 0.0
    %3563 = vmatpush1.msra.mxu0 %v3554
    %3564 = vmatprep.subr.mxu0 0.0
    %3565 = vmatpush1.msra.mxu0 %v3555
    %3566 = vmatprep.subr.mxu0 0.0
    %3567 = vmatpush1.msra.mxu0 %v3556
    %3568 = vmatprep.subr.mxu0 0.0
    %3569 = vmatpush1.msra.mxu0 %v3557
    %3570 = vmatprep.subr.mxu0 0.0
    %3571 = vmatpush1.msra.mxu0 0.0
    %3572 = vmatprep.subr.mxu0 0.0
    %3573 = vmatpush1.msra.mxu0 0.0
    %3574 = vmatprep.subr.mxu0 0.0
    %3575 = vmatpush1.msra.mxu0 0.0
    %3576 = vmatprep.subr.mxu0 0.0
    %3577 = vmatpush1.msra.mxu0 0.0
    %3578 = vmatprep.subr.mxu0 0.0
    %3579 = vmatpush1.msra.mxu0 0.0
    %3580 = vmatprep.subr.mxu0 0.0
    %3581 = vmatpush1.msra.mxu0 0.0
    %3582 = vmatprep.subr.mxu0 0.0
    %3583 = vmatpush1.msra.mxu0 0.0
    %3584 = vmatprep.subr.mxu0 0.0
    %3585 = vmatpush1.msra.mxu0 0.0
    %3586 = vmatprep.subr.mxu0 0.0
    %3587 = vmatpush1.msra.mxu0 0.0
    %3588 = vmatprep.subr.mxu0 0.0
    %3589 = vmatpush1.msra.mxu0 0.0
    %3590 = vmatprep.subr.mxu0 0.0
    %3591 = vmatpush1.msra.mxu0 0.0
    %3592 = vmatprep.subr.mxu0 0.0
    %3593 = vmatpush1.msra.mxu0 0.0
    %3594 = vmatprep.subr.mxu0 0.0
    %3595 = vmatpush1.msra.mxu0 0.0
    %3596 = vmatprep.subr.mxu0 0.0
    %3597 = vmatpush1.msra.mxu0 0.0
    %3598 = vmatprep.subr.mxu0 0.0
    %3599 = vmatpush1.msra.mxu0 0.0
    %3600 = vmatprep.subr.mxu0 0.0
    %3601 = vmatpush1.msra.mxu0 0.0
    %3602 = vmatprep.subr.mxu0 0.0
    %3603 = vmatpush1.msra.mxu0 0.0
    %3604 = vmatprep.subr.mxu0 0.0
    %3605 = vmatpush1.msra.mxu0 0.0
    %3606 = vmatprep.subr.mxu0 0.0
    %3607 = vmatpush1.msra.mxu0 0.0
    %3608 = vmatprep.subr.mxu0 0.0
    %3609 = vmatpush1.msra.mxu0 0.0
    %3610 = vmatprep.subr.mxu0 0.0
    %3611 = vmatpush1.msra.mxu0 0.0
    %3612 = vmatprep.subr.mxu0 0.0
    %3613 = vmatpush1.msra.mxu0 0.0
    %3614 = vmatprep.subr.mxu0 0.0
    %3615 = vmatpush1.msra.mxu0 0.0
    %3616 = vmatprep.subr.mxu0 0.0
    %3617 = vmatpush1.msra.mxu0 0.0
    %3618 = vmatprep.subr.mxu0 0.0
    %3619 = vmatpush1.msra.mxu0 0.0
    %3620 = vmatprep.subr.mxu0 0.0
    %3621 = vmatpush1.msra.mxu0 0.0
    %3622 = vmatprep.subr.mxu0 0.0
    %3623 = vmatpush1.msra.mxu0 0.0
    %3624 = vmatprep.subr.mxu0 0.0
    %3625 = vmatpush1.msra.mxu0 0.0
    %3626 = vmatprep.mubr.f32.mxu0 0.0
    %3627 = vmatmul.mubr.f32.gmra.mrb[0].mxu0 %v3560
    %v3628 = vpop.f32.mrb[0].mxu0
    %v3629 = vadd.f32 %v3558, %v3628
    %v3630 = vpop.f32.mrb[0].mxu0
    %3631 = vdwg.mxu0
    %v3632 = vmul.f32 %v3629, 0.5
    %v3633 = vmul.f32 %v3629, 0.70710677
    %v3634 = verf.f32.pop %v3633
    %v3635 = vadd.f32 %v3634, 1.0
    %v3636 = vmul.f32 %v3632, %v3635
    %v3637 = vld [vmem:[%s1 + $0x640] sm:$0xff]
    %v3638 = vld [vmem:[%s1 + $0x650] sm:$0xff]
    %v3639 = vld [vmem:[%s1 + $0x660] ss:$0 sm:$0xff]
    %v3641 = vsel %vm2419, %v3636, 0
    %3643 = vmatprep.subr.mxu0 0.0
    %3644 = vmatpush1.msra.mxu0 %v3637
    %3645 = vmatprep.subr.mxu0 0.0
    %3646 = vmatpush1.msra.mxu0 %v3638
    %3647 = vmatprep.subr.mxu0 0.0
    %3648 = vmatpush1.msra.mxu0 0.0
    %3649 = vmatprep.subr.mxu0 0.0
    %3650 = vmatpush1.msra.mxu0 0.0
    %3651 = vmatprep.subr.mxu0 0.0
    %3652 = vmatpush1.msra.mxu0 0.0
    %3653 = vmatprep.subr.mxu0 0.0
    %3654 = vmatpush1.msra.mxu0 0.0
    %3655 = vmatprep.subr.mxu0 0.0
    %3656 = vmatpush1.msra.mxu0 0.0
    %3657 = vmatprep.subr.mxu0 0.0
    %3658 = vmatpush1.msra.mxu0 0.0
    %3659 = vmatprep.subr.mxu0 0.0
    %3660 = vmatpush1.msra.mxu0 0.0
    %3661 = vmatprep.subr.mxu0 0.0
    %3662 = vmatpush1.msra.mxu0 0.0
    %3663 = vmatprep.subr.mxu0 0.0
    %3664 = vmatpush1.msra.mxu0 0.0
    %3665 = vmatprep.subr.mxu0 0.0
    %3666 = vmatpush1.msra.mxu0 0.0
    %3667 = vmatprep.subr.mxu0 0.0
    %3668 = vmatpush1.msra.mxu0 0.0
    %3669 = vmatprep.subr.mxu0 0.0
    %3670 = vmatpush1.msra.mxu0 0.0
    %3671 = vmatprep.subr.mxu0 0.0
    %3672 = vmatpush1.msra.mxu0 0.0
    %3673 = vmatprep.subr.mxu0 0.0
    %3674 = vmatpush1.msra.mxu0 0.0
    %3675 = vmatprep.subr.mxu0 0.0
    %3676 = vmatpush1.msra.mxu0 0.0
    %3677 = vmatprep.subr.mxu0 0.0
    %3678 = vmatpush1.msra.mxu0 0.0
    %3679 = vmatprep.subr.mxu0 0.0
    %3680 = vmatpush1.msra.mxu0 0.0
    %3681 = vmatprep.subr.mxu0 0.0
    %3682 = vmatpush1.msra.mxu0 0.0
    %3683 = vmatprep.subr.mxu0 0.0
    %3684 = vmatpush1.msra.mxu0 0.0
    %3685 = vmatprep.subr.mxu0 0.0
    %3686 = vmatpush1.msra.mxu0 0.0
    %3687 = vmatprep.subr.mxu0 0.0
    %3688 = vmatpush1.msra.mxu0 0.0
    %3689 = vmatprep.subr.mxu0 0.0
    %3690 = vmatpush1.msra.mxu0 0.0
    %3691 = vmatprep.subr.mxu0 0.0
    %3692 = vmatpush1.msra.mxu0 0.0
    %3693 = vmatprep.subr.mxu0 0.0
    %3694 = vmatpush1.msra.mxu0 0.0
    %3695 = vmatprep.subr.mxu0 0.0
    %3696 = vmatpush1.msra.mxu0 0.0
    %3697 = vmatprep.subr.mxu0 0.0
    %3698 = vmatpush1.msra.mxu0 0.0
    %3699 = vmatprep.subr.mxu0 0.0
    %3700 = vmatpush1.msra.mxu0 0.0
    %3701 = vmatprep.subr.mxu0 0.0
    %3702 = vmatpush1.msra.mxu0 0.0
    %3703 = vmatprep.subr.mxu0 0.0
    %3704 = vmatpush1.msra.mxu0 0.0
    %3705 = vmatprep.subr.mxu0 0.0
    %3706 = vmatpush1.msra.mxu0 0.0
    %3707 = vmatprep.mubr.f32.mxu0 0.0
    %3708 = vmatmul.mubr.f32.gmra.mrb[0].mxu0 %v3641
    %v3709 = vpop.f32.mrb[0].mxu0
    %v3710 = vadd.f32 %v3639, %v3709
    %v3711 = vpop.f32.mrb[0].mxu0
    %3712 = vdwg.mxu0
    %3713 = vst.msk [vmem:[#allocation4] sm:$0x3] %vm3092, %v3710
    // Predicated region
    $region10: #{forward.1} parent=1 // pred_check
      _
    $region11: #{forward.1} parent=1 // pred_check_branch
      %3715 = sbr.rel (0) target = $region13
    $region12: #{forward.1} parent=1 // pred_region
      %s3717 = ssub.s32 32, 32
      %3718 = vsyncadd [#allocation5], %s3717
      %s3720 = sshll.u32 [#allocation4], 4
      %s3721 = int_to_ptr.vmem [resolvable:$true] %s3720
      %3723 = dma.vmem_to_hbm [thread:$0]  %s3721, 32, %s2, [#allocation5]
    $region13: #{forward.1} parent=1 // pred_fallthru
      _
    // Predicated region
    $region14: #{forward.1} parent=1 // pred_check
      _
    $region15: #{forward.1} parent=1 // pred_check_branch
      %3725 = sbr.rel (0) target = $region17
    $region16: #{forward.1} parent=1 // pred_region
      %3726 = dma.done [#allocation5], 32
    $region17: #{forward.1} parent=1 // pred_fallthru
      _
    %3727 = vsyncpa [#allocation5], 1

</llo_original>
